<compile_context>
chip_gen: v7x
topology: tpu7x:2x2x1
jax: 0.10.0
libtpu: 0.0.40
codegen_flags: <defaults>
</compile_context>

<pallas_src>
import functools

import jax
import jax.numpy as jnp
from jax.experimental import pallas as pl
from jax.experimental.pallas import tpu as pltpu

LANE = 128
FOLD = 4                          # 2x2 spatial patch folded into the lane axis
VMEM_LIMIT = 32 * 1024 * 1024     # explicit scoped-VMEM limit (safe on v5e/v6e/v7x)


def _round_up(v, m):
    return ((v + m - 1) // m) * m


def _gelu(x):
    # TODO(synk): torch nn.GELU defaults to exact erf; tanh approximation kept
    # here (EUP-friendly).  Validate against the torch reference with tolerance.
    return jax.nn.gelu(x, approximate=True)


def _row_tiles(m, cap=1024):
    """Row tiling for the flat (rows, lanes) kernels."""
    if m <= cap:
        return m, m
    return _round_up(m, cap), cap


def _choose_th(hg1, wg0, max_rows=1024, max_th=8):
    """#low-res group rows per grid step (block covers 2*th high-res group rows)."""
    best = 1
    for cand in range(1, min(hg1, max_th) + 1):
        if hg1 % cand == 0 and 2 * cand * wg0 <= max_rows:
            best = cand
    return best


# ----------------------------------------------------------------------------
# Fold helpers (pure JAX, run once at the boundaries; reshape/transpose only).
# Convention "adjacent": group (gh,gw), lane block j=2*dh+dw <-> pos (2gh+dh, 2gw+dw).
# Convention "split-half": block j=2*dh+dw <-> pos (2oh+dh, ow + dw*(W//2)).
# ----------------------------------------------------------------------------
def fold_adj(x):
    B, H, W, c = x.shape
    x = x.reshape(B, H // 2, 2, W // 2, 2, c).transpose(0, 1, 3, 2, 4, 5)
    return x.reshape(B, H // 2, W // 2, 4 * c)


def unfold_adj(xf):
    B, Hg, Wg, Lc = xf.shape
    c = Lc // 4
    x = xf.reshape(B, Hg, Wg, 2, 2, c).transpose(0, 1, 3, 2, 4, 5)
    return x.reshape(B, 2 * Hg, 2 * Wg, c)


def fold_sh(x):
    B, H, W, c = x.shape
    x = x.reshape(B, H // 2, 2, 2, W // 2, c).transpose(0, 1, 4, 2, 3, 5)
    return x.reshape(B, H // 2, W // 2, 4 * c)


def unfold_sh(xf):
    B, Hg, Wg, Lc = xf.shape
    c = Lc // 4
    x = xf.reshape(B, Hg, Wg, 2, 2, c).transpose(0, 1, 3, 4, 2, 5)
    return x.reshape(B, 2 * Hg, 2 * Wg, c)


def _avg_pool2x(x):   # NHWC, plain JAX (only used for num_layers > 2 middle levels)
    B, H, W, C = x.shape
    y = x.astype(jnp.float32).reshape(B, H // 2, 2, W // 2, 2, C).mean(axis=(2, 4))
    return y.astype(x.dtype)


def _upsample2x(x):   # NN repeat, plain JAX (only used for num_layers > 2 middle levels)
    return jnp.repeat(jnp.repeat(x, 2, axis=1), 2, axis=2)


# ----------------------------------------------------------------------------
# Kernel A: embedding + encoder[0] (+GELU) + fused 2x2 avg-pool.  Two outputs:
#   emb   (level-0, adjacent fold)   -> skip for the last fusion
#   pooled(level-1, split-half fold) -> input to the bottleneck block
# ----------------------------------------------------------------------------
def _emb_enc0_pool_kernel(x_ref, we_ref, be_ref, w0_ref, b0_ref,
                          emb_ref, pool_ref, *, d, th, wg0, wg1):
    rows = 2 * th * wg0
    x = x_ref[0].reshape(rows, x_ref.shape[-1])                       # (rows, 4*C_in)
    e = jnp.dot(x, we_ref[...], preferred_element_type=jnp.float32) + be_ref[...]
    emb_ref[0] = e.reshape(2 * th, wg0, e.shape[-1]).astype(emb_ref.dtype)

    y = jnp.dot(e.astype(emb_ref.dtype), w0_ref[...],
                preferred_element_type=jnp.float32) + b0_ref[...]
    y = _gelu(y).reshape(2 * th, wg0, y.shape[-1])                    # (2*th, wg0, 4d)

    # 2x2 avg-pool: the 4 lane blocks of a group are exactly one pooling window.
    m = (y[..., 0:d] + y[..., d:2 * d] + y[..., 2 * d:3 * d] + y[..., 3 * d:4 * d]) * 0.25
    rows_out = []
    for s in range(th):            # repack into the split-half convention at level 1
        rows_out.append(jnp.concatenate(
            [m[2 * s, :wg1, :], m[2 * s, wg1:, :],
             m[2 * s + 1, :wg1, :], m[2 * s + 1, wg1:, :]], axis=-1))
    pool_ref[0] = jnp.stack(rows_out, axis=0).astype(pool_ref.dtype)


def emb_enc0_pool(xf, emb_p, enc0_p, th, d, L):
    B, Hg0, Wg0, Cf = xf.shape
    Hg1, Wg1 = Hg0 // 2, Wg0 // 2
    we, be = emb_p
    w0, b0 = enc0_p
    return pl.pallas_call(
        functools.partial(_emb_enc0_pool_kernel, d=d, th=th, wg0=Wg0, wg1=Wg1),
        out_shape=(jax.ShapeDtypeStruct((B, Hg0, Wg0, L), jnp.bfloat16),
                   jax.ShapeDtypeStruct((B, Hg1, Wg1, L), jnp.bfloat16)),
        grid=(B, Hg1 // th),
        in_specs=[
            pl.BlockSpec((1, 2 * th, Wg0, Cf), lambda b, i: (b, i, 0, 0)),
            pl.BlockSpec(we.shape, lambda b, i: (0, 0)),
            pl.BlockSpec(be.shape, lambda b, i: (0, 0)),
            pl.BlockSpec(w0.shape, lambda b, i: (0, 0)),
            pl.BlockSpec(b0.shape, lambda b, i: (0, 0)),
        ],
        out_specs=(pl.BlockSpec((1, 2 * th, Wg0, L), lambda b, i: (b, i, 0, 0)),
                   pl.BlockSpec((1, th, Wg1, L), lambda b, i: (b, i, 0, 0))),
        compiler_params=pltpu.CompilerParams(
            dimension_semantics=("parallel", "parallel"),
            vmem_limit_bytes=VMEM_LIMIT),
    )(xf, we, be, w0, b0)


# ----------------------------------------------------------------------------
# Kernel B: encoder[last] + bottleneck + decoder[0] + fusion[0] + decoder[1],
# all pointwise at the deepest resolution, fused into one call.  fusion[0]'s
# skip is the kernel's own input tile (zero extra DMA).  decoder[1] is applied
# here (commuted past the NN upsample).
# ----------------------------------------------------------------------------
def _bottleneck_chain_kernel(x_ref, we, be, wb, bb, wd0, bd0,
                             wfx, wfs, bfu, wd1, bd1, o_ref):
    x = x_ref[...]
    h = _gelu(jnp.dot(x, we[...], preferred_element_type=jnp.float32) + be[...])
    h = _gelu(jnp.dot(h.astype(x.dtype), wb[...], preferred_element_type=jnp.float32) + bb[...])
    h = _gelu(jnp.dot(h.astype(x.dtype), wd0[...], preferred_element_type=jnp.float32) + bd0[...])
    h = (jnp.dot(h.astype(x.dtype), wfx[...], preferred_element_type=jnp.float32)
         + jnp.dot(x, wfs[...], preferred_element_type=jnp.float32) + bfu[...])
    h = _gelu(h)
    h = _gelu(jnp.dot(h.astype(x.dtype), wd1[...], preferred_element_type=jnp.float32) + bd1[...])
    o_ref[...] = h.astype(o_ref.dtype)


def bottleneck_block(p4d, enc_last, bot, dec0, fuse0, dec1):
    B, Hg, Wg, L = p4d.shape
    m = B * Hg * Wg
    x2 = p4d.reshape(m, L)
    m_pad, tm = _row_tiles(m)
    if m_pad != m:
        x2 = jnp.pad(x2, ((0, m_pad - m), (0, 0)))
    consts = [enc_last[0], enc_last[1], bot[0], bot[1], dec0[0], dec0[1],
              fuse0[0], fuse0[1], fuse0[2], dec1[0], dec1[1]]
    in_specs = [pl.BlockSpec((tm, L), lambda i: (i, 0))]
    in_specs += [pl.BlockSpec(c.shape, lambda i: (0, 0)) for c in consts]
    out = pl.pallas_call(
        _bottleneck_chain_kernel,
        out_shape=jax.ShapeDtypeStruct((m_pad, L), jnp.bfloat16),
        grid=(m_pad // tm,),
        in_specs=in_specs,
        out_specs=pl.BlockSpec((tm, L), lambda i: (i, 0)),
        compiler_params=pltpu.CompilerParams(
            dimension_semantics=("parallel",), vmem_limit_bytes=VMEM_LIMIT),
    )(x2, *consts)
    if m_pad != m:
        out = out[:m]
    return out.reshape(B, Hg, Wg, L)


# ----------------------------------------------------------------------------
# Kernel C: NN 2x upsample (in VMEM, low-res read via index_map) + last fusion
# (+GELU) + head.  Input is split-half folded at level 1; output / skip are
# adjacent folded at level 0.
# ----------------------------------------------------------------------------
def _upsample_fusion_head_kernel(g_ref, s_ref, wx_ref, ws_ref, bf_ref,
                                 wh_ref, bh_ref, o_ref, *, d, th, wg1):
    wg0 = 2 * wg1
    gl = g_ref[0]                                   # (th, wg1, 4d) low-res
    up_rows = []
    for r in range(2 * th):                         # build up(h) without touching HBM
        src = gl[r // 2]                            # (wg1, 4d)
        j0 = 2 * (r % 2)
        a = src[:, j0 * d:(j0 + 1) * d]
        bpart = src[:, (j0 + 1) * d:(j0 + 2) * d]
        row = jnp.concatenate([a, bpart], axis=0)   # (wg0, d): NN source per output group
        up_rows.append(jnp.concatenate([row, row, row, row], axis=-1))   # broadcast 2x2
    up = jnp.concatenate(up_rows, axis=0)           # (2*th*wg0, 4d)

    s = s_ref[0].reshape(2 * th * wg0, s_ref.shape[-1])
    f = jnp.dot(up, wx_ref[...], preferred_element_type=jnp.float32)
    f = f + jnp.dot(s, ws_ref[...], preferred_element_type=jnp.float32) + bf_ref[...]
    f = _gelu(f)
    o = jnp.dot(f.astype(s.dtype), wh_ref[...], preferred_element_type=jnp.float32) + bh_ref[...]
    o_ref[0] = o.reshape(2 * th, wg0, o.shape[-1]).astype(o_ref.dtype)


def upsample_fusion_head(g4d, emb4d, fuse_last, head_p, th, d):
    B, Hg1, Wg1, L = g4d.shape
    _, Hg0, Wg0, _ = emb4d.shape
    wx, ws, bfu = fuse_last
    wh, bh = head_p
    Lh = wh.shape[1]
    return pl.pallas_call(
        functools.partial(_upsample_fusion_head_kernel, d=d, th=th, wg1=Wg1),
        out_shape=jax.ShapeDtypeStruct((B, Hg0, Wg0, Lh), jnp.bfloat16),
        grid=(B, Hg1 // th),
        in_specs=[
            pl.BlockSpec((1, th, Wg1, L), lambda b, i: (b, i, 0, 0)),      # low-res h
            pl.BlockSpec((1, 2 * th, Wg0, L), lambda b, i: (b, i, 0, 0)),  # emb skip
            pl.BlockSpec(wx.shape, lambda b, i: (0, 0)),
            pl.BlockSpec(ws.shape, lambda b, i: (0, 0)),
            pl.BlockSpec(bfu.shape, lambda b, i: (0, 0)),
            pl.BlockSpec(wh.shape, lambda b, i: (0, 0)),
            pl.BlockSpec(bh.shape, lambda b, i: (0, 0)),
        ],
        out_specs=pl.BlockSpec((1, 2 * th, Wg0, Lh), lambda b, i: (b, i, 0, 0)),
        compiler_params=pltpu.CompilerParams(
            dimension_semantics=("parallel", "parallel"),
            vmem_limit_bytes=VMEM_LIMIT),
    )(g4d, emb4d, wx, ws, bfu, wh, bh)


# ----------------------------------------------------------------------------
# Generic pointwise kernels (used only for middle levels when num_layers > 2).
# ----------------------------------------------------------------------------
def _dense_chain_kernel(*refs, acts):
    x_ref, o_ref = refs[0], refs[-1]
    h = x_ref[...]
    for i, act in enumerate(acts):
        w = refs[1 + 2 * i][...]
        b = refs[2 + 2 * i][...]
        h = jnp.dot(h.astype(w.dtype), w, preferred_element_type=jnp.float32) + b
        if act == "gelu":
            h = _gelu(h)
    o_ref[...] = h.astype(o_ref.dtype)


def _fusion_chain_kernel(*refs, acts):
    x_ref, s_ref, wx_ref, ws_ref, b_ref = refs[:5]
    o_ref = refs[-1]
    h = jnp.dot(x_ref[...], wx_ref[...], preferred_element_type=jnp.float32)
    h = h + jnp.dot(s_ref[...], ws_ref[...], preferred_element_type=jnp.float32) + b_ref[...]
    h = _gelu(h)
    for i, act in enumerate(acts):
        w = refs[5 + 2 * i][...]
        b = refs[6 + 2 * i][...]
        h = jnp.dot(h.astype(w.dtype), w, preferred_element_type=jnp.float32) + b
        if act == "gelu":
            h = _gelu(h)
    o_ref[...] = h.astype(o_ref.dtype)


def _dense_chain(x2d, layers):
    m, k0 = x2d.shape
    m_pad, tm = _row_tiles(m)
    if m_pad != m:
        x2d = jnp.pad(x2d, ((0, m_pad - m), (0, 0)))
    in_specs = [pl.BlockSpec((tm, k0), lambda i: (i, 0))]
    args = [x2d]
    for w, b, _ in layers:
        in_specs += [pl.BlockSpec(w.shape, lambda i: (0, 0)),
                     pl.BlockSpec(b.shape, lambda i: (0, 0))]
        args += [w, b]
    n_out = layers[-1][0].shape[1]
    out = pl.pallas_call(
        functools.partial(_dense_chain_kernel, acts=tuple(a for _, _, a in layers)),
        out_shape=jax.ShapeDtypeStruct((m_pad, n_out), jnp.bfloat16),
        grid=(m_pad // tm,),
        in_specs=in_specs,
        out_specs=pl.BlockSpec((tm, n_out), lambda i: (i, 0)),
        compiler_params=pltpu.CompilerParams(
            dimension_semantics=("parallel",), vmem_limit_bytes=VMEM_LIMIT),
    )(*args)
    return out[:m] if m_pad != m else out


def _fusion_chain(x2d, s2d, wx, ws, b, extra=()):
    m, L = x2d.shape
    m_pad, tm = _row_tiles(m)
    if m_pad != m:
        x2d = jnp.pad(x2d, ((0, m_pad - m), (0, 0)))
        s2d = jnp.pad(s2d, ((0, m_pad - m), (0, 0)))
    in_specs = [pl.BlockSpec((tm, L), lambda i: (i, 0)),
                pl.BlockSpec((tm, s2d.shape[1]), lambda i: (i, 0)),
                pl.BlockSpec(wx.shape, lambda i: (0, 0)),
                pl.BlockSpec(ws.shape, lambda i: (0, 0)),
                pl.BlockSpec(b.shape, lambda i: (0, 0))]
    args = [x2d, s2d, wx, ws, b]
    for w2, b2, _ in extra:
        in_specs += [pl.BlockSpec(w2.shape, lambda i: (0, 0)),
                     pl.BlockSpec(b2.shape, lambda i: (0, 0))]
        args += [w2, b2]
    n_out = extra[-1][0].shape[1] if extra else wx.shape[1]
    out = pl.pallas_call(
        functools.partial(_fusion_chain_kernel, acts=tuple(a for _, _, a in extra)),
        out_shape=jax.ShapeDtypeStruct((m_pad, n_out), jnp.bfloat16),
        grid=(m_pad // tm,),
        in_specs=in_specs,
        out_specs=pl.BlockSpec((tm, n_out), lambda i: (i, 0)),
        compiler_params=pltpu.CompilerParams(
            dimension_semantics=("parallel",), vmem_limit_bytes=VMEM_LIMIT),
    )(*args)
    return out[:m] if m_pad != m else out


# ----------------------------------------------------------------------------
# Parameter construction (deterministic, synthetic).  Pointwise weights are
# stored block-diagonal (4 copies along the folded lane axis), bf16; biases
# are tiled to (1, 4*n), f32.  No lane padding anywhere except the head's
# per-block class padding.
# ----------------------------------------------------------------------------
def _bd(w):
    return jnp.kron(jnp.eye(FOLD, dtype=w.dtype), w).astype(jnp.bfloat16)


def _bd_bias(b):
    return jnp.tile(b, FOLD).reshape(1, -1).astype(jnp.float32)


def init_params(key, in_ch, dim, num_layers, num_classes):
    # TODO(synk): lane folding assumes 4*dim is a multiple of 128; for dim >= 128
    # one would skip folding instead.
    assert dim % (LANE // FOLD) == 0
    nc_blk = _round_up(num_classes, LANE // FOLD)
    keys = iter(jax.random.split(key, 4 + 3 * num_layers))

    def linear(k, cin, cout):
        kw, kb = jax.random.split(k)
        w = jax.random.normal(kw, (cin, cout), jnp.float32) * 0.02
        b = jax.random.normal(kb, (cout,), jnp.float32) * 0.02
        return _bd(w), _bd_bias(b)

    fusion = []
    for _ in range(num_layers):
        kx, ks, kb = jax.random.split(next(keys), 3)
        wx = jax.random.normal(kx, (dim, dim), jnp.float32) * 0.02
        ws = jax.random.normal(ks, (dim, dim), jnp.float32) * 0.02
        bf = jax.random.normal(kb, (dim,), jnp.float32) * 0.02
        fusion.append((_bd(wx), _bd(ws), _bd_bias(bf)))

    kw, kb = jax.random.split(next(keys))
    wh = jax.random.normal(kw, (dim, num_classes), jnp.float32) * 0.02
    bh = jax.random.normal(kb, (num_classes,), jnp.float32) * 0.02
    wh = jnp.pad(wh, ((0, 0), (0, nc_blk - num_classes)))
    bh = jnp.pad(bh, (0, nc_blk - num_classes))

    return {
        "emb": linear(next(keys), in_ch, dim),
        "enc": [linear(next(keys), dim, dim) for _ in range(num_layers)],
        "bot": linear(next(keys), dim, dim),
        "dec": [linear(next(keys), dim, dim) for _ in range(num_layers)],
        "fuse": fusion,
        "head": (_bd(wh), _bd_bias(bh)),
        "meta": {"dim": dim, "nc": num_classes, "nc_blk": nc_blk, "in_ch": in_ch},
    }


# ----------------------------------------------------------------------------
# ChannelUNet forward (mirrors forward_features + head of the torch module).
# ----------------------------------------------------------------------------
def channel_unet_forward(x, params, num_layers=2):
    # TODO(synk): preprocessor is config-optional in the torch module; omitted (None).
    # TODO(synk): num_layers == 1 variant (no down/up path) not implemented.
    assert num_layers >= 2
    meta = params["meta"]
    d, nc = meta["dim"], meta["nc"]
    L = FOLD * d
    B, H, W, _ = x.shape
    assert H % 4 == 0 and W % 4 == 0

    xf = fold_adj(x).astype(jnp.bfloat16)            # (B, H/2, W/2, 4*C_in) — no padding
    Hg0, Wg0 = H // 2, W // 2
    Hg1 = Hg0 // 2
    th = _choose_th(Hg1, Wg0)

    # embedding + encoder[0] + fused 2x2 avg-pool (two outputs).
    emb, pooled = emb_enc0_pool(xf, params["emb"], params["enc"][0], th, d, L)

    if num_layers == 2:
        # encoder[last] + bottleneck + decoder[0] + fusion[0](skip = own input)
        # + decoder[1] in one call.
        g = bottleneck_block(pooled, params["enc"][1], params["bot"],
                             params["dec"][0], params["fuse"][0], params["dec"][1])
    else:
        # General path (not exercised by the small test): middle levels use the
        # generic kernels with plain-JAX pool/upsample on the folded layout.
        skips = [emb]
        h = fold_adj(unfold_sh(pooled))              # level-1, adjacent convention
        skips.append(h)
        for i in range(1, num_layers - 1):
            shp = h.shape
            y = _dense_chain(h.reshape(-1, L), [params["enc"][i] + ("gelu",)]).reshape(shp)
            h = fold_adj(_avg_pool2x(unfold_adj(y)))
            skips.append(h)
        g = bottleneck_block(h, params["enc"][num_layers - 1], params["bot"],
                             params["dec"][0], params["fuse"][0], params["dec"][1])
        for i in range(1, num_layers - 1):
            g = fold_adj(_upsample2x(unfold_adj(g)))
            skip = skips[num_layers - 1 - i]
            wx, ws, bfu = params["fuse"][i]
            g = _fusion_chain(g.reshape(-1, L), skip.reshape(-1, L), wx, ws, bfu,
                              extra=[params["dec"][i + 1] + ("gelu",)]).reshape(skip.shape)
        g = fold_sh(unfold_adj(g))                   # back to split-half for the last kernel

    # NN upsample (in VMEM) + fusion[last] + head in one call; bf16 out.
    out_f = upsample_fusion_head(g, emb, params["fuse"][num_layers - 1],
                                 params["head"], th, d)
    out = unfold_adj(out_f)[..., :nc].astype(jnp.float32)
    return out


if __name__ == "__main__":
    B, H, W, C_in = 2, 16, 16, 4
    dim, num_layers, num_classes = 32, 2, 8

    key = jax.random.PRNGKey(0)
    kx, kp = jax.random.split(key)
    x = jax.random.normal(kx, (B, H, W, C_in), jnp.float32)
    params = init_params(kp, C_in, dim, num_layers, num_classes)

    fwd = jax.jit(lambda inp: channel_unet_forward(inp, params, num_layers=num_layers))
    out = jax.block_until_ready(fwd(x))
    assert out.shape == (B, H, W, num_classes), out.shape
    print("KERNEL_OK")
</pallas_src>

<mosaic_0001>
module attributes {stable_mosaic.version = 11 : i64} {
  func.func @_emb_enc0_pool_kernel(%arg0: i32, %arg1: i32, %arg2: memref<1x8x8x16xbf16, #tpu.memory_space<vmem>>, %arg3: memref<16x128xbf16, #tpu.memory_space<vmem>>, %arg4: memref<1x128xf32, #tpu.memory_space<vmem>>, %arg5: memref<128x128xbf16, #tpu.memory_space<vmem>>, %arg6: memref<1x128xf32, #tpu.memory_space<vmem>>, %arg7: memref<1x8x8x128xbf16, #tpu.memory_space<vmem>>, %arg8: memref<1x4x4x128xbf16, #tpu.memory_space<vmem>>) attributes {dimension_semantics = [#tpu.dimension_semantics<parallel>, #tpu.dimension_semantics<parallel>], iteration_bounds = array<i64: 2, 1>, scalar_prefetch = 0 : i64, scratch_operands = 0 : i64, tpu.core_type = #tpu.core_type<tc>, window_params = [{transform_indices = @transform_0, window_bounds = array<i64: 1, 8, 8, 16>}, {pipeline_mode = #tpu.pipeline_mode<synchronous>, transform_indices = @transform_1, window_bounds = array<i64: 16, 128>}, {pipeline_mode = #tpu.pipeline_mode<synchronous>, transform_indices = @transform_2, window_bounds = array<i64: 1, 128>}, {pipeline_mode = #tpu.pipeline_mode<synchronous>, transform_indices = @transform_3, window_bounds = array<i64: 128, 128>}, {pipeline_mode = #tpu.pipeline_mode<synchronous>, transform_indices = @transform_4, window_bounds = array<i64: 1, 128>}, {transform_indices = @transform_5, window_bounds = array<i64: 1, 8, 8, 128>}, {transform_indices = @transform_6, window_bounds = array<i64: 1, 4, 4, 128>}]} {
    %c0 = arith.constant 0 : index
    %c0_0 = arith.constant 0 : index
    %c0_1 = arith.constant 0 : index
    %c0_2 = arith.constant 0 : index
    %0 = vector.load %arg2[%c0, %c0_0, %c0_1, %c0_2] : memref<1x8x8x16xbf16, #tpu.memory_space<vmem>>, vector<1x8x8x16xbf16>
    %1 = vector.shape_cast %0 : vector<1x8x8x16xbf16> to vector<8x8x16xbf16>
    %2 = vector.shape_cast %1 : vector<8x8x16xbf16> to vector<64x16xbf16>
    %c0_3 = arith.constant 0 : index
    %c0_4 = arith.constant 0 : index
    %3 = vector.load %arg3[%c0_3, %c0_4] : memref<16x128xbf16, #tpu.memory_space<vmem>>, vector<16x128xbf16>
    %cst = arith.constant dense<0.000000e+00> : vector<64x128xf32>
    %4 = tpu.matmul %2, %3, %cst {dimension_numbers = #tpu.dot_dimension_numbers<[1], [0], [0], [1], [0, 0, 1, 1], [], []>} : vector<64x16xbf16>, vector<16x128xbf16>, vector<64x128xf32> -> vector<64x128xf32>
    %c0_5 = arith.constant 0 : index
    %c0_6 = arith.constant 0 : index
    %5 = vector.load %arg4[%c0_5, %c0_6] : memref<1x128xf32, #tpu.memory_space<vmem>>, vector<1x128xf32>
    %6 = vector.broadcast %5 : vector<1x128xf32> to vector<64x128xf32>
    %7 = arith.addf %4, %6 : vector<64x128xf32>
    %8 = vector.shape_cast %7 : vector<64x128xf32> to vector<8x8x128xf32>
    %9 = arith.truncf %8 : vector<8x8x128xf32> to vector<8x8x128xbf16>
    %c0_7 = arith.constant 0 : index
    %c0_8 = arith.constant 0 : index
    %c0_9 = arith.constant 0 : index
    %c0_10 = arith.constant 0 : index
    %10 = vector.load %arg7[%c0_7, %c0_8, %c0_9, %c0_10] : memref<1x8x8x128xbf16, #tpu.memory_space<vmem>>, vector<1x8x8x128xbf16>
    %11 = vector.shape_cast %10 : vector<1x8x8x128xbf16> to vector<8x8x128xbf16>
    %12 = vector.shape_cast %9 : vector<8x8x128xbf16> to vector<1x8x8x128xbf16>
    tpu.vector_store %arg7[%c0_7, %c0_8, %c0_9, %c0_10], %12 {strides = array<i32>} : memref<1x8x8x128xbf16, #tpu.memory_space<vmem>>, vector<1x8x8x128xbf16>,
    %13 = arith.truncf %7 : vector<64x128xf32> to vector<64x128xbf16>
    %c0_11 = arith.constant 0 : index
    %c0_12 = arith.constant 0 : index
    %14 = vector.load %arg5[%c0_11, %c0_12] : memref<128x128xbf16, #tpu.memory_space<vmem>>, vector<128x128xbf16>
    %cst_13 = arith.constant dense<0.000000e+00> : vector<64x128xf32>
    %15 = tpu.matmul %13, %14, %cst_13 {dimension_numbers = #tpu.dot_dimension_numbers<[1], [0], [0], [1], [0, 0, 1, 1], [], []>} : vector<64x128xbf16>, vector<128x128xbf16>, vector<64x128xf32> -> vector<64x128xf32>
    %c0_14 = arith.constant 0 : index
    %c0_15 = arith.constant 0 : index
    %16 = vector.load %arg6[%c0_14, %c0_15] : memref<1x128xf32, #tpu.memory_space<vmem>>, vector<1x128xf32>
    %17 = vector.broadcast %16 : vector<1x128xf32> to vector<64x128xf32>
    %18 = arith.addf %15, %17 : vector<64x128xf32>
    %19 = arith.mulf %18, %18 : vector<64x128xf32>
    %20 = arith.mulf %18, %19 : vector<64x128xf32>
    %cst_16 = arith.constant 4.471500e-02 : f32
    %21 = vector.broadcast %cst_16 : f32 to vector<64x128xf32>
    %22 = arith.mulf %21, %20 : vector<64x128xf32>
    %23 = arith.addf %18, %22 : vector<64x128xf32>
    %cst_17 = arith.constant 0.797884583 : f32
    %24 = vector.broadcast %cst_17 : f32 to vector<64x128xf32>
    %25 = arith.mulf %24, %23 : vector<64x128xf32>
    %26 = math.tanh %25 : vector<64x128xf32>
    %cst_18 = arith.constant 1.000000e+00 : f32
    %27 = vector.broadcast %cst_18 : f32 to vector<64x128xf32>
    %28 = arith.addf %27, %26 : vector<64x128xf32>
    %cst_19 = arith.constant 5.000000e-01 : f32
    %29 = vector.broadcast %cst_19 : f32 to vector<64x128xf32>
    %30 = arith.mulf %29, %28 : vector<64x128xf32>
    %31 = arith.mulf %18, %30 : vector<64x128xf32>
    %32 = vector.shape_cast %31 : vector<64x128xf32> to vector<8x8x128xf32>
    %33 = vector.extract_strided_slice %32 {offsets = [0, 0, 0], sizes = [8, 8, 32], strides = [1, 1, 1]} : vector<8x8x128xf32> to vector<8x8x32xf32>
    %34 = vector.extract_strided_slice %32 {offsets = [0, 0, 32], sizes = [8, 8, 32], strides = [1, 1, 1]} : vector<8x8x128xf32> to vector<8x8x32xf32>
    %35 = arith.addf %33, %34 : vector<8x8x32xf32>
    %36 = vector.extract_strided_slice %32 {offsets = [0, 0, 64], sizes = [8, 8, 32], strides = [1, 1, 1]} : vector<8x8x128xf32> to vector<8x8x32xf32>
    %37 = arith.addf %35, %36 : vector<8x8x32xf32>
    %38 = vector.extract_strided_slice %32 {offsets = [0, 0, 96], sizes = [8, 8, 32], strides = [1, 1, 1]} : vector<8x8x128xf32> to vector<8x8x32xf32>
    %39 = arith.addf %37, %38 : vector<8x8x32xf32>
    %cst_20 = arith.constant 2.500000e-01 : f32
    %40 = vector.broadcast %cst_20 : f32 to vector<8x8x32xf32>
    %41 = arith.mulf %39, %40 : vector<8x8x32xf32>
    %42 = vector.extract_strided_slice %41 {offsets = [0, 0, 0], sizes = [1, 4, 32], strides = [1, 1, 1]} : vector<8x8x32xf32> to vector<1x4x32xf32>
    %43 = vector.shape_cast %42 : vector<1x4x32xf32> to vector<4x32xf32>
    %44 = vector.extract_strided_slice %41 {offsets = [0, 4, 0], sizes = [1, 4, 32], strides = [1, 1, 1]} : vector<8x8x32xf32> to vector<1x4x32xf32>
    %45 = vector.shape_cast %44 : vector<1x4x32xf32> to vector<4x32xf32>
    %46 = vector.extract_strided_slice %41 {offsets = [1, 0, 0], sizes = [1, 4, 32], strides = [1, 1, 1]} : vector<8x8x32xf32> to vector<1x4x32xf32>
    %47 = vector.shape_cast %46 : vector<1x4x32xf32> to vector<4x32xf32>
    %48 = vector.extract_strided_slice %41 {offsets = [1, 4, 0], sizes = [1, 4, 32], strides = [1, 1, 1]} : vector<8x8x32xf32> to vector<1x4x32xf32>
    %49 = vector.shape_cast %48 : vector<1x4x32xf32> to vector<4x32xf32>
    %50 = tpu.concatenate %43, %45, %47, %49 in 1 : vector<4x32xf32>, vector<4x32xf32>, vector<4x32xf32>, vector<4x32xf32> -> vector<4x128xf32>
    %51 = vector.extract_strided_slice %41 {offsets = [2, 0, 0], sizes = [1, 4, 32], strides = [1, 1, 1]} : vector<8x8x32xf32> to vector<1x4x32xf32>
    %52 = vector.shape_cast %51 : vector<1x4x32xf32> to vector<4x32xf32>
    %53 = vector.extract_strided_slice %41 {offsets = [2, 4, 0], sizes = [1, 4, 32], strides = [1, 1, 1]} : vector<8x8x32xf32> to vector<1x4x32xf32>
    %54 = vector.shape_cast %53 : vector<1x4x32xf32> to vector<4x32xf32>
    %55 = vector.extract_strided_slice %41 {offsets = [3, 0, 0], sizes = [1, 4, 32], strides = [1, 1, 1]} : vector<8x8x32xf32> to vector<1x4x32xf32>
    %56 = vector.shape_cast %55 : vector<1x4x32xf32> to vector<4x32xf32>
    %57 = vector.extract_strided_slice %41 {offsets = [3, 4, 0], sizes = [1, 4, 32], strides = [1, 1, 1]} : vector<8x8x32xf32> to vector<1x4x32xf32>
    %58 = vector.shape_cast %57 : vector<1x4x32xf32> to vector<4x32xf32>
    %59 = tpu.concatenate %52, %54, %56, %58 in 1 : vector<4x32xf32>, vector<4x32xf32>, vector<4x32xf32>, vector<4x32xf32> -> vector<4x128xf32>
    %60 = vector.extract_strided_slice %41 {offsets = [4, 0, 0], sizes = [1, 4, 32], strides = [1, 1, 1]} : vector<8x8x32xf32> to vector<1x4x32xf32>
    %61 = vector.shape_cast %60 : vector<1x4x32xf32> to vector<4x32xf32>
    %62 = vector.extract_strided_slice %41 {offsets = [4, 4, 0], sizes = [1, 4, 32], strides = [1, 1, 1]} : vector<8x8x32xf32> to vector<1x4x32xf32>
    %63 = vector.shape_cast %62 : vector<1x4x32xf32> to vector<4x32xf32>
    %64 = vector.extract_strided_slice %41 {offsets = [5, 0, 0], sizes = [1, 4, 32], strides = [1, 1, 1]} : vector<8x8x32xf32> to vector<1x4x32xf32>
    %65 = vector.shape_cast %64 : vector<1x4x32xf32> to vector<4x32xf32>
    %66 = vector.extract_strided_slice %41 {offsets = [5, 4, 0], sizes = [1, 4, 32], strides = [1, 1, 1]} : vector<8x8x32xf32> to vector<1x4x32xf32>
    %67 = vector.shape_cast %66 : vector<1x4x32xf32> to vector<4x32xf32>
    %68 = tpu.concatenate %61, %63, %65, %67 in 1 : vector<4x32xf32>, vector<4x32xf32>, vector<4x32xf32>, vector<4x32xf32> -> vector<4x128xf32>
    %69 = vector.extract_strided_slice %41 {offsets = [6, 0, 0], sizes = [1, 4, 32], strides = [1, 1, 1]} : vector<8x8x32xf32> to vector<1x4x32xf32>
    %70 = vector.shape_cast %69 : vector<1x4x32xf32> to vector<4x32xf32>
    %71 = vector.extract_strided_slice %41 {offsets = [6, 4, 0], sizes = [1, 4, 32], strides = [1, 1, 1]} : vector<8x8x32xf32> to vector<1x4x32xf32>
    %72 = vector.shape_cast %71 : vector<1x4x32xf32> to vector<4x32xf32>
    %73 = vector.extract_strided_slice %41 {offsets = [7, 0, 0], sizes = [1, 4, 32], strides = [1, 1, 1]} : vector<8x8x32xf32> to vector<1x4x32xf32>
    %74 = vector.shape_cast %73 : vector<1x4x32xf32> to vector<4x32xf32>
    %75 = vector.extract_strided_slice %41 {offsets = [7, 4, 0], sizes = [1, 4, 32], strides = [1, 1, 1]} : vector<8x8x32xf32> to vector<1x4x32xf32>
    %76 = vector.shape_cast %75 : vector<1x4x32xf32> to vector<4x32xf32>
    %77 = tpu.concatenate %70, %72, %74, %76 in 1 : vector<4x32xf32>, vector<4x32xf32>, vector<4x32xf32>, vector<4x32xf32> -> vector<4x128xf32>
    %78 = vector.shape_cast %50 : vector<4x128xf32> to vector<1x4x128xf32>
    %79 = vector.shape_cast %59 : vector<4x128xf32> to vector<1x4x128xf32>
    %80 = vector.shape_cast %68 : vector<4x128xf32> to vector<1x4x128xf32>
    %81 = vector.shape_cast %77 : vector<4x128xf32> to vector<1x4x128xf32>
    %82 = tpu.concatenate %78, %79, %80, %81 in 0 : vector<1x4x128xf32>, vector<1x4x128xf32>, vector<1x4x128xf32>, vector<1x4x128xf32> -> vector<4x4x128xf32>
    %83 = arith.truncf %82 : vector<4x4x128xf32> to vector<4x4x128xbf16>
    %c0_21 = arith.constant 0 : index
    %c0_22 = arith.constant 0 : index
    %c0_23 = arith.constant 0 : index
    %c0_24 = arith.constant 0 : index
    %84 = vector.load %arg8[%c0_21, %c0_22, %c0_23, %c0_24] : memref<1x4x4x128xbf16, #tpu.memory_space<vmem>>, vector<1x4x4x128xbf16>
    %85 = vector.shape_cast %84 : vector<1x4x4x128xbf16> to vector<4x4x128xbf16>
    %86 = vector.shape_cast %83 : vector<4x4x128xbf16> to vector<1x4x4x128xbf16>
    tpu.vector_store %arg8[%c0_21, %c0_22, %c0_23, %c0_24], %86 {strides = array<i32>} : memref<1x4x4x128xbf16, #tpu.memory_space<vmem>>, vector<1x4x4x128xbf16>,
    return
  }
  func.func @transform_0(%arg0: i32, %arg1: i32) -> (i32, i32, i32, i32) {
    %c0_i32 = arith.constant 0 : i32
    %c0_i32_0 = arith.constant 0 : i32
    %c0_i32_1 = arith.constant 0 : i32
    return %arg0, %arg1, %c0_i32, %c0_i32_0 : i32, i32, i32, i32
  }
  func.func @transform_1(%arg0: i32, %arg1: i32) -> (i32, i32) {
    %c0_i32 = arith.constant 0 : i32
    %c0_i32_0 = arith.constant 0 : i32
    %c0_i32_1 = arith.constant 0 : i32
    return %c0_i32, %c0_i32_0 : i32, i32
  }
  func.func @transform_2(%arg0: i32, %arg1: i32) -> (i32, i32) {
    %c0_i32 = arith.constant 0 : i32
    %c0_i32_0 = arith.constant 0 : i32
    %c0_i32_1 = arith.constant 0 : i32
    return %c0_i32, %c0_i32_0 : i32, i32
  }
  func.func @transform_3(%arg0: i32, %arg1: i32) -> (i32, i32) {
    %c0_i32 = arith.constant 0 : i32
    %c0_i32_0 = arith.constant 0 : i32
    %c0_i32_1 = arith.constant 0 : i32
    return %c0_i32, %c0_i32_0 : i32, i32
  }
  func.func @transform_4(%arg0: i32, %arg1: i32) -> (i32, i32) {
    %c0_i32 = arith.constant 0 : i32
    %c0_i32_0 = arith.constant 0 : i32
    %c0_i32_1 = arith.constant 0 : i32
    return %c0_i32, %c0_i32_0 : i32, i32
  }
  func.func @transform_5(%arg0: i32, %arg1: i32) -> (i32, i32, i32, i32) {
    %c0_i32 = arith.constant 0 : i32
    %c0_i32_0 = arith.constant 0 : i32
    %c0_i32_1 = arith.constant 0 : i32
    return %arg0, %arg1, %c0_i32, %c0_i32_0 : i32, i32, i32, i32
  }
  func.func @transform_6(%arg0: i32, %arg1: i32) -> (i32, i32, i32, i32) {
    %c0_i32 = arith.constant 0 : i32
    %c0_i32_0 = arith.constant 0 : i32
    %c0_i32_1 = arith.constant 0 : i32
    return %arg0, %arg1, %c0_i32, %c0_i32_0 : i32, i32, i32, i32
  }
}

module attributes {stable_mosaic.version = 11 : i64} {
  func.func @_bottleneck_chain_kernel(%arg0: i32, %arg1: memref<32x128xbf16, #tpu.memory_space<vmem>>, %arg2: memref<128x128xbf16, #tpu.memory_space<vmem>>, %arg3: memref<1x128xf32, #tpu.memory_space<vmem>>, %arg4: memref<128x128xbf16, #tpu.memory_space<vmem>>, %arg5: memref<1x128xf32, #tpu.memory_space<vmem>>, %arg6: memref<128x128xbf16, #tpu.memory_space<vmem>>, %arg7: memref<1x128xf32, #tpu.memory_space<vmem>>, %arg8: memref<128x128xbf16, #tpu.memory_space<vmem>>, %arg9: memref<128x128xbf16, #tpu.memory_space<vmem>>, %arg10: memref<1x128xf32, #tpu.memory_space<vmem>>, %arg11: memref<128x128xbf16, #tpu.memory_space<vmem>>, %arg12: memref<1x128xf32, #tpu.memory_space<vmem>>, %arg13: memref<32x128xbf16, #tpu.memory_space<vmem>>) attributes {dimension_semantics = [#tpu.dimension_semantics<parallel>], iteration_bounds = array<i64: 1>, scalar_prefetch = 0 : i64, scratch_operands = 0 : i64, tpu.core_type = #tpu.core_type<tc>, window_params = [{transform_indices = @transform_0, window_bounds = array<i64: 32, 128>}, {pipeline_mode = #tpu.pipeline_mode<synchronous>, transform_indices = @transform_1, window_bounds = array<i64: 128, 128>}, {pipeline_mode = #tpu.pipeline_mode<synchronous>, transform_indices = @transform_2, window_bounds = array<i64: 1, 128>}, {pipeline_mode = #tpu.pipeline_mode<synchronous>, transform_indices = @transform_3, window_bounds = array<i64: 128, 128>}, {pipeline_mode = #tpu.pipeline_mode<synchronous>, transform_indices = @transform_4, window_bounds = array<i64: 1, 128>}, {pipeline_mode = #tpu.pipeline_mode<synchronous>, transform_indices = @transform_5, window_bounds = array<i64: 128, 128>}, {pipeline_mode = #tpu.pipeline_mode<synchronous>, transform_indices = @transform_6, window_bounds = array<i64: 1, 128>}, {pipeline_mode = #tpu.pipeline_mode<synchronous>, transform_indices = @transform_7, window_bounds = array<i64: 128, 128>}, {pipeline_mode = #tpu.pipeline_mode<synchronous>, transform_indices = @transform_8, window_bounds = array<i64: 128, 128>}, {pipeline_mode = #tpu.pipeline_mode<synchronous>, transform_indices = @transform_9, window_bounds = array<i64: 1, 128>}, {pipeline_mode = #tpu.pipeline_mode<synchronous>, transform_indices = @transform_10, window_bounds = array<i64: 128, 128>}, {pipeline_mode = #tpu.pipeline_mode<synchronous>, transform_indices = @transform_11, window_bounds = array<i64: 1, 128>}, {transform_indices = @transform_12, window_bounds = array<i64: 32, 128>}]} {
    %c0 = arith.constant 0 : index
    %c0_0 = arith.constant 0 : index
    %0 = vector.load %arg1[%c0, %c0_0] : memref<32x128xbf16, #tpu.memory_space<vmem>>, vector<32x128xbf16>
    %c0_1 = arith.constant 0 : index
    %c0_2 = arith.constant 0 : index
    %1 = vector.load %arg2[%c0_1, %c0_2] : memref<128x128xbf16, #tpu.memory_space<vmem>>, vector<128x128xbf16>
    %cst = arith.constant dense<0.000000e+00> : vector<32x128xf32>
    %2 = tpu.matmul %0, %1, %cst {dimension_numbers = #tpu.dot_dimension_numbers<[1], [0], [0], [1], [0, 0, 1, 1], [], []>} : vector<32x128xbf16>, vector<128x128xbf16>, vector<32x128xf32> -> vector<32x128xf32>
    %c0_3 = arith.constant 0 : index
    %c0_4 = arith.constant 0 : index
    %3 = vector.load %arg3[%c0_3, %c0_4] : memref<1x128xf32, #tpu.memory_space<vmem>>, vector<1x128xf32>
    %4 = vector.broadcast %3 : vector<1x128xf32> to vector<32x128xf32>
    %5 = arith.addf %2, %4 : vector<32x128xf32>
    %6 = arith.mulf %5, %5 : vector<32x128xf32>
    %7 = arith.mulf %5, %6 : vector<32x128xf32>
    %cst_5 = arith.constant 4.471500e-02 : f32
    %8 = vector.broadcast %cst_5 : f32 to vector<32x128xf32>
    %9 = arith.mulf %8, %7 : vector<32x128xf32>
    %10 = arith.addf %5, %9 : vector<32x128xf32>
    %cst_6 = arith.constant 0.797884583 : f32
    %11 = vector.broadcast %cst_6 : f32 to vector<32x128xf32>
    %12 = arith.mulf %11, %10 : vector<32x128xf32>
    %13 = math.tanh %12 : vector<32x128xf32>
    %cst_7 = arith.constant 1.000000e+00 : f32
    %14 = vector.broadcast %cst_7 : f32 to vector<32x128xf32>
    %15 = arith.addf %14, %13 : vector<32x128xf32>
    %cst_8 = arith.constant 5.000000e-01 : f32
    %16 = vector.broadcast %cst_8 : f32 to vector<32x128xf32>
    %17 = arith.mulf %16, %15 : vector<32x128xf32>
    %18 = arith.mulf %5, %17 : vector<32x128xf32>
    %19 = arith.truncf %18 : vector<32x128xf32> to vector<32x128xbf16>
    %c0_9 = arith.constant 0 : index
    %c0_10 = arith.constant 0 : index
    %20 = vector.load %arg4[%c0_9, %c0_10] : memref<128x128xbf16, #tpu.memory_space<vmem>>, vector<128x128xbf16>
    %cst_11 = arith.constant dense<0.000000e+00> : vector<32x128xf32>
    %21 = tpu.matmul %19, %20, %cst_11 {dimension_numbers = #tpu.dot_dimension_numbers<[1], [0], [0], [1], [0, 0, 1, 1], [], []>} : vector<32x128xbf16>, vector<128x128xbf16>, vector<32x128xf32> -> vector<32x128xf32>
    %c0_12 = arith.constant 0 : index
    %c0_13 = arith.constant 0 : index
    %22 = vector.load %arg5[%c0_12, %c0_13] : memref<1x128xf32, #tpu.memory_space<vmem>>, vector<1x128xf32>
    %23 = vector.broadcast %22 : vector<1x128xf32> to vector<32x128xf32>
    %24 = arith.addf %21, %23 : vector<32x128xf32>
    %25 = arith.mulf %24, %24 : vector<32x128xf32>
    %26 = arith.mulf %24, %25 : vector<32x128xf32>
    %cst_14 = arith.constant 4.471500e-02 : f32
    %27 = vector.broadcast %cst_14 : f32 to vector<32x128xf32>
    %28 = arith.mulf %27, %26 : vector<32x128xf32>
    %29 = arith.addf %24, %28 : vector<32x128xf32>
    %cst_15 = arith.constant 0.797884583 : f32
    %30 = vector.broadcast %cst_15 : f32 to vector<32x128xf32>
    %31 = arith.mulf %30, %29 : vector<32x128xf32>
    %32 = math.tanh %31 : vector<32x128xf32>
    %cst_16 = arith.constant 1.000000e+00 : f32
    %33 = vector.broadcast %cst_16 : f32 to vector<32x128xf32>
    %34 = arith.addf %33, %32 : vector<32x128xf32>
    %cst_17 = arith.constant 5.000000e-01 : f32
    %35 = vector.broadcast %cst_17 : f32 to vector<32x128xf32>
    %36 = arith.mulf %35, %34 : vector<32x128xf32>
    %37 = arith.mulf %24, %36 : vector<32x128xf32>
    %38 = arith.truncf %37 : vector<32x128xf32> to vector<32x128xbf16>
    %c0_18 = arith.constant 0 : index
    %c0_19 = arith.constant 0 : index
    %39 = vector.load %arg6[%c0_18, %c0_19] : memref<128x128xbf16, #tpu.memory_space<vmem>>, vector<128x128xbf16>
    %cst_20 = arith.constant dense<0.000000e+00> : vector<32x128xf32>
    %40 = tpu.matmul %38, %39, %cst_20 {dimension_numbers = #tpu.dot_dimension_numbers<[1], [0], [0], [1], [0, 0, 1, 1], [], []>} : vector<32x128xbf16>, vector<128x128xbf16>, vector<32x128xf32> -> vector<32x128xf32>
    %c0_21 = arith.constant 0 : index
    %c0_22 = arith.constant 0 : index
    %41 = vector.load %arg7[%c0_21, %c0_22] : memref<1x128xf32, #tpu.memory_space<vmem>>, vector<1x128xf32>
    %42 = vector.broadcast %41 : vector<1x128xf32> to vector<32x128xf32>
    %43 = arith.addf %40, %42 : vector<32x128xf32>
    %44 = arith.mulf %43, %43 : vector<32x128xf32>
    %45 = arith.mulf %43, %44 : vector<32x128xf32>
    %cst_23 = arith.constant 4.471500e-02 : f32
    %46 = vector.broadcast %cst_23 : f32 to vector<32x128xf32>
    %47 = arith.mulf %46, %45 : vector<32x128xf32>
    %48 = arith.addf %43, %47 : vector<32x128xf32>
    %cst_24 = arith.constant 0.797884583 : f32
    %49 = vector.broadcast %cst_24 : f32 to vector<32x128xf32>
    %50 = arith.mulf %49, %48 : vector<32x128xf32>
    %51 = math.tanh %50 : vector<32x128xf32>
    %cst_25 = arith.constant 1.000000e+00 : f32
    %52 = vector.broadcast %cst_25 : f32 to vector<32x128xf32>
    %53 = arith.addf %52, %51 : vector<32x128xf32>
    %cst_26 = arith.constant 5.000000e-01 : f32
    %54 = vector.broadcast %cst_26 : f32 to vector<32x128xf32>
    %55 = arith.mulf %54, %53 : vector<32x128xf32>
    %56 = arith.mulf %43, %55 : vector<32x128xf32>
    %57 = arith.truncf %56 : vector<32x128xf32> to vector<32x128xbf16>
    %c0_27 = arith.constant 0 : index
    %c0_28 = arith.constant 0 : index
    %58 = vector.load %arg8[%c0_27, %c0_28] : memref<128x128xbf16, #tpu.memory_space<vmem>>, vector<128x128xbf16>
    %cst_29 = arith.constant dense<0.000000e+00> : vector<32x128xf32>
    %59 = tpu.matmul %57, %58, %cst_29 {dimension_numbers = #tpu.dot_dimension_numbers<[1], [0], [0], [1], [0, 0, 1, 1], [], []>} : vector<32x128xbf16>, vector<128x128xbf16>, vector<32x128xf32> -> vector<32x128xf32>
    %c0_30 = arith.constant 0 : index
    %c0_31 = arith.constant 0 : index
    %60 = vector.load %arg9[%c0_30, %c0_31] : memref<128x128xbf16, #tpu.memory_space<vmem>>, vector<128x128xbf16>
    %cst_32 = arith.constant dense<0.000000e+00> : vector<32x128xf32>
    %61 = tpu.matmul %0, %60, %cst_32 {dimension_numbers = #tpu.dot_dimension_numbers<[1], [0], [0], [1], [0, 0, 1, 1], [], []>} : vector<32x128xbf16>, vector<128x128xbf16>, vector<32x128xf32> -> vector<32x128xf32>
    %62 = arith.addf %59, %61 : vector<32x128xf32>
    %c0_33 = arith.constant 0 : index
    %c0_34 = arith.constant 0 : index
    %63 = vector.load %arg10[%c0_33, %c0_34] : memref<1x128xf32, #tpu.memory_space<vmem>>, vector<1x128xf32>
    %64 = vector.broadcast %63 : vector<1x128xf32> to vector<32x128xf32>
    %65 = arith.addf %62, %64 : vector<32x128xf32>
    %66 = arith.mulf %65, %65 : vector<32x128xf32>
    %67 = arith.mulf %65, %66 : vector<32x128xf32>
    %cst_35 = arith.constant 4.471500e-02 : f32
    %68 = vector.broadcast %cst_35 : f32 to vector<32x128xf32>
    %69 = arith.mulf %68, %67 : vector<32x128xf32>
    %70 = arith.addf %65, %69 : vector<32x128xf32>
    %cst_36 = arith.constant 0.797884583 : f32
    %71 = vector.broadcast %cst_36 : f32 to vector<32x128xf32>
    %72 = arith.mulf %71, %70 : vector<32x128xf32>
    %73 = math.tanh %72 : vector<32x128xf32>
    %cst_37 = arith.constant 1.000000e+00 : f32
    %74 = vector.broadcast %cst_37 : f32 to vector<32x128xf32>
    %75 = arith.addf %74, %73 : vector<32x128xf32>
    %cst_38 = arith.constant 5.000000e-01 : f32
    %76 = vector.broadcast %cst_38 : f32 to vector<32x128xf32>
    %77 = arith.mulf %76, %75 : vector<32x128xf32>
    %78 = arith.mulf %65, %77 : vector<32x128xf32>
    %79 = arith.truncf %78 : vector<32x128xf32> to vector<32x128xbf16>
    %c0_39 = arith.constant 0 : index
    %c0_40 = arith.constant 0 : index
    %80 = vector.load %arg11[%c0_39, %c0_40] : memref<128x128xbf16, #tpu.memory_space<vmem>>, vector<128x128xbf16>
    %cst_41 = arith.constant dense<0.000000e+00> : vector<32x128xf32>
    %81 = tpu.matmul %79, %80, %cst_41 {dimension_numbers = #tpu.dot_dimension_numbers<[1], [0], [0], [1], [0, 0, 1, 1], [], []>} : vector<32x128xbf16>, vector<128x128xbf16>, vector<32x128xf32> -> vector<32x128xf32>
    %c0_42 = arith.constant 0 : index
    %c0_43 = arith.constant 0 : index
    %82 = vector.load %arg12[%c0_42, %c0_43] : memref<1x128xf32, #tpu.memory_space<vmem>>, vector<1x128xf32>
    %83 = vector.broadcast %82 : vector<1x128xf32> to vector<32x128xf32>
    %84 = arith.addf %81, %83 : vector<32x128xf32>
    %85 = arith.mulf %84, %84 : vector<32x128xf32>
    %86 = arith.mulf %84, %85 : vector<32x128xf32>
    %cst_44 = arith.constant 4.471500e-02 : f32
    %87 = vector.broadcast %cst_44 : f32 to vector<32x128xf32>
    %88 = arith.mulf %87, %86 : vector<32x128xf32>
    %89 = arith.addf %84, %88 : vector<32x128xf32>
    %cst_45 = arith.constant 0.797884583 : f32
    %90 = vector.broadcast %cst_45 : f32 to vector<32x128xf32>
    %91 = arith.mulf %90, %89 : vector<32x128xf32>
    %92 = math.tanh %91 : vector<32x128xf32>
    %cst_46 = arith.constant 1.000000e+00 : f32
    %93 = vector.broadcast %cst_46 : f32 to vector<32x128xf32>
    %94 = arith.addf %93, %92 : vector<32x128xf32>
    %cst_47 = arith.constant 5.000000e-01 : f32
    %95 = vector.broadcast %cst_47 : f32 to vector<32x128xf32>
    %96 = arith.mulf %95, %94 : vector<32x128xf32>
    %97 = arith.mulf %84, %96 : vector<32x128xf32>
    %98 = arith.truncf %97 : vector<32x128xf32> to vector<32x128xbf16>
    %c0_48 = arith.constant 0 : index
    %c0_49 = arith.constant 0 : index
    %99 = vector.load %arg13[%c0_48, %c0_49] : memref<32x128xbf16, #tpu.memory_space<vmem>>, vector<32x128xbf16>
    tpu.vector_store %arg13[%c0_48, %c0_49], %98 {strides = array<i32>} : memref<32x128xbf16, #tpu.memory_space<vmem>>, vector<32x128xbf16>,
    return
  }
  func.func @transform_0(%arg0: i32) -> (i32, i32) {
    %c0_i32 = arith.constant 0 : i32
    %c0_i32_0 = arith.constant 0 : i32
    return %arg0, %c0_i32 : i32, i32
  }
  func.func @transform_1(%arg0: i32) -> (i32, i32) {
    %c0_i32 = arith.constant 0 : i32
    %c0_i32_0 = arith.constant 0 : i32
    %c0_i32_1 = arith.constant 0 : i32
    return %c0_i32, %c0_i32_0 : i32, i32
  }
  func.func @transform_2(%arg0: i32) -> (i32, i32) {
    %c0_i32 = arith.constant 0 : i32
    %c0_i32_0 = arith.constant 0 : i32
    %c0_i32_1 = arith.constant 0 : i32
    return %c0_i32, %c0_i32_0 : i32, i32
  }
  func.func @transform_3(%arg0: i32) -> (i32, i32) {
    %c0_i32 = arith.constant 0 : i32
    %c0_i32_0 = arith.constant 0 : i32
    %c0_i32_1 = arith.constant 0 : i32
    return %c0_i32, %c0_i32_0 : i32, i32
  }
  func.func @transform_4(%arg0: i32) -> (i32, i32) {
    %c0_i32 = arith.constant 0 : i32
    %c0_i32_0 = arith.constant 0 : i32
    %c0_i32_1 = arith.constant 0 : i32
    return %c0_i32, %c0_i32_0 : i32, i32
  }
  func.func @transform_5(%arg0: i32) -> (i32, i32) {
    %c0_i32 = arith.constant 0 : i32
    %c0_i32_0 = arith.constant 0 : i32
    %c0_i32_1 = arith.constant 0 : i32
    return %c0_i32, %c0_i32_0 : i32, i32
  }
  func.func @transform_6(%arg0: i32) -> (i32, i32) {
    %c0_i32 = arith.constant 0 : i32
    %c0_i32_0 = arith.constant 0 : i32
    %c0_i32_1 = arith.constant 0 : i32
    return %c0_i32, %c0_i32_0 : i32, i32
  }
  func.func @transform_7(%arg0: i32) -> (i32, i32) {
    %c0_i32 = arith.constant 0 : i32
    %c0_i32_0 = arith.constant 0 : i32
    %c0_i32_1 = arith.constant 0 : i32
    return %c0_i32, %c0_i32_0 : i32, i32
  }
  func.func @transform_8(%arg0: i32) -> (i32, i32) {
    %c0_i32 = arith.constant 0 : i32
    %c0_i32_0 = arith.constant 0 : i32
    %c0_i32_1 = arith.constant 0 : i32
    return %c0_i32, %c0_i32_0 : i32, i32
  }
  func.func @transform_9(%arg0: i32) -> (i32, i32) {
    %c0_i32 = arith.constant 0 : i32
    %c0_i32_0 = arith.constant 0 : i32
    %c0_i32_1 = arith.constant 0 : i32
    return %c0_i32, %c0_i32_0 : i32, i32
  }
  func.func @transform_10(%arg0: i32) -> (i32, i32) {
    %c0_i32 = arith.constant 0 : i32
    %c0_i32_0 = arith.constant 0 : i32
    %c0_i32_1 = arith.constant 0 : i32
    return %c0_i32, %c0_i32_0 : i32, i32
  }
  func.func @transform_11(%arg0: i32) -> (i32, i32) {
    %c0_i32 = arith.constant 0 : i32
    %c0_i32_0 = arith.constant 0 : i32
    %c0_i32_1 = arith.constant 0 : i32
    return %c0_i32, %c0_i32_0 : i32, i32
  }
  func.func @transform_12(%arg0: i32) -> (i32, i32) {
    %c0_i32 = arith.constant 0 : i32
    %c0_i32_0 = arith.constant 0 : i32
    return %arg0, %c0_i32 : i32, i32
  }
}

module attributes {stable_mosaic.version = 11 : i64} {
  func.func @_upsample_fusion_head_kernel(%arg0: i32, %arg1: i32, %arg2: memref<1x4x4x128xbf16, #tpu.memory_space<vmem>>, %arg3: memref<1x8x8x128xbf16, #tpu.memory_space<vmem>>, %arg4: memref<128x128xbf16, #tpu.memory_space<vmem>>, %arg5: memref<128x128xbf16, #tpu.memory_space<vmem>>, %arg6: memref<1x128xf32, #tpu.memory_space<vmem>>, %arg7: memref<128x128xbf16, #tpu.memory_space<vmem>>, %arg8: memref<1x128xf32, #tpu.memory_space<vmem>>, %arg9: memref<1x8x8x128xbf16, #tpu.memory_space<vmem>>) attributes {dimension_semantics = [#tpu.dimension_semantics<parallel>, #tpu.dimension_semantics<parallel>], iteration_bounds = array<i64: 2, 1>, scalar_prefetch = 0 : i64, scratch_operands = 0 : i64, tpu.core_type = #tpu.core_type<tc>, window_params = [{transform_indices = @transform_0, window_bounds = array<i64: 1, 4, 4, 128>}, {transform_indices = @transform_1, window_bounds = array<i64: 1, 8, 8, 128>}, {pipeline_mode = #tpu.pipeline_mode<synchronous>, transform_indices = @transform_2, window_bounds = array<i64: 128, 128>}, {pipeline_mode = #tpu.pipeline_mode<synchronous>, transform_indices = @transform_3, window_bounds = array<i64: 128, 128>}, {pipeline_mode = #tpu.pipeline_mode<synchronous>, transform_indices = @transform_4, window_bounds = array<i64: 1, 128>}, {pipeline_mode = #tpu.pipeline_mode<synchronous>, transform_indices = @transform_5, window_bounds = array<i64: 128, 128>}, {pipeline_mode = #tpu.pipeline_mode<synchronous>, transform_indices = @transform_6, window_bounds = array<i64: 1, 128>}, {transform_indices = @transform_7, window_bounds = array<i64: 1, 8, 8, 128>}]} {
    %c0 = arith.constant 0 : index
    %c0_0 = arith.constant 0 : index
    %c0_1 = arith.constant 0 : index
    %c0_2 = arith.constant 0 : index
    %0 = vector.load %arg2[%c0, %c0_0, %c0_1, %c0_2] : memref<1x4x4x128xbf16, #tpu.memory_space<vmem>>, vector<1x4x4x128xbf16>
    %1 = vector.shape_cast %0 : vector<1x4x4x128xbf16> to vector<4x4x128xbf16>
    %2 = vector.extract_strided_slice %1 {offsets = [0, 0, 0], sizes = [1, 4, 128], strides = [1, 1, 1]} : vector<4x4x128xbf16> to vector<1x4x128xbf16>
    %3 = vector.shape_cast %2 : vector<1x4x128xbf16> to vector<4x128xbf16>
    %4 = vector.extract_strided_slice %3 {offsets = [0, 0], sizes = [4, 32], strides = [1, 1]} : vector<4x128xbf16> to vector<4x32xbf16>
    %5 = vector.extract_strided_slice %3 {offsets = [0, 32], sizes = [4, 32], strides = [1, 1]} : vector<4x128xbf16> to vector<4x32xbf16>
    %6 = tpu.concatenate %4, %5 in 0 : vector<4x32xbf16>, vector<4x32xbf16> -> vector<8x32xbf16>
    %7 = tpu.concatenate %6, %6, %6, %6 in 1 : vector<8x32xbf16>, vector<8x32xbf16>, vector<8x32xbf16>, vector<8x32xbf16> -> vector<8x128xbf16>
    %8 = vector.extract_strided_slice %1 {offsets = [0, 0, 0], sizes = [1, 4, 128], strides = [1, 1, 1]} : vector<4x4x128xbf16> to vector<1x4x128xbf16>
    %9 = vector.shape_cast %8 : vector<1x4x128xbf16> to vector<4x128xbf16>
    %10 = vector.extract_strided_slice %9 {offsets = [0, 64], sizes = [4, 32], strides = [1, 1]} : vector<4x128xbf16> to vector<4x32xbf16>
    %11 = vector.extract_strided_slice %9 {offsets = [0, 96], sizes = [4, 32], strides = [1, 1]} : vector<4x128xbf16> to vector<4x32xbf16>
    %12 = tpu.concatenate %10, %11 in 0 : vector<4x32xbf16>, vector<4x32xbf16> -> vector<8x32xbf16>
    %13 = tpu.concatenate %12, %12, %12, %12 in 1 : vector<8x32xbf16>, vector<8x32xbf16>, vector<8x32xbf16>, vector<8x32xbf16> -> vector<8x128xbf16>
    %14 = vector.extract_strided_slice %1 {offsets = [1, 0, 0], sizes = [1, 4, 128], strides = [1, 1, 1]} : vector<4x4x128xbf16> to vector<1x4x128xbf16>
    %15 = vector.shape_cast %14 : vector<1x4x128xbf16> to vector<4x128xbf16>
    %16 = vector.extract_strided_slice %15 {offsets = [0, 0], sizes = [4, 32], strides = [1, 1]} : vector<4x128xbf16> to vector<4x32xbf16>
    %17 = vector.extract_strided_slice %15 {offsets = [0, 32], sizes = [4, 32], strides = [1, 1]} : vector<4x128xbf16> to vector<4x32xbf16>
    %18 = tpu.concatenate %16, %17 in 0 : vector<4x32xbf16>, vector<4x32xbf16> -> vector<8x32xbf16>
    %19 = tpu.concatenate %18, %18, %18, %18 in 1 : vector<8x32xbf16>, vector<8x32xbf16>, vector<8x32xbf16>, vector<8x32xbf16> -> vector<8x128xbf16>
    %20 = vector.extract_strided_slice %1 {offsets = [1, 0, 0], sizes = [1, 4, 128], strides = [1, 1, 1]} : vector<4x4x128xbf16> to vector<1x4x128xbf16>
    %21 = vector.shape_cast %20 : vector<1x4x128xbf16> to vector<4x128xbf16>
    %22 = vector.extract_strided_slice %21 {offsets = [0, 64], sizes = [4, 32], strides = [1, 1]} : vector<4x128xbf16> to vector<4x32xbf16>
    %23 = vector.extract_strided_slice %21 {offsets = [0, 96], sizes = [4, 32], strides = [1, 1]} : vector<4x128xbf16> to vector<4x32xbf16>
    %24 = tpu.concatenate %22, %23 in 0 : vector<4x32xbf16>, vector<4x32xbf16> -> vector<8x32xbf16>
    %25 = tpu.concatenate %24, %24, %24, %24 in 1 : vector<8x32xbf16>, vector<8x32xbf16>, vector<8x32xbf16>, vector<8x32xbf16> -> vector<8x128xbf16>
    %26 = vector.extract_strided_slice %1 {offsets = [2, 0, 0], sizes = [1, 4, 128], strides = [1, 1, 1]} : vector<4x4x128xbf16> to vector<1x4x128xbf16>
    %27 = vector.shape_cast %26 : vector<1x4x128xbf16> to vector<4x128xbf16>
    %28 = vector.extract_strided_slice %27 {offsets = [0, 0], sizes = [4, 32], strides = [1, 1]} : vector<4x128xbf16> to vector<4x32xbf16>
    %29 = vector.extract_strided_slice %27 {offsets = [0, 32], sizes = [4, 32], strides = [1, 1]} : vector<4x128xbf16> to vector<4x32xbf16>
    %30 = tpu.concatenate %28, %29 in 0 : vector<4x32xbf16>, vector<4x32xbf16> -> vector<8x32xbf16>
    %31 = tpu.concatenate %30, %30, %30, %30 in 1 : vector<8x32xbf16>, vector<8x32xbf16>, vector<8x32xbf16>, vector<8x32xbf16> -> vector<8x128xbf16>
    %32 = vector.extract_strided_slice %1 {offsets = [2, 0, 0], sizes = [1, 4, 128], strides = [1, 1, 1]} : vector<4x4x128xbf16> to vector<1x4x128xbf16>
    %33 = vector.shape_cast %32 : vector<1x4x128xbf16> to vector<4x128xbf16>
    %34 = vector.extract_strided_slice %33 {offsets = [0, 64], sizes = [4, 32], strides = [1, 1]} : vector<4x128xbf16> to vector<4x32xbf16>
    %35 = vector.extract_strided_slice %33 {offsets = [0, 96], sizes = [4, 32], strides = [1, 1]} : vector<4x128xbf16> to vector<4x32xbf16>
    %36 = tpu.concatenate %34, %35 in 0 : vector<4x32xbf16>, vector<4x32xbf16> -> vector<8x32xbf16>
    %37 = tpu.concatenate %36, %36, %36, %36 in 1 : vector<8x32xbf16>, vector<8x32xbf16>, vector<8x32xbf16>, vector<8x32xbf16> -> vector<8x128xbf16>
    %38 = vector.extract_strided_slice %1 {offsets = [3, 0, 0], sizes = [1, 4, 128], strides = [1, 1, 1]} : vector<4x4x128xbf16> to vector<1x4x128xbf16>
    %39 = vector.shape_cast %38 : vector<1x4x128xbf16> to vector<4x128xbf16>
    %40 = vector.extract_strided_slice %39 {offsets = [0, 0], sizes = [4, 32], strides = [1, 1]} : vector<4x128xbf16> to vector<4x32xbf16>
    %41 = vector.extract_strided_slice %39 {offsets = [0, 32], sizes = [4, 32], strides = [1, 1]} : vector<4x128xbf16> to vector<4x32xbf16>
    %42 = tpu.concatenate %40, %41 in 0 : vector<4x32xbf16>, vector<4x32xbf16> -> vector<8x32xbf16>
    %43 = tpu.concatenate %42, %42, %42, %42 in 1 : vector<8x32xbf16>, vector<8x32xbf16>, vector<8x32xbf16>, vector<8x32xbf16> -> vector<8x128xbf16>
    %44 = vector.extract_strided_slice %1 {offsets = [3, 0, 0], sizes = [1, 4, 128], strides = [1, 1, 1]} : vector<4x4x128xbf16> to vector<1x4x128xbf16>
    %45 = vector.shape_cast %44 : vector<1x4x128xbf16> to vector<4x128xbf16>
    %46 = vector.extract_strided_slice %45 {offsets = [0, 64], sizes = [4, 32], strides = [1, 1]} : vector<4x128xbf16> to vector<4x32xbf16>
    %47 = vector.extract_strided_slice %45 {offsets = [0, 96], sizes = [4, 32], strides = [1, 1]} : vector<4x128xbf16> to vector<4x32xbf16>
    %48 = tpu.concatenate %46, %47 in 0 : vector<4x32xbf16>, vector<4x32xbf16> -> vector<8x32xbf16>
    %49 = tpu.concatenate %48, %48, %48, %48 in 1 : vector<8x32xbf16>, vector<8x32xbf16>, vector<8x32xbf16>, vector<8x32xbf16> -> vector<8x128xbf16>
    %50 = tpu.concatenate %7, %13, %19, %25, %31, %37, %43, %49 in 0 : vector<8x128xbf16>, vector<8x128xbf16>, vector<8x128xbf16>, vector<8x128xbf16>, vector<8x128xbf16>, vector<8x128xbf16>, vector<8x128xbf16>, vector<8x128xbf16> -> vector<64x128xbf16>
    %c0_3 = arith.constant 0 : index
    %c0_4 = arith.constant 0 : index
    %c0_5 = arith.constant 0 : index
    %c0_6 = arith.constant 0 : index
    %51 = vector.load %arg3[%c0_3, %c0_4, %c0_5, %c0_6] : memref<1x8x8x128xbf16, #tpu.memory_space<vmem>>, vector<1x8x8x128xbf16>
    %52 = vector.shape_cast %51 : vector<1x8x8x128xbf16> to vector<8x8x128xbf16>
    %53 = vector.shape_cast %52 : vector<8x8x128xbf16> to vector<64x128xbf16>
    %c0_7 = arith.constant 0 : index
    %c0_8 = arith.constant 0 : index
    %54 = vector.load %arg4[%c0_7, %c0_8] : memref<128x128xbf16, #tpu.memory_space<vmem>>, vector<128x128xbf16>
    %cst = arith.constant dense<0.000000e+00> : vector<64x128xf32>
    %55 = tpu.matmul %50, %54, %cst {dimension_numbers = #tpu.dot_dimension_numbers<[1], [0], [0], [1], [0, 0, 1, 1], [], []>} : vector<64x128xbf16>, vector<128x128xbf16>, vector<64x128xf32> -> vector<64x128xf32>
    %c0_9 = arith.constant 0 : index
    %c0_10 = arith.constant 0 : index
    %56 = vector.load %arg5[%c0_9, %c0_10] : memref<128x128xbf16, #tpu.memory_space<vmem>>, vector<128x128xbf16>
    %cst_11 = arith.constant dense<0.000000e+00> : vector<64x128xf32>
    %57 = tpu.matmul %53, %56, %cst_11 {dimension_numbers = #tpu.dot_dimension_numbers<[1], [0], [0], [1], [0, 0, 1, 1], [], []>} : vector<64x128xbf16>, vector<128x128xbf16>, vector<64x128xf32> -> vector<64x128xf32>
    %58 = arith.addf %55, %57 : vector<64x128xf32>
    %c0_12 = arith.constant 0 : index
    %c0_13 = arith.constant 0 : index
    %59 = vector.load %arg6[%c0_12, %c0_13] : memref<1x128xf32, #tpu.memory_space<vmem>>, vector<1x128xf32>
    %60 = vector.broadcast %59 : vector<1x128xf32> to vector<64x128xf32>
    %61 = arith.addf %58, %60 : vector<64x128xf32>
    %62 = arith.mulf %61, %61 : vector<64x128xf32>
    %63 = arith.mulf %61, %62 : vector<64x128xf32>
    %cst_14 = arith.constant 4.471500e-02 : f32
    %64 = vector.broadcast %cst_14 : f32 to vector<64x128xf32>
    %65 = arith.mulf %64, %63 : vector<64x128xf32>
    %66 = arith.addf %61, %65 : vector<64x128xf32>
    %cst_15 = arith.constant 0.797884583 : f32
    %67 = vector.broadcast %cst_15 : f32 to vector<64x128xf32>
    %68 = arith.mulf %67, %66 : vector<64x128xf32>
    %69 = math.tanh %68 : vector<64x128xf32>
    %cst_16 = arith.constant 1.000000e+00 : f32
    %70 = vector.broadcast %cst_16 : f32 to vector<64x128xf32>
    %71 = arith.addf %70, %69 : vector<64x128xf32>
    %cst_17 = arith.constant 5.000000e-01 : f32
    %72 = vector.broadcast %cst_17 : f32 to vector<64x128xf32>
    %73 = arith.mulf %72, %71 : vector<64x128xf32>
    %74 = arith.mulf %61, %73 : vector<64x128xf32>
    %75 = arith.truncf %74 : vector<64x128xf32> to vector<64x128xbf16>
    %c0_18 = arith.constant 0 : index
    %c0_19 = arith.constant 0 : index
    %76 = vector.load %arg7[%c0_18, %c0_19] : memref<128x128xbf16, #tpu.memory_space<vmem>>, vector<128x128xbf16>
    %cst_20 = arith.constant dense<0.000000e+00> : vector<64x128xf32>
    %77 = tpu.matmul %75, %76, %cst_20 {dimension_numbers = #tpu.dot_dimension_numbers<[1], [0], [0], [1], [0, 0, 1, 1], [], []>} : vector<64x128xbf16>, vector<128x128xbf16>, vector<64x128xf32> -> vector<64x128xf32>
    %c0_21 = arith.constant 0 : index
    %c0_22 = arith.constant 0 : index
    %78 = vector.load %arg8[%c0_21, %c0_22] : memref<1x128xf32, #tpu.memory_space<vmem>>, vector<1x128xf32>
    %79 = vector.broadcast %78 : vector<1x128xf32> to vector<64x128xf32>
    %80 = arith.addf %77, %79 : vector<64x128xf32>
    %81 = vector.shape_cast %80 : vector<64x128xf32> to vector<8x8x128xf32>
    %82 = arith.truncf %81 : vector<8x8x128xf32> to vector<8x8x128xbf16>
    %c0_23 = arith.constant 0 : index
    %c0_24 = arith.constant 0 : index
    %c0_25 = arith.constant 0 : index
    %c0_26 = arith.constant 0 : index
    %83 = vector.load %arg9[%c0_23, %c0_24, %c0_25, %c0_26] : memref<1x8x8x128xbf16, #tpu.memory_space<vmem>>, vector<1x8x8x128xbf16>
    %84 = vector.shape_cast %83 : vector<1x8x8x128xbf16> to vector<8x8x128xbf16>
    %85 = vector.shape_cast %82 : vector<8x8x128xbf16> to vector<1x8x8x128xbf16>
    tpu.vector_store %arg9[%c0_23, %c0_24, %c0_25, %c0_26], %85 {strides = array<i32>} : memref<1x8x8x128xbf16, #tpu.memory_space<vmem>>, vector<1x8x8x128xbf16>,
    return
  }
  func.func @transform_0(%arg0: i32, %arg1: i32) -> (i32, i32, i32, i32) {
    %c0_i32 = arith.constant 0 : i32
    %c0_i32_0 = arith.constant 0 : i32
    %c0_i32_1 = arith.constant 0 : i32
    return %arg0, %arg1, %c0_i32, %c0_i32_0 : i32, i32, i32, i32
  }
  func.func @transform_1(%arg0: i32, %arg1: i32) -> (i32, i32, i32, i32) {
    %c0_i32 = arith.constant 0 : i32
    %c0_i32_0 = arith.constant 0 : i32
    %c0_i32_1 = arith.constant 0 : i32
    return %arg0, %arg1, %c0_i32, %c0_i32_0 : i32, i32, i32, i32
  }
  func.func @transform_2(%arg0: i32, %arg1: i32) -> (i32, i32) {
    %c0_i32 = arith.constant 0 : i32
    %c0_i32_0 = arith.constant 0 : i32
    %c0_i32_1 = arith.constant 0 : i32
    return %c0_i32, %c0_i32_0 : i32, i32
  }
  func.func @transform_3(%arg0: i32, %arg1: i32) -> (i32, i32) {
    %c0_i32 = arith.constant 0 : i32
    %c0_i32_0 = arith.constant 0 : i32
    %c0_i32_1 = arith.constant 0 : i32
    return %c0_i32, %c0_i32_0 : i32, i32
  }
  func.func @transform_4(%arg0: i32, %arg1: i32) -> (i32, i32) {
    %c0_i32 = arith.constant 0 : i32
    %c0_i32_0 = arith.constant 0 : i32
    %c0_i32_1 = arith.constant 0 : i32
    return %c0_i32, %c0_i32_0 : i32, i32
  }
  func.func @transform_5(%arg0: i32, %arg1: i32) -> (i32, i32) {
    %c0_i32 = arith.constant 0 : i32
    %c0_i32_0 = arith.constant 0 : i32
    %c0_i32_1 = arith.constant 0 : i32
    return %c0_i32, %c0_i32_0 : i32, i32
  }
  func.func @transform_6(%arg0: i32, %arg1: i32) -> (i32, i32) {
    %c0_i32 = arith.constant 0 : i32
    %c0_i32_0 = arith.constant 0 : i32
    %c0_i32_1 = arith.constant 0 : i32
    return %c0_i32, %c0_i32_0 : i32, i32
  }
  func.func @transform_7(%arg0: i32, %arg1: i32) -> (i32, i32, i32, i32) {
    %c0_i32 = arith.constant 0 : i32
    %c0_i32_0 = arith.constant 0 : i32
    %c0_i32_1 = arith.constant 0 : i32
    return %arg0, %arg1, %c0_i32, %c0_i32_0 : i32, i32, i32, i32
  }
}

</mosaic_0001>

<llo_original>
// kernel: _lambda_.3
$region0: #{_lambda_.3}
  #allocation0 [shape = 'u32[]', space=smem, size = 0x4, offset = 0x4, fixed_abs, tag = 'smem constant byte address 0x4 - core index']
  #allocation1 [shape = 'u32[144,128]{1,0:T(1,128)}', space=vmem, size = 0x12000, scoped, tag = 'internal scratch']
  %s0 = inlined_call_operand.vmem [shape: bf16[2,8,8,16], index: 0, kind: input, shape index: {}]
  %s1 = inlined_call_operand.vmem [shape: bf16[16,128], index: 1, kind: input, shape index: {}]
  %s2 = inlined_call_operand.vmem [shape: f32[1,128], index: 2, kind: input, shape index: {}]
  %s3 = inlined_call_operand.vmem [shape: bf16[128,128], index: 3, kind: input, shape index: {}]
  %s4 = inlined_call_operand.vmem [shape: f32[1,128], index: 4, kind: input, shape index: {}]
  %s5 = inlined_call_operand.vmem [shape: bf16[2,8,8,128], index: 5, kind: output, shape index: {0}]
  %s6 = inlined_call_operand.vmem [shape: bf16[2,4,4,128], index: 6, kind: output, shape index: {1}]
  %7 = xla_tuple %s5, %s6
  %s8 = sld [smem:[#allocation0]]
  $region61: #{_lambda_.3} parent=0
    _
  %s10 = ssub.s32 1, %s8
  %s11 = scalar_select 0, %s10, %s8
  loop: start=0, step=1, limit=4
  $region2: #{_lambda_.3} parent=0 // loop_pre_header
    _
  $region3: #{_lambda_.3} parent=0 // loop_header
    %s13 = sphi 0, %s17
    %p14 = scmp.ge.s32.totalorder %s13, 4
    %s20 = sphi 0, %s32
    %s21 = sphi 0, %s28
    %s22 = sphi 0, %s20
    %s23 = sphi 0, %s21
    %s24 = sphi 0, %s22
    %s25 = sphi 0, %s23
    %s37 = sphi 0, %s39
    %s40 = sphi 0, %s37
    %s41 = sphi 0, %s40
    %s57 = sphi 0, %s41
    %s61 = sphi 0, %s61
    %s63 = sphi 0, %s61
    %s64 = sphi 0, %s63
    %s78 = sphi 0, %s64
    %s82 = sphi 0, %s82
    %s84 = sphi 0, %s82
    %s85 = sphi 0, %s84
    %s99 = sphi 0, %s85
    %s103 = sphi 0, %s103
    %s105 = sphi 0, %s103
    %s106 = sphi 0, %s105
    %s120 = sphi 0, %s106
    %s124 = sphi 0, %s124
    %s126 = sphi 0, %s124
    %s127 = sphi 0, %s126
    %s141 = sphi 0, %s127
    %s149 = sphi 0, %s151
    %s152 = sphi 0, %s149
    %s153 = sphi 0, %s152
    %s169 = sphi 0, %s153
    %s177 = sphi 0, %s179
    %s180 = sphi 0, %s177
    %s181 = sphi 0, %s180
    %s197 = sphi 0, %s181
  $region4: #{_lambda_.3} parent=0 // loop_header_branch
    %16 = sbr.rel (%p14) target = $region8
  $region5: #{_lambda_.3} parent=0 // loop_body
    %s18 = ssub.s32 %s13, 1
    %s19 = ssub.s32 %s13, 2
    %s26 = sadd.s32 1, %s21
    %p27 = scmp.ge.s32.totalorder %s26, 1
    %s28 = scalar_select %p27, 0, %s26
    %s29 = sadd.s32 1, %s20
    %s30 = scalar_select %p27, %s29, %s20
    %p31 = scmp.ge.s32.totalorder %s30, 2
    %s32 = scalar_select %p31, 0, %s30
    %s33 = ssub.s32 %s20, %s32
    %s34 = ssub.s32 %s21, %s28
    %s35 = sor.u32 %s33, %s34
    %p36 = scmp.eq.s32.totalorder %s35, 0
    %s38 = sadd.s32 %s37, 1
    %s39 = scalar_select %p36, %s37, %s38
    %p42 = pneg %p36
    %p43 = scmp.eq.s32.totalorder %s13, 1
    %p44 = por %p42, %p43
    %p45 = scmp.ne.s32.totalorder %s37, %s40
    %p46 = scmp.eq.s32.totalorder %s13, 0
    %p47 = por %p45, %p46
    %p48 = scmp.ne.s32.totalorder %s37, %s40
    %p49 = scmp.eq.s32.totalorder %s18, 1
    %p50 = por %p48, %p49
    %p51 = scmp.ne.s32.totalorder %s40, %s41
    %p52 = scmp.eq.s32.totalorder %s18, 0
    %p53 = por %p51, %p52
    %p54 = scmp.ne.s32.totalorder %s40, %s41
    %p55 = scmp.eq.s32.totalorder %s19, 1
    %p56 = por %p54, %p55
    %p58 = scmp.ne.s32.totalorder %s41, %s57
    %p59 = scmp.eq.s32.totalorder %s19, 0
    %p60 = por %p58, %p59
    %s62 = sadd.s32 %s61, 1
    %p65 = scmp.eq.s32.totalorder %s13, 1
    %p66 = scmp.ne.s32.totalorder %s61, %s63
    %p67 = scmp.eq.s32.totalorder %s13, 0
    %p68 = por %p66, %p67
    %p69 = scmp.ne.s32.totalorder %s61, %s63
    %p70 = scmp.eq.s32.totalorder %s18, 1
    %p71 = por %p69, %p70
    %p72 = scmp.ne.s32.totalorder %s63, %s64
    %p73 = scmp.eq.s32.totalorder %s18, 0
    %p74 = por %p72, %p73
    %p75 = scmp.ne.s32.totalorder %s63, %s64
    %p76 = scmp.eq.s32.totalorder %s19, 1
    %p77 = por %p75, %p76
    %p79 = scmp.ne.s32.totalorder %s64, %s78
    %p80 = scmp.eq.s32.totalorder %s19, 0
    %p81 = por %p79, %p80
    %s83 = sadd.s32 %s82, 1
    %p86 = scmp.eq.s32.totalorder %s13, 1
    %p87 = scmp.ne.s32.totalorder %s82, %s84
    %p88 = scmp.eq.s32.totalorder %s13, 0
    %p89 = por %p87, %p88
    %p90 = scmp.ne.s32.totalorder %s82, %s84
    %p91 = scmp.eq.s32.totalorder %s18, 1
    %p92 = por %p90, %p91
    %p93 = scmp.ne.s32.totalorder %s84, %s85
    %p94 = scmp.eq.s32.totalorder %s18, 0
    %p95 = por %p93, %p94
    %p96 = scmp.ne.s32.totalorder %s84, %s85
    %p97 = scmp.eq.s32.totalorder %s19, 1
    %p98 = por %p96, %p97
    %p100 = scmp.ne.s32.totalorder %s85, %s99
    %p101 = scmp.eq.s32.totalorder %s19, 0
    %p102 = por %p100, %p101
    %s104 = sadd.s32 %s103, 1
    %p107 = scmp.eq.s32.totalorder %s13, 1
    %p108 = scmp.ne.s32.totalorder %s103, %s105
    %p109 = scmp.eq.s32.totalorder %s13, 0
    %p110 = por %p108, %p109
    %p111 = scmp.ne.s32.totalorder %s103, %s105
    %p112 = scmp.eq.s32.totalorder %s18, 1
    %p113 = por %p111, %p112
    %p114 = scmp.ne.s32.totalorder %s105, %s106
    %p115 = scmp.eq.s32.totalorder %s18, 0
    %p116 = por %p114, %p115
    %p117 = scmp.ne.s32.totalorder %s105, %s106
    %p118 = scmp.eq.s32.totalorder %s19, 1
    %p119 = por %p117, %p118
    %p121 = scmp.ne.s32.totalorder %s106, %s120
    %p122 = scmp.eq.s32.totalorder %s19, 0
    %p123 = por %p121, %p122
    %s125 = sadd.s32 %s124, 1
    %p128 = scmp.eq.s32.totalorder %s13, 1
    %p129 = scmp.ne.s32.totalorder %s124, %s126
    %p130 = scmp.eq.s32.totalorder %s13, 0
    %p131 = por %p129, %p130
    %p132 = scmp.ne.s32.totalorder %s124, %s126
    %p133 = scmp.eq.s32.totalorder %s18, 1
    %p134 = por %p132, %p133
    %p135 = scmp.ne.s32.totalorder %s126, %s127
    %p136 = scmp.eq.s32.totalorder %s18, 0
    %p137 = por %p135, %p136
    %p138 = scmp.ne.s32.totalorder %s126, %s127
    %p139 = scmp.eq.s32.totalorder %s19, 1
    %p140 = por %p138, %p139
    %p142 = scmp.ne.s32.totalorder %s127, %s141
    %p143 = scmp.eq.s32.totalorder %s19, 0
    %p144 = por %p142, %p143
    %s145 = ssub.s32 %s20, %s32
    %s146 = ssub.s32 %s21, %s28
    %s147 = sor.u32 %s145, %s146
    %p148 = scmp.eq.s32.totalorder %s147, 0
    %s150 = sadd.s32 %s149, 1
    %s151 = scalar_select %p148, %s149, %s150
    %p154 = pneg %p148
    %p155 = scmp.eq.s32.totalorder %s13, 1
    %p156 = por %p154, %p155
    %p157 = scmp.ne.s32.totalorder %s149, %s152
    %p158 = scmp.eq.s32.totalorder %s13, 0
    %p159 = por %p157, %p158
    %p160 = scmp.ne.s32.totalorder %s149, %s152
    %p161 = scmp.eq.s32.totalorder %s18, 1
    %p162 = por %p160, %p161
    %p163 = scmp.ne.s32.totalorder %s152, %s153
    %p164 = scmp.eq.s32.totalorder %s18, 0
    %p165 = por %p163, %p164
    %p166 = scmp.ne.s32.totalorder %s152, %s153
    %p167 = scmp.eq.s32.totalorder %s19, 1
    %p168 = por %p166, %p167
    %p170 = scmp.ne.s32.totalorder %s153, %s169
    %p171 = scmp.eq.s32.totalorder %s19, 0
    %p172 = por %p170, %p171
    %s173 = ssub.s32 %s20, %s32
    %s174 = ssub.s32 %s21, %s28
    %s175 = sor.u32 %s173, %s174
    %p176 = scmp.eq.s32.totalorder %s175, 0
    %s178 = sadd.s32 %s177, 1
    %s179 = scalar_select %p176, %s177, %s178
    %p182 = pneg %p176
    %p183 = scmp.eq.s32.totalorder %s13, 1
    %p184 = por %p182, %p183
    %p185 = scmp.ne.s32.totalorder %s177, %s180
    %p186 = scmp.eq.s32.totalorder %s13, 0
    %p187 = por %p185, %p186
    %p188 = scmp.ne.s32.totalorder %s177, %s180
    %p189 = scmp.eq.s32.totalorder %s18, 1
    %p190 = por %p188, %p189
    %p191 = scmp.ne.s32.totalorder %s180, %s181
    %p192 = scmp.eq.s32.totalorder %s18, 0
    %p193 = por %p191, %p192
    %p194 = scmp.ne.s32.totalorder %s180, %s181
    %p195 = scmp.eq.s32.totalorder %s19, 1
    %p196 = por %p194, %p195
    %p198 = scmp.ne.s32.totalorder %s181, %s197
    %p199 = scmp.eq.s32.totalorder %s19, 0
    %p200 = por %p198, %p199
    %p201 = scmp.le.s32.totalorder 1, %s13
    %p202 = scmp.lt.s32.totalorder %s13, 3
    %p203 = pnand %p201, %p202
    %p204 = pneg %p203
    // Predicated region
    $region9: #{_lambda_.3} parent=5 // pred_check
      _
    $region10: #{_lambda_.3} parent=5 // pred_check_branch
      %206 = sbr.rel (%p203) target = $region12
    $region11: #{_lambda_.3} parent=5 // pred_region
      %s207 = ssub.s32 %s13, 1
      // Predicated region
      $region13: #{_lambda_.3} parent=11 // pred_check
        %p208 = pneg %p74
      $region14: #{_lambda_.3} parent=11 // pred_check_branch
        %210 = sbr.rel (%p208) target = $region16
      $region15: #{_lambda_.3} parent=11 // pred_region
        _
      $region16: #{_lambda_.3} parent=11 // pred_fallthru
        _
      // Predicated region
      $region17: #{_lambda_.3} parent=11 // pred_check
        %p211 = pneg %p95
      $region18: #{_lambda_.3} parent=11 // pred_check_branch
        %213 = sbr.rel (%p211) target = $region20
      $region19: #{_lambda_.3} parent=11 // pred_region
        _
      $region20: #{_lambda_.3} parent=11 // pred_fallthru
        _
      // Predicated region
      $region21: #{_lambda_.3} parent=11 // pred_check
        %p214 = pneg %p116
      $region22: #{_lambda_.3} parent=11 // pred_check_branch
        %216 = sbr.rel (%p214) target = $region24
      $region23: #{_lambda_.3} parent=11 // pred_region
        _
      $region24: #{_lambda_.3} parent=11 // pred_fallthru
        _
      // Predicated region
      $region25: #{_lambda_.3} parent=11 // pred_check
        %p217 = pneg %p137
      $region26: #{_lambda_.3} parent=11 // pred_check_branch
        %219 = sbr.rel (%p217) target = $region28
      $region27: #{_lambda_.3} parent=11 // pred_region
        _
      $region28: #{_lambda_.3} parent=11 // pred_fallthru
        _
    $region12: #{_lambda_.3} parent=5 // pred_fallthru
      _
    %p220 = scmp.lt.s32.totalorder %s13, 2
    // Predicated region
    $region29: #{_lambda_.3} parent=5 // pred_check
      %p221 = pneg %p220
    $region30: #{_lambda_.3} parent=5 // pred_check_branch
      %223 = sbr.rel (%p221) target = $region32
    $region31: #{_lambda_.3} parent=5 // pred_region
      // Predicated region
      $region33: #{_lambda_.3} parent=31 // pred_check
        %p224 = pneg %p47
      $region34: #{_lambda_.3} parent=31 // pred_check_branch
        %226 = sbr.rel (%p224) target = $region36
      $region35: #{_lambda_.3} parent=31 // pred_region
        %s227 = smul.u32 8, %s21
        %p228 = scmp.lt.s32.totalorder %s20, 1
        %s229 = scalar_select %p228, %s20, 1
        %p230 = scmp.lt.s32.totalorder %s227, 7
        %s231 = scalar_select %p230, %s227, 7
        %s232 = smul.addr %s229, 8
        %s233 = sadd.s32 %s231, %s232
        %s234 = smul.addr %s233, 4
        %s235 = scalar_lea.vmem %s0, %s234
        %s236 = smul.u32 8, %s21
      $region36: #{_lambda_.3} parent=31 // pred_fallthru
        _
    $region32: #{_lambda_.3} parent=5 // pred_fallthru
      _
    %p237 = scmp.le.s32.totalorder 1, %s13
    %p238 = scmp.lt.s32.totalorder %s13, 3
    %p239 = pnand %p237, %p238
    %p240 = pneg %p239
    // Predicated region
    $region37: #{_lambda_.3} parent=5 // pred_check
      _
    $region38: #{_lambda_.3} parent=5 // pred_check_branch
      %242 = sbr.rel (%p239) target = $region40
    $region39: #{_lambda_.3} parent=5 // pred_region
      %s243 = ssub.s32 %s13, 1
      %s244 = smul.u32 8, %s23
      %p245 = scmp.lt.s32.totalorder %s22, 1
      %s246 = scalar_select %p245, %s22, 1
      %p247 = scmp.lt.s32.totalorder %s244, 7
      %s248 = scalar_select %p247, %s244, 7
      %s249 = smul.addr %s246, 8
      %s250 = sadd.s32 %s248, %s249
      %s251 = smul.addr %s250, 4
      %s252 = scalar_lea.vmem %s0, %s251
      %p253 = pneg %p53
      %p254 = pneg %p50
      %p255 = pneg %p74
      %p256 = pneg %p71
      %p257 = pneg %p95
      %p258 = pneg %p92
      %p259 = pneg %p116
      %p260 = pneg %p113
      %p261 = pneg %p137
      %p262 = pneg %p134
      %p263 = pneg %p165
      %p264 = pneg %p162
      %s265 = smul.u32 8, %s23
      %p266 = scmp.lt.s32.totalorder %s22, 1
      %s267 = scalar_select %p266, %s22, 1
      %p268 = scmp.lt.s32.totalorder %s265, 7
      %s269 = scalar_select %p268, %s265, 7
      %s270 = smul.addr %s267, 8
      %s271 = sadd.s32 %s269, %s270
      %s272 = smul.addr %s271, 4
      %s273 = scalar_lea.vmem %s5, %s272
      %p274 = pneg %p193
      %p275 = pneg %p190
      %s276 = smul.u32 4, %s23
      %p277 = scmp.lt.s32.totalorder %s22, 1
      %s278 = scalar_select %p277, %s22, 1
      %p279 = scmp.lt.s32.totalorder %s276, 3
      %s280 = scalar_select %p279, %s276, 3
      %s281 = smul.addr %s278, 4
      %s282 = sadd.s32 %s280, %s281
      %s283 = smul.addr %s282, 2
      %s284 = scalar_lea.vmem %s6, %s283
      %s285 = smul.u32 8, %s23
      %p286 = scmp.lt.s32.totalorder %s22, 1
      %s287 = scalar_select %p286, %s22, 1
      %p288 = scmp.lt.s32.totalorder %s285, 7
      %s289 = scalar_select %p288, %s285, 7
      %s290 = smul.addr %s287, 8
      %s291 = sadd.s32 %s289, %s290
      %s292 = smul.addr %s291, 4
      %s293 = scalar_lea.vmem %s0, %s292
      %s294 = smul.u32 8, %s23
      %s295 = smul.u32 8, %s23
      %p296 = scmp.lt.s32.totalorder %s22, 1
      %s297 = scalar_select %p296, %s22, 1
      %p298 = scmp.lt.s32.totalorder %s295, 7
      %s299 = scalar_select %p298, %s295, 7
      %s300 = smul.addr %s297, 8
      %s301 = sadd.s32 %s299, %s300
      %s302 = smul.addr %s301, 4
      %s303 = scalar_lea.vmem %s5, %s302
      %s304 = smul.u32 8, %s23
      %s305 = smul.u32 4, %s23
      %p306 = scmp.lt.s32.totalorder %s22, 1
      %s307 = scalar_select %p306, %s22, 1
      %p308 = scmp.lt.s32.totalorder %s305, 3
      %s309 = scalar_select %p308, %s305, 3
      %s310 = smul.addr %s307, 4
      %s311 = sadd.s32 %s309, %s310
      %s312 = smul.addr %s311, 2
      %s313 = scalar_lea.vmem %s6, %s312
      %s314 = smul.u32 4, %s23
      %v316 = vld [vmem:[%s293] sm:$0xf]
      %v317 = vld [vmem:[%s293 + $0x4] sm:$0xf]
      %v318 = vld [vmem:[%s293 + $0x8] sm:$0xf]
      %v319 = vld [vmem:[%s293 + $0xc] sm:$0xf]
      %v320 = vld [vmem:[%s293 + $0x10] sm:$0xf]
      %v321 = vld [vmem:[%s293 + $0x14] sm:$0xf]
      %v322 = vld [vmem:[%s293 + $0x18] sm:$0xf]
      %v323 = vld [vmem:[%s293 + $0x1c] sm:$0xf]
      %v324 = vld [vmem:[%s1] sm:$0xf]
      %v325 = vld [vmem:[%s1 + $0x4] sm:$0xf]
      %v326 = vld [vmem:[%s2] sm:$0x1]
      %v328 = vlaneseq
      %v329 = vshrl.u32 %v328, 7
      %v330 = vsub.s32 0, %v329
      %v331 = vrot.slane %v326, %v330
      %v341 = vunpack.c.l.b16 %v316
      %v342 = vunpack.c.l.b16 %v317
      %v343 = vunpack.c.l.b16 %v318
      %v344 = vunpack.c.l.b16 %v319
      %v345 = vunpack.c.l.b16 %v320
      %v346 = vunpack.c.l.b16 %v321
      %v347 = vunpack.c.l.b16 %v322
      %v348 = vunpack.c.l.b16 %v323
      %v349 = vpack.c.b16 %v342, %v341
      %v350 = vpack.c.b16 %v344, %v343
      %v351 = vpack.c.b16 %v346, %v345
      %v352 = vpack.c.b16 %v348, %v347
      %v355 = vunpack.c.l.b16 %v324
      %v356 = vunpack.c.l.b16 %v325
      %v357 = vpack.c.b16 %v356, %v355
      %vm359 = vcmask 130048
      %v361 = vsel %vm359, %v349, 0
      %v364 = vsel %vm359, %v350, 0
      %v367 = vsel %vm359, %v351, 0
      %v370 = vsel %vm359, %v352, 0
      %372 = vmatprep.subr.bf16.mxu0 0
      %373 = vmatpush1.bf16.msra.mxu0 %v357
      %374 = vmatprep.subr.bf16.mxu0 0
      %375 = vmatpush1.bf16.msra.mxu0 0
      %376 = vmatprep.subr.bf16.mxu0 0
      %377 = vmatpush1.bf16.msra.mxu0 0
      %378 = vmatprep.subr.bf16.mxu0 0
      %379 = vmatpush1.bf16.msra.mxu0 0
      %380 = vmatprep.subr.bf16.mxu0 0
      %381 = vmatpush1.bf16.msra.mxu0 0
      %382 = vmatprep.subr.bf16.mxu0 0
      %383 = vmatpush1.bf16.msra.mxu0 0
      %384 = vmatprep.subr.bf16.mxu0 0
      %385 = vmatpush1.bf16.msra.mxu0 0
      %386 = vmatprep.subr.bf16.mxu0 0
      %387 = vmatpush1.bf16.msra.mxu0 0
      %388 = vmatprep.subr.bf16.mxu0 0
      %389 = vmatpush1.bf16.msra.mxu0 0
      %390 = vmatprep.subr.bf16.mxu0 0
      %391 = vmatpush1.bf16.msra.mxu0 0
      %392 = vmatprep.subr.bf16.mxu0 0
      %393 = vmatpush1.bf16.msra.mxu0 0
      %394 = vmatprep.subr.bf16.mxu0 0
      %395 = vmatpush1.bf16.msra.mxu0 0
      %396 = vmatprep.subr.bf16.mxu0 0
      %397 = vmatpush1.bf16.msra.mxu0 0
      %398 = vmatprep.subr.bf16.mxu0 0
      %399 = vmatpush1.bf16.msra.mxu0 0
      %400 = vmatprep.subr.bf16.mxu0 0
      %401 = vmatpush1.bf16.msra.mxu0 0
      %402 = vmatprep.subr.bf16.mxu0 0
      %403 = vmatpush1.bf16.msra.mxu0 0
      %404 = vmatprep.mubr.bf16.mxu0 0
      %405 = vmatmul.mubr.bf16.gmra.mrb[0].mxu0 %v361
      %v406 = vpop.f32.mrb[0].mxu0
      %v407 = vadd.f32 %v331, %v406
      %v408 = vpop.f32.mrb[0].mxu0
      %v409 = vpop.f32.mrb[0].mxu0
      %v410 = vadd.f32 %v331, %v409
      %v411 = vpop.f32.mrb[0].mxu0
      %412 = vmatprep.mubr.bf16.mxu0 0
      %413 = vmatmul.mubr.bf16.gmra.mrb[0].mxu0 %v364
      %v414 = vpop.f32.mrb[0].mxu0
      %v415 = vadd.f32 %v331, %v414
      %v416 = vpop.f32.mrb[0].mxu0
      %v417 = vpop.f32.mrb[0].mxu0
      %v418 = vadd.f32 %v331, %v417
      %v419 = vpop.f32.mrb[0].mxu0
      %420 = vmatprep.mubr.bf16.mxu0 0
      %421 = vmatmul.mubr.bf16.gmra.mrb[0].mxu0 %v367
      %v422 = vpop.f32.mrb[0].mxu0
      %v423 = vadd.f32 %v331, %v422
      %v424 = vpop.f32.mrb[0].mxu0
      %v425 = vpop.f32.mrb[0].mxu0
      %v426 = vadd.f32 %v331, %v425
      %v427 = vpop.f32.mrb[0].mxu0
      %428 = vmatprep.mubr.bf16.mxu0 0
      %429 = vmatmul.mubr.bf16.gmra.mrb[0].mxu0 %v370
      %v430 = vpop.f32.mrb[0].mxu0
      %v431 = vadd.f32 %v331, %v430
      %v432 = vpop.f32.mrb[0].mxu0
      %v433 = vpop.f32.mrb[0].mxu0
      %v434 = vadd.f32 %v331, %v433
      %v435 = vpop.f32.mrb[0].mxu0
      %436 = vdwg.mxu0
      %v437 = vpack.c.bf16 %v407, %v407
      %v438 = vpack.c.bf16 %v410, %v410
      %v439 = vpack.c.bf16 %v415, %v415
      %v440 = vpack.c.bf16 %v418, %v418
      %v441 = vpack.c.bf16 %v423, %v423
      %v442 = vpack.c.bf16 %v426, %v426
      %v443 = vpack.c.bf16 %v431, %v431
      %v444 = vpack.c.bf16 %v434, %v434
      %445 = vst [vmem:[%s303] sm:$0xf] %v437
      %446 = vst [vmem:[%s303 + $0x4] sm:$0xf] %v438
      %447 = vst [vmem:[%s303 + $0x8] sm:$0xf] %v439
      %448 = vst [vmem:[%s303 + $0xc] sm:$0xf] %v440
      %449 = vst [vmem:[%s303 + $0x10] sm:$0xf] %v441
      %450 = vst [vmem:[%s303 + $0x14] sm:$0xf] %v442
      %451 = vst [vmem:[%s303 + $0x18] sm:$0xf] %v443
      %452 = vst [vmem:[%s303 + $0x1c] sm:$0xf] %v444
      %v453 = vpack.c.bf16 %v410, %v407
      %v454 = vpack.c.bf16 %v418, %v415
      %v455 = vpack.c.bf16 %v426, %v423
      %v456 = vpack.c.bf16 %v434, %v431
      %v457 = vld [vmem:[%s3] sm:$0xf]
      %v458 = vld [vmem:[%s3 + $0x4] sm:$0xf]
      %v459 = vld [vmem:[%s3 + $0x8] sm:$0xf]
      %v460 = vld [vmem:[%s3 + $0xc] sm:$0xf]
      %v461 = vld [vmem:[%s3 + $0x10] sm:$0xf]
      %v462 = vld [vmem:[%s3 + $0x14] sm:$0xf]
      %v463 = vld [vmem:[%s3 + $0x18] sm:$0xf]
      %v464 = vld [vmem:[%s3 + $0x1c] sm:$0xf]
      %v465 = vld [vmem:[%s3 + $0x20] sm:$0xf]
      %v466 = vld [vmem:[%s3 + $0x24] sm:$0xf]
      %v467 = vld [vmem:[%s3 + $0x28] sm:$0xf]
      %v468 = vld [vmem:[%s3 + $0x2c] sm:$0xf]
      %v469 = vld [vmem:[%s3 + $0x30] sm:$0xf]
      %v470 = vld [vmem:[%s3 + $0x34] sm:$0xf]
      %v471 = vld [vmem:[%s3 + $0x38] sm:$0xf]
      %v472 = vld [vmem:[%s3 + $0x3c] sm:$0xf]
      %v473 = vld [vmem:[%s4] sm:$0x1]
      %v475 = vlaneseq
      %v476 = vshrl.u32 %v475, 7
      %v477 = vsub.s32 0, %v476
      %v478 = vrot.slane %v473, %v477
      %v496 = vunpack.c.l.b16 %v457
      %v497 = vunpack.c.l.b16 %v458
      %v498 = vunpack.c.l.b16 %v459
      %v499 = vunpack.c.l.b16 %v460
      %v500 = vunpack.c.l.b16 %v461
      %v501 = vunpack.c.l.b16 %v462
      %v502 = vunpack.c.l.b16 %v463
      %v503 = vunpack.c.l.b16 %v464
      %v504 = vunpack.c.l.b16 %v465
      %v505 = vunpack.c.l.b16 %v466
      %v506 = vunpack.c.l.b16 %v467
      %v507 = vunpack.c.l.b16 %v468
      %v508 = vunpack.c.l.b16 %v469
      %v509 = vunpack.c.l.b16 %v470
      %v510 = vunpack.c.l.b16 %v471
      %v511 = vunpack.c.l.b16 %v472
      %v512 = vpack.c.b16 %v497, %v496
      %v513 = vpack.c.b16 %v499, %v498
      %v514 = vpack.c.b16 %v501, %v500
      %v515 = vpack.c.b16 %v503, %v502
      %v516 = vpack.c.b16 %v505, %v504
      %v517 = vpack.c.b16 %v507, %v506
      %v518 = vpack.c.b16 %v509, %v508
      %v519 = vpack.c.b16 %v511, %v510
      %528 = vmatprep.subr.bf16.mxu0 0
      %529 = vmatpush1.bf16.msra.mxu0 %v512
      %530 = vmatprep.subr.bf16.mxu0 0
      %531 = vmatpush1.bf16.msra.mxu0 %v513
      %532 = vmatprep.subr.bf16.mxu0 0
      %533 = vmatpush1.bf16.msra.mxu0 %v514
      %534 = vmatprep.subr.bf16.mxu0 0
      %535 = vmatpush1.bf16.msra.mxu0 %v515
      %536 = vmatprep.subr.bf16.mxu0 0
      %537 = vmatpush1.bf16.msra.mxu0 %v516
      %538 = vmatprep.subr.bf16.mxu0 0
      %539 = vmatpush1.bf16.msra.mxu0 %v517
      %540 = vmatprep.subr.bf16.mxu0 0
      %541 = vmatpush1.bf16.msra.mxu0 %v518
      %542 = vmatprep.subr.bf16.mxu0 0
      %543 = vmatpush1.bf16.msra.mxu0 %v519
      %544 = vmatprep.subr.bf16.mxu0 0
      %545 = vmatpush1.bf16.msra.mxu0 0
      %546 = vmatprep.subr.bf16.mxu0 0
      %547 = vmatpush1.bf16.msra.mxu0 0
      %548 = vmatprep.subr.bf16.mxu0 0
      %549 = vmatpush1.bf16.msra.mxu0 0
      %550 = vmatprep.subr.bf16.mxu0 0
      %551 = vmatpush1.bf16.msra.mxu0 0
      %552 = vmatprep.subr.bf16.mxu0 0
      %553 = vmatpush1.bf16.msra.mxu0 0
      %554 = vmatprep.subr.bf16.mxu0 0
      %555 = vmatpush1.bf16.msra.mxu0 0
      %556 = vmatprep.subr.bf16.mxu0 0
      %557 = vmatpush1.bf16.msra.mxu0 0
      %558 = vmatprep.subr.bf16.mxu0 0
      %559 = vmatpush1.bf16.msra.mxu0 0
      %560 = vmatprep.mubr.bf16.mxu0 0
      %561 = vmatmul.mubr.bf16.gmra.mrb[0].mxu0 %v453
      %v562 = vpop.f32.mrb[0].mxu0
      %v563 = vadd.f32 %v478, %v562
      %v564 = vpop.f32.mrb[0].mxu0
      %v565 = vpop.f32.mrb[0].mxu0
      %v566 = vadd.f32 %v478, %v565
      %v567 = vpop.f32.mrb[0].mxu0
      %568 = vmatprep.mubr.bf16.mxu0 0
      %569 = vmatmul.mubr.bf16.gmra.mrb[0].mxu0 %v454
      %v570 = vpop.f32.mrb[0].mxu0
      %v571 = vadd.f32 %v478, %v570
      %v572 = vpop.f32.mrb[0].mxu0
      %v573 = vpop.f32.mrb[0].mxu0
      %v574 = vadd.f32 %v478, %v573
      %v575 = vpop.f32.mrb[0].mxu0
      %576 = vmatprep.mubr.bf16.mxu0 0
      %577 = vmatmul.mubr.bf16.gmra.mrb[0].mxu0 %v455
      %v578 = vpop.f32.mrb[0].mxu0
      %v579 = vadd.f32 %v478, %v578
      %v580 = vpop.f32.mrb[0].mxu0
      %v581 = vpop.f32.mrb[0].mxu0
      %v582 = vadd.f32 %v478, %v581
      %v583 = vpop.f32.mrb[0].mxu0
      %584 = vmatprep.mubr.bf16.mxu0 0
      %585 = vmatmul.mubr.bf16.gmra.mrb[0].mxu0 %v456
      %v586 = vpop.f32.mrb[0].mxu0
      %v587 = vadd.f32 %v478, %v586
      %v588 = vpop.f32.mrb[0].mxu0
      %v589 = vpop.f32.mrb[0].mxu0
      %v590 = vadd.f32 %v478, %v589
      %v591 = vpop.f32.mrb[0].mxu0
      %592 = vdwg.mxu0
      %v593 = vmul.f32 %v563, %v563
      %v594 = vmul.f32 %v566, %v566
      %v595 = vmul.f32 %v571, %v571
      %v596 = vmul.f32 %v574, %v574
      %v597 = vmul.f32 %v579, %v579
      %v598 = vmul.f32 %v582, %v582
      %v599 = vmul.f32 %v587, %v587
      %v600 = vmul.f32 %v590, %v590
      %v601 = vmul.f32 %v563, %v593
      %v602 = vmul.f32 %v566, %v594
      %v603 = vmul.f32 %v571, %v595
      %v604 = vmul.f32 %v574, %v596
      %v605 = vmul.f32 %v579, %v597
      %v606 = vmul.f32 %v582, %v598
      %v607 = vmul.f32 %v587, %v599
      %v608 = vmul.f32 %v590, %v600
      %v609 = vmul.f32 %v601, 0.044715
      %v610 = vmul.f32 %v602, 0.044715
      %v611 = vmul.f32 %v603, 0.044715
      %v612 = vmul.f32 %v604, 0.044715
      %v613 = vmul.f32 %v605, 0.044715
      %v614 = vmul.f32 %v606, 0.044715
      %v615 = vmul.f32 %v607, 0.044715
      %v616 = vmul.f32 %v608, 0.044715
      %v617 = vadd.f32 %v563, %v609
      %v618 = vadd.f32 %v566, %v610
      %v619 = vadd.f32 %v571, %v611
      %v620 = vadd.f32 %v574, %v612
      %v621 = vadd.f32 %v579, %v613
      %v622 = vadd.f32 %v582, %v614
      %v623 = vadd.f32 %v587, %v615
      %v624 = vadd.f32 %v590, %v616
      %v625 = vmul.f32 %v617, 0.7978846
      %v626 = vmul.f32 %v618, 0.7978846
      %v627 = vmul.f32 %v619, 0.7978846
      %v628 = vmul.f32 %v620, 0.7978846
      %v629 = vmul.f32 %v621, 0.7978846
      %v630 = vmul.f32 %v622, 0.7978846
      %v631 = vmul.f32 %v623, 0.7978846
      %v632 = vmul.f32 %v624, 0.7978846
      %v633 = vtanh.pop %v625
      %v634 = vtanh.pop %v626
      %v635 = vtanh.pop %v627
      %v636 = vtanh.pop %v628
      %v637 = vtanh.pop %v629
      %v638 = vtanh.pop %v630
      %v639 = vtanh.pop %v631
      %v640 = vtanh.pop %v632
      %v641 = vadd.f32 %v633, 1.0
      %v642 = vadd.f32 %v634, 1.0
      %v643 = vadd.f32 %v635, 1.0
      %v644 = vadd.f32 %v636, 1.0
      %v645 = vadd.f32 %v637, 1.0
      %v646 = vadd.f32 %v638, 1.0
      %v647 = vadd.f32 %v639, 1.0
      %v648 = vadd.f32 %v640, 1.0
      %v649 = vmul.f32 %v641, 0.5
      %v650 = vmul.f32 %v642, 0.5
      %v651 = vmul.f32 %v643, 0.5
      %v652 = vmul.f32 %v644, 0.5
      %v653 = vmul.f32 %v645, 0.5
      %v654 = vmul.f32 %v646, 0.5
      %v655 = vmul.f32 %v647, 0.5
      %v656 = vmul.f32 %v648, 0.5
      %v657 = vmul.f32 %v563, %v649
      %v658 = vmul.f32 %v566, %v650
      %v659 = vmul.f32 %v571, %v651
      %v660 = vmul.f32 %v574, %v652
      %v661 = vmul.f32 %v579, %v653
      %v662 = vmul.f32 %v582, %v654
      %v663 = vmul.f32 %v587, %v655
      %v664 = vmul.f32 %v590, %v656
      %673 = vrot.lane.b32.xlu0 %v657, 96
      %v674 = vpop.permute.xlu0 %673
      %675 = vrot.lane.b32.xlu0 %v658, 96
      %v676 = vpop.permute.xlu0 %675
      %677 = vrot.lane.b32.xlu0 %v659, 96
      %v678 = vpop.permute.xlu0 %677
      %679 = vrot.lane.b32.xlu0 %v660, 96
      %v680 = vpop.permute.xlu0 %679
      %681 = vrot.lane.b32.xlu0 %v661, 96
      %v682 = vpop.permute.xlu0 %681
      %683 = vrot.lane.b32.xlu0 %v662, 96
      %v684 = vpop.permute.xlu0 %683
      %685 = vrot.lane.b32.xlu0 %v663, 96
      %v686 = vpop.permute.xlu0 %685
      %687 = vrot.lane.b32.xlu0 %v664, 96
      %v688 = vpop.permute.xlu0 %687
      %v697 = vadd.f32 %v657, %v674
      %v698 = vadd.f32 %v658, %v676
      %v699 = vadd.f32 %v659, %v678
      %v700 = vadd.f32 %v660, %v680
      %v701 = vadd.f32 %v661, %v682
      %v702 = vadd.f32 %v662, %v684
      %v703 = vadd.f32 %v663, %v686
      %v704 = vadd.f32 %v664, %v688
      %705 = vrot.lane.b32.xlu0 %v657, 64
      %v706 = vpop.permute.xlu0 %705
      %707 = vrot.lane.b32.xlu0 %v658, 64
      %v708 = vpop.permute.xlu0 %707
      %709 = vrot.lane.b32.xlu0 %v659, 64
      %v710 = vpop.permute.xlu0 %709
      %711 = vrot.lane.b32.xlu0 %v660, 64
      %v712 = vpop.permute.xlu0 %711
      %713 = vrot.lane.b32.xlu0 %v661, 64
      %v714 = vpop.permute.xlu0 %713
      %715 = vrot.lane.b32.xlu0 %v662, 64
      %v716 = vpop.permute.xlu0 %715
      %717 = vrot.lane.b32.xlu0 %v663, 64
      %v718 = vpop.permute.xlu0 %717
      %719 = vrot.lane.b32.xlu0 %v664, 64
      %v720 = vpop.permute.xlu0 %719
      %v729 = vadd.f32 %v697, %v706
      %v730 = vadd.f32 %v698, %v708
      %v731 = vadd.f32 %v699, %v710
      %v732 = vadd.f32 %v700, %v712
      %v733 = vadd.f32 %v701, %v714
      %v734 = vadd.f32 %v702, %v716
      %v735 = vadd.f32 %v703, %v718
      %v736 = vadd.f32 %v704, %v720
      %737 = vrot.lane.b32.xlu0 %v657, 32
      %v738 = vpop.permute.xlu0 %737
      %739 = vrot.lane.b32.xlu0 %v658, 32
      %v740 = vpop.permute.xlu0 %739
      %741 = vrot.lane.b32.xlu0 %v659, 32
      %v742 = vpop.permute.xlu0 %741
      %743 = vrot.lane.b32.xlu0 %v660, 32
      %v744 = vpop.permute.xlu0 %743
      %745 = vrot.lane.b32.xlu0 %v661, 32
      %v746 = vpop.permute.xlu0 %745
      %747 = vrot.lane.b32.xlu0 %v662, 32
      %v748 = vpop.permute.xlu0 %747
      %749 = vrot.lane.b32.xlu0 %v663, 32
      %v750 = vpop.permute.xlu0 %749
      %751 = vrot.lane.b32.xlu0 %v664, 32
      %v752 = vpop.permute.xlu0 %751
      %v761 = vadd.f32 %v729, %v738
      %v762 = vadd.f32 %v730, %v740
      %v763 = vadd.f32 %v731, %v742
      %v764 = vadd.f32 %v732, %v744
      %v765 = vadd.f32 %v733, %v746
      %v766 = vadd.f32 %v734, %v748
      %v767 = vadd.f32 %v735, %v750
      %v768 = vadd.f32 %v736, %v752
      %v769 = vmul.f32 %v761, 0.25
      %v770 = vmul.f32 %v762, 0.25
      %v771 = vmul.f32 %v763, 0.25
      %v772 = vmul.f32 %v764, 0.25
      %v773 = vmul.f32 %v765, 0.25
      %v774 = vmul.f32 %v766, 0.25
      %v775 = vmul.f32 %v767, 0.25
      %v776 = vmul.f32 %v768, 0.25
      %v778 = vrot.slane %v769, 4
      %779 = vrot.lane.b32.xlu0 %v778, 32
      %v780 = vpop.permute.xlu0 %779
      %783 = vrot.lane.b32.xlu0 %v770, 64
      %v784 = vpop.permute.xlu0 %783
      %v786 = vrot.slane %v770, 4
      %787 = vrot.lane.b32.xlu0 %v786, 96
      %v788 = vpop.permute.xlu0 %787
      %vm790 = vcmask 261120
      %v791 = vsel %vm790, %v769, %v780
      %vm792 = vcmask 523264
      %v793 = vsel %vm792, %v791, %v784
      %vm794 = vcmask 785408
      %v795 = vsel %vm794, %v793, %v788
      %v797 = vrot.slane %v771, 4
      %798 = vrot.lane.b32.xlu0 %v797, 32
      %v799 = vpop.permute.xlu0 %798
      %802 = vrot.lane.b32.xlu0 %v772, 64
      %v803 = vpop.permute.xlu0 %802
      %v805 = vrot.slane %v772, 4
      %806 = vrot.lane.b32.xlu0 %v805, 96
      %v807 = vpop.permute.xlu0 %806
      %v809 = vsel %vm790, %v771, %v799
      %v810 = vsel %vm792, %v809, %v803
      %v811 = vsel %vm794, %v810, %v807
      %v813 = vrot.slane %v773, 4
      %814 = vrot.lane.b32.xlu0 %v813, 32
      %v815 = vpop.permute.xlu0 %814
      %818 = vrot.lane.b32.xlu0 %v774, 64
      %v819 = vpop.permute.xlu0 %818
      %v821 = vrot.slane %v774, 4
      %822 = vrot.lane.b32.xlu0 %v821, 96
      %v823 = vpop.permute.xlu0 %822
      %v825 = vsel %vm790, %v773, %v815
      %v826 = vsel %vm792, %v825, %v819
      %v827 = vsel %vm794, %v826, %v823
      %v829 = vrot.slane %v775, 4
      %830 = vrot.lane.b32.xlu0 %v829, 32
      %v831 = vpop.permute.xlu0 %830
      %834 = vrot.lane.b32.xlu0 %v776, 64
      %v835 = vpop.permute.xlu0 %834
      %v837 = vrot.slane %v776, 4
      %838 = vrot.lane.b32.xlu0 %v837, 96
      %v839 = vpop.permute.xlu0 %838
      %v841 = vsel %vm790, %v775, %v831
      %v842 = vsel %vm792, %v841, %v835
      %v843 = vsel %vm794, %v842, %v839
      %v844 = vpack.c.bf16 %v795, %v795
      %v845 = vpack.c.bf16 %v811, %v811
      %v846 = vpack.c.bf16 %v827, %v827
      %v847 = vpack.c.bf16 %v843, %v843
      %848 = vst [vmem:[%s313] sm:$0x3] %v844
      %849 = vst [vmem:[%s313 + $0x2] sm:$0x3] %v845
      %850 = vst [vmem:[%s313 + $0x4] sm:$0x3] %v846
      %851 = vst [vmem:[%s313 + $0x6] sm:$0x3] %v847
      %s852 = smul.u32 8, %s23
      %p853 = scmp.lt.s32.totalorder %s22, 1
      %s854 = scalar_select %p853, %s22, 1
      %p855 = scmp.lt.s32.totalorder %s852, 7
      %s856 = scalar_select %p855, %s852, 7
      %s857 = smul.addr %s854, 8
      %s858 = sadd.s32 %s856, %s857
      %s859 = smul.addr %s858, 4
      %s860 = scalar_lea.vmem %s5, %s859
      %s861 = smul.u32 4, %s23
      %p862 = scmp.lt.s32.totalorder %s22, 1
      %s863 = scalar_select %p862, %s22, 1
      %p864 = scmp.lt.s32.totalorder %s861, 3
      %s865 = scalar_select %p864, %s861, 3
      %s866 = smul.addr %s863, 4
      %s867 = sadd.s32 %s865, %s866
      %s868 = smul.addr %s867, 2
      %s869 = scalar_lea.vmem %s6, %s868
      // Predicated region
      $region41: #{_lambda_.3} parent=39 // pred_check
        %p870 = pneg %p162
      $region42: #{_lambda_.3} parent=39 // pred_check_branch
        %872 = sbr.rel (%p870) target = $region44
      $region43: #{_lambda_.3} parent=39 // pred_region
        %s873 = smul.u32 8, %s23
      $region44: #{_lambda_.3} parent=39 // pred_fallthru
        _
      // Predicated region
      $region45: #{_lambda_.3} parent=39 // pred_check
        %p874 = pneg %p190
      $region46: #{_lambda_.3} parent=39 // pred_check_branch
        %876 = sbr.rel (%p874) target = $region48
      $region47: #{_lambda_.3} parent=39 // pred_region
        %s877 = smul.u32 4, %s23
      $region48: #{_lambda_.3} parent=39 // pred_fallthru
        _
    $region40: #{_lambda_.3} parent=5 // pred_fallthru
      _
    %p878 = scmp.le.s32.totalorder 2, %s13
    // Predicated region
    $region49: #{_lambda_.3} parent=5 // pred_check
      %p879 = pneg %p878
    $region50: #{_lambda_.3} parent=5 // pred_check_branch
      %881 = sbr.rel (%p879) target = $region52
    $region51: #{_lambda_.3} parent=5 // pred_region
      %s882 = ssub.s32 %s13, 2
      // Predicated region
      $region53: #{_lambda_.3} parent=51 // pred_check
        %p883 = pneg %p168
      $region54: #{_lambda_.3} parent=51 // pred_check_branch
        %885 = sbr.rel (%p883) target = $region56
      $region55: #{_lambda_.3} parent=51 // pred_region
        %s886 = smul.u32 8, %s25
        %p887 = scmp.lt.s32.totalorder %s24, 1
        %s888 = scalar_select %p887, %s24, 1
        %p889 = scmp.lt.s32.totalorder %s886, 7
        %s890 = scalar_select %p889, %s886, 7
        %s891 = smul.addr %s888, 8
        %s892 = sadd.s32 %s890, %s891
        %s893 = smul.addr %s892, 4
        %s894 = scalar_lea.vmem %s5, %s893
      $region56: #{_lambda_.3} parent=51 // pred_fallthru
        _
      // Predicated region
      $region57: #{_lambda_.3} parent=51 // pred_check
        %p895 = pneg %p196
      $region58: #{_lambda_.3} parent=51 // pred_check_branch
        %897 = sbr.rel (%p895) target = $region60
      $region59: #{_lambda_.3} parent=51 // pred_region
        %s898 = smul.u32 4, %s25
        %p899 = scmp.lt.s32.totalorder %s24, 1
        %s900 = scalar_select %p899, %s24, 1
        %p901 = scmp.lt.s32.totalorder %s898, 3
        %s902 = scalar_select %p901, %s898, 3
        %s903 = smul.addr %s900, 4
        %s904 = sadd.s32 %s902, %s903
        %s905 = smul.addr %s904, 2
        %s906 = scalar_lea.vmem %s6, %s905
      $region60: #{_lambda_.3} parent=51 // pred_fallthru
        _
    $region52: #{_lambda_.3} parent=5 // pred_fallthru
      _
  $region6: #{_lambda_.3} parent=0 // loop_footer
    %s17 = sadd.s32 1, %s13
  $region7: #{_lambda_.3} parent=0 // loop_footer_branch
    %12 = sbr.rel target = $region3
  $region8: #{_lambda_.3} parent=0 // loop_exit
    _

// kernel: _lambda_.5
$region0: #{_lambda_.5}
  #allocation0 [shape = 'u32[]', space=smem, size = 0x4, offset = 0x4, fixed_abs, tag = 'smem constant byte address 0x4 - core index']
  #allocation1 [shape = 'u32[144,128]{1,0:T(1,128)}', space=vmem, size = 0x12000, scoped, tag = 'internal scratch']
  %s0 = inlined_call_operand.vmem [shape: bf16[2,4,4,128], index: 0, kind: input, shape index: {}]
  %s1 = inlined_call_operand.vmem [shape: bf16[2,8,8,128], index: 1, kind: input, shape index: {}]
  %s2 = inlined_call_operand.vmem [shape: bf16[128,128], index: 2, kind: input, shape index: {}]
  %s3 = inlined_call_operand.vmem [shape: bf16[128,128], index: 3, kind: input, shape index: {}]
  %s4 = inlined_call_operand.vmem [shape: f32[1,128], index: 4, kind: input, shape index: {}]
  %s5 = inlined_call_operand.vmem [shape: bf16[128,128], index: 5, kind: input, shape index: {}]
  %s6 = inlined_call_operand.vmem [shape: f32[1,128], index: 6, kind: input, shape index: {}]
  %s7 = inlined_call_operand.vmem [shape: bf16[2,8,8,128], index: 7, kind: output, shape index: {}]
  %s8 = sld [smem:[#allocation0]]
  $region61: #{_lambda_.5} parent=0
    _
  %s10 = ssub.s32 1, %s8
  %s11 = scalar_select 0, %s10, %s8
  loop: start=0, step=1, limit=4
  $region2: #{_lambda_.5} parent=0 // loop_pre_header
    _
  $region3: #{_lambda_.5} parent=0 // loop_header
    %s13 = sphi 0, %s17
    %p14 = scmp.ge.s32.totalorder %s13, 4
    %s20 = sphi 0, %s32
    %s21 = sphi 0, %s28
    %s22 = sphi 0, %s20
    %s23 = sphi 0, %s21
    %s24 = sphi 0, %s22
    %s25 = sphi 0, %s23
    %s37 = sphi 0, %s39
    %s40 = sphi 0, %s37
    %s41 = sphi 0, %s40
    %s57 = sphi 0, %s41
    %s65 = sphi 0, %s67
    %s68 = sphi 0, %s65
    %s69 = sphi 0, %s68
    %s85 = sphi 0, %s69
    %s89 = sphi 0, %s89
    %s91 = sphi 0, %s89
    %s92 = sphi 0, %s91
    %s106 = sphi 0, %s92
    %s110 = sphi 0, %s110
    %s112 = sphi 0, %s110
    %s113 = sphi 0, %s112
    %s127 = sphi 0, %s113
    %s131 = sphi 0, %s131
    %s133 = sphi 0, %s131
    %s134 = sphi 0, %s133
    %s148 = sphi 0, %s134
    %s152 = sphi 0, %s152
    %s154 = sphi 0, %s152
    %s155 = sphi 0, %s154
    %s169 = sphi 0, %s155
    %s173 = sphi 0, %s173
    %s175 = sphi 0, %s173
    %s176 = sphi 0, %s175
    %s190 = sphi 0, %s176
    %s198 = sphi 0, %s200
    %s201 = sphi 0, %s198
    %s202 = sphi 0, %s201
    %s218 = sphi 0, %s202
  $region4: #{_lambda_.5} parent=0 // loop_header_branch
    %16 = sbr.rel (%p14) target = $region8
  $region5: #{_lambda_.5} parent=0 // loop_body
    %s18 = ssub.s32 %s13, 1
    %s19 = ssub.s32 %s13, 2
    %s26 = sadd.s32 1, %s21
    %p27 = scmp.ge.s32.totalorder %s26, 1
    %s28 = scalar_select %p27, 0, %s26
    %s29 = sadd.s32 1, %s20
    %s30 = scalar_select %p27, %s29, %s20
    %p31 = scmp.ge.s32.totalorder %s30, 2
    %s32 = scalar_select %p31, 0, %s30
    %s33 = ssub.s32 %s20, %s32
    %s34 = ssub.s32 %s21, %s28
    %s35 = sor.u32 %s33, %s34
    %p36 = scmp.eq.s32.totalorder %s35, 0
    %s38 = sadd.s32 %s37, 1
    %s39 = scalar_select %p36, %s37, %s38
    %p42 = pneg %p36
    %p43 = scmp.eq.s32.totalorder %s13, 1
    %p44 = por %p42, %p43
    %p45 = scmp.ne.s32.totalorder %s37, %s40
    %p46 = scmp.eq.s32.totalorder %s13, 0
    %p47 = por %p45, %p46
    %p48 = scmp.ne.s32.totalorder %s37, %s40
    %p49 = scmp.eq.s32.totalorder %s18, 1
    %p50 = por %p48, %p49
    %p51 = scmp.ne.s32.totalorder %s40, %s41
    %p52 = scmp.eq.s32.totalorder %s18, 0
    %p53 = por %p51, %p52
    %p54 = scmp.ne.s32.totalorder %s40, %s41
    %p55 = scmp.eq.s32.totalorder %s19, 1
    %p56 = por %p54, %p55
    %p58 = scmp.ne.s32.totalorder %s41, %s57
    %p59 = scmp.eq.s32.totalorder %s19, 0
    %p60 = por %p58, %p59
    %s61 = ssub.s32 %s20, %s32
    %s62 = ssub.s32 %s21, %s28
    %s63 = sor.u32 %s61, %s62
    %p64 = scmp.eq.s32.totalorder %s63, 0
    %s66 = sadd.s32 %s65, 1
    %s67 = scalar_select %p64, %s65, %s66
    %p70 = pneg %p64
    %p71 = scmp.eq.s32.totalorder %s13, 1
    %p72 = por %p70, %p71
    %p73 = scmp.ne.s32.totalorder %s65, %s68
    %p74 = scmp.eq.s32.totalorder %s13, 0
    %p75 = por %p73, %p74
    %p76 = scmp.ne.s32.totalorder %s65, %s68
    %p77 = scmp.eq.s32.totalorder %s18, 1
    %p78 = por %p76, %p77
    %p79 = scmp.ne.s32.totalorder %s68, %s69
    %p80 = scmp.eq.s32.totalorder %s18, 0
    %p81 = por %p79, %p80
    %p82 = scmp.ne.s32.totalorder %s68, %s69
    %p83 = scmp.eq.s32.totalorder %s19, 1
    %p84 = por %p82, %p83
    %p86 = scmp.ne.s32.totalorder %s69, %s85
    %p87 = scmp.eq.s32.totalorder %s19, 0
    %p88 = por %p86, %p87
    %s90 = sadd.s32 %s89, 1
    %p93 = scmp.eq.s32.totalorder %s13, 1
    %p94 = scmp.ne.s32.totalorder %s89, %s91
    %p95 = scmp.eq.s32.totalorder %s13, 0
    %p96 = por %p94, %p95
    %p97 = scmp.ne.s32.totalorder %s89, %s91
    %p98 = scmp.eq.s32.totalorder %s18, 1
    %p99 = por %p97, %p98
    %p100 = scmp.ne.s32.totalorder %s91, %s92
    %p101 = scmp.eq.s32.totalorder %s18, 0
    %p102 = por %p100, %p101
    %p103 = scmp.ne.s32.totalorder %s91, %s92
    %p104 = scmp.eq.s32.totalorder %s19, 1
    %p105 = por %p103, %p104
    %p107 = scmp.ne.s32.totalorder %s92, %s106
    %p108 = scmp.eq.s32.totalorder %s19, 0
    %p109 = por %p107, %p108
    %s111 = sadd.s32 %s110, 1
    %p114 = scmp.eq.s32.totalorder %s13, 1
    %p115 = scmp.ne.s32.totalorder %s110, %s112
    %p116 = scmp.eq.s32.totalorder %s13, 0
    %p117 = por %p115, %p116
    %p118 = scmp.ne.s32.totalorder %s110, %s112
    %p119 = scmp.eq.s32.totalorder %s18, 1
    %p120 = por %p118, %p119
    %p121 = scmp.ne.s32.totalorder %s112, %s113
    %p122 = scmp.eq.s32.totalorder %s18, 0
    %p123 = por %p121, %p122
    %p124 = scmp.ne.s32.totalorder %s112, %s113
    %p125 = scmp.eq.s32.totalorder %s19, 1
    %p126 = por %p124, %p125
    %p128 = scmp.ne.s32.totalorder %s113, %s127
    %p129 = scmp.eq.s32.totalorder %s19, 0
    %p130 = por %p128, %p129
    %s132 = sadd.s32 %s131, 1
    %p135 = scmp.eq.s32.totalorder %s13, 1
    %p136 = scmp.ne.s32.totalorder %s131, %s133
    %p137 = scmp.eq.s32.totalorder %s13, 0
    %p138 = por %p136, %p137
    %p139 = scmp.ne.s32.totalorder %s131, %s133
    %p140 = scmp.eq.s32.totalorder %s18, 1
    %p141 = por %p139, %p140
    %p142 = scmp.ne.s32.totalorder %s133, %s134
    %p143 = scmp.eq.s32.totalorder %s18, 0
    %p144 = por %p142, %p143
    %p145 = scmp.ne.s32.totalorder %s133, %s134
    %p146 = scmp.eq.s32.totalorder %s19, 1
    %p147 = por %p145, %p146
    %p149 = scmp.ne.s32.totalorder %s134, %s148
    %p150 = scmp.eq.s32.totalorder %s19, 0
    %p151 = por %p149, %p150
    %s153 = sadd.s32 %s152, 1
    %p156 = scmp.eq.s32.totalorder %s13, 1
    %p157 = scmp.ne.s32.totalorder %s152, %s154
    %p158 = scmp.eq.s32.totalorder %s13, 0
    %p159 = por %p157, %p158
    %p160 = scmp.ne.s32.totalorder %s152, %s154
    %p161 = scmp.eq.s32.totalorder %s18, 1
    %p162 = por %p160, %p161
    %p163 = scmp.ne.s32.totalorder %s154, %s155
    %p164 = scmp.eq.s32.totalorder %s18, 0
    %p165 = por %p163, %p164
    %p166 = scmp.ne.s32.totalorder %s154, %s155
    %p167 = scmp.eq.s32.totalorder %s19, 1
    %p168 = por %p166, %p167
    %p170 = scmp.ne.s32.totalorder %s155, %s169
    %p171 = scmp.eq.s32.totalorder %s19, 0
    %p172 = por %p170, %p171
    %s174 = sadd.s32 %s173, 1
    %p177 = scmp.eq.s32.totalorder %s13, 1
    %p178 = scmp.ne.s32.totalorder %s173, %s175
    %p179 = scmp.eq.s32.totalorder %s13, 0
    %p180 = por %p178, %p179
    %p181 = scmp.ne.s32.totalorder %s173, %s175
    %p182 = scmp.eq.s32.totalorder %s18, 1
    %p183 = por %p181, %p182
    %p184 = scmp.ne.s32.totalorder %s175, %s176
    %p185 = scmp.eq.s32.totalorder %s18, 0
    %p186 = por %p184, %p185
    %p187 = scmp.ne.s32.totalorder %s175, %s176
    %p188 = scmp.eq.s32.totalorder %s19, 1
    %p189 = por %p187, %p188
    %p191 = scmp.ne.s32.totalorder %s176, %s190
    %p192 = scmp.eq.s32.totalorder %s19, 0
    %p193 = por %p191, %p192
    %s194 = ssub.s32 %s20, %s32
    %s195 = ssub.s32 %s21, %s28
    %s196 = sor.u32 %s194, %s195
    %p197 = scmp.eq.s32.totalorder %s196, 0
    %s199 = sadd.s32 %s198, 1
    %s200 = scalar_select %p197, %s198, %s199
    %p203 = pneg %p197
    %p204 = scmp.eq.s32.totalorder %s13, 1
    %p205 = por %p203, %p204
    %p206 = scmp.ne.s32.totalorder %s198, %s201
    %p207 = scmp.eq.s32.totalorder %s13, 0
    %p208 = por %p206, %p207
    %p209 = scmp.ne.s32.totalorder %s198, %s201
    %p210 = scmp.eq.s32.totalorder %s18, 1
    %p211 = por %p209, %p210
    %p212 = scmp.ne.s32.totalorder %s201, %s202
    %p213 = scmp.eq.s32.totalorder %s18, 0
    %p214 = por %p212, %p213
    %p215 = scmp.ne.s32.totalorder %s201, %s202
    %p216 = scmp.eq.s32.totalorder %s19, 1
    %p217 = por %p215, %p216
    %p219 = scmp.ne.s32.totalorder %s202, %s218
    %p220 = scmp.eq.s32.totalorder %s19, 0
    %p221 = por %p219, %p220
    %p222 = scmp.le.s32.totalorder 1, %s13
    %p223 = scmp.lt.s32.totalorder %s13, 3
    %p224 = pnand %p222, %p223
    %p225 = pneg %p224
    // Predicated region
    $region9: #{_lambda_.5} parent=5 // pred_check
      _
    $region10: #{_lambda_.5} parent=5 // pred_check_branch
      %227 = sbr.rel (%p224) target = $region12
    $region11: #{_lambda_.5} parent=5 // pred_region
      %s228 = ssub.s32 %s13, 1
      // Predicated region
      $region13: #{_lambda_.5} parent=11 // pred_check
        %p229 = pneg %p102
      $region14: #{_lambda_.5} parent=11 // pred_check_branch
        %231 = sbr.rel (%p229) target = $region16
      $region15: #{_lambda_.5} parent=11 // pred_region
        _
      $region16: #{_lambda_.5} parent=11 // pred_fallthru
        _
      // Predicated region
      $region17: #{_lambda_.5} parent=11 // pred_check
        %p232 = pneg %p123
      $region18: #{_lambda_.5} parent=11 // pred_check_branch
        %234 = sbr.rel (%p232) target = $region20
      $region19: #{_lambda_.5} parent=11 // pred_region
        _
      $region20: #{_lambda_.5} parent=11 // pred_fallthru
        _
      // Predicated region
      $region21: #{_lambda_.5} parent=11 // pred_check
        %p235 = pneg %p144
      $region22: #{_lambda_.5} parent=11 // pred_check_branch
        %237 = sbr.rel (%p235) target = $region24
      $region23: #{_lambda_.5} parent=11 // pred_region
        _
      $region24: #{_lambda_.5} parent=11 // pred_fallthru
        _
      // Predicated region
      $region25: #{_lambda_.5} parent=11 // pred_check
        %p238 = pneg %p165
      $region26: #{_lambda_.5} parent=11 // pred_check_branch
        %240 = sbr.rel (%p238) target = $region28
      $region27: #{_lambda_.5} parent=11 // pred_region
        _
      $region28: #{_lambda_.5} parent=11 // pred_fallthru
        _
      // Predicated region
      $region29: #{_lambda_.5} parent=11 // pred_check
        %p241 = pneg %p186
      $region30: #{_lambda_.5} parent=11 // pred_check_branch
        %243 = sbr.rel (%p241) target = $region32
      $region31: #{_lambda_.5} parent=11 // pred_region
        _
      $region32: #{_lambda_.5} parent=11 // pred_fallthru
        _
    $region12: #{_lambda_.5} parent=5 // pred_fallthru
      _
    %p244 = scmp.lt.s32.totalorder %s13, 2
    // Predicated region
    $region33: #{_lambda_.5} parent=5 // pred_check
      %p245 = pneg %p244
    $region34: #{_lambda_.5} parent=5 // pred_check_branch
      %247 = sbr.rel (%p245) target = $region36
    $region35: #{_lambda_.5} parent=5 // pred_region
      // Predicated region
      $region37: #{_lambda_.5} parent=35 // pred_check
        %p248 = pneg %p47
      $region38: #{_lambda_.5} parent=35 // pred_check_branch
        %250 = sbr.rel (%p248) target = $region40
      $region39: #{_lambda_.5} parent=35 // pred_region
        %s251 = smul.u32 4, %s21
        %p252 = scmp.lt.s32.totalorder %s20, 1
        %s253 = scalar_select %p252, %s20, 1
        %p254 = scmp.lt.s32.totalorder %s251, 3
        %s255 = scalar_select %p254, %s251, 3
        %s256 = smul.addr %s253, 4
        %s257 = sadd.s32 %s255, %s256
        %s258 = smul.addr %s257, 2
        %s259 = scalar_lea.vmem %s0, %s258
        %s260 = smul.u32 4, %s21
      $region40: #{_lambda_.5} parent=35 // pred_fallthru
        _
      // Predicated region
      $region41: #{_lambda_.5} parent=35 // pred_check
        %p261 = pneg %p75
      $region42: #{_lambda_.5} parent=35 // pred_check_branch
        %263 = sbr.rel (%p261) target = $region44
      $region43: #{_lambda_.5} parent=35 // pred_region
        %s264 = smul.u32 8, %s21
        %p265 = scmp.lt.s32.totalorder %s20, 1
        %s266 = scalar_select %p265, %s20, 1
        %p267 = scmp.lt.s32.totalorder %s264, 7
        %s268 = scalar_select %p267, %s264, 7
        %s269 = smul.addr %s266, 8
        %s270 = sadd.s32 %s268, %s269
        %s271 = smul.addr %s270, 4
        %s272 = scalar_lea.vmem %s1, %s271
        %s273 = smul.u32 8, %s21
      $region44: #{_lambda_.5} parent=35 // pred_fallthru
        _
    $region36: #{_lambda_.5} parent=5 // pred_fallthru
      _
    %p274 = scmp.le.s32.totalorder 1, %s13
    %p275 = scmp.lt.s32.totalorder %s13, 3
    %p276 = pnand %p274, %p275
    %p277 = pneg %p276
    // Predicated region
    $region45: #{_lambda_.5} parent=5 // pred_check
      _
    $region46: #{_lambda_.5} parent=5 // pred_check_branch
      %279 = sbr.rel (%p276) target = $region48
    $region47: #{_lambda_.5} parent=5 // pred_region
      %s280 = ssub.s32 %s13, 1
      %s281 = smul.u32 4, %s23
      %p282 = scmp.lt.s32.totalorder %s22, 1
      %s283 = scalar_select %p282, %s22, 1
      %p284 = scmp.lt.s32.totalorder %s281, 3
      %s285 = scalar_select %p284, %s281, 3
      %s286 = smul.addr %s283, 4
      %s287 = sadd.s32 %s285, %s286
      %s288 = smul.addr %s287, 2
      %s289 = scalar_lea.vmem %s0, %s288
      %p290 = pneg %p53
      %p291 = pneg %p50
      %s292 = smul.u32 8, %s23
      %p293 = scmp.lt.s32.totalorder %s22, 1
      %s294 = scalar_select %p293, %s22, 1
      %p295 = scmp.lt.s32.totalorder %s292, 7
      %s296 = scalar_select %p295, %s292, 7
      %s297 = smul.addr %s294, 8
      %s298 = sadd.s32 %s296, %s297
      %s299 = smul.addr %s298, 4
      %s300 = scalar_lea.vmem %s1, %s299
      %p301 = pneg %p81
      %p302 = pneg %p78
      %p303 = pneg %p102
      %p304 = pneg %p99
      %p305 = pneg %p123
      %p306 = pneg %p120
      %p307 = pneg %p144
      %p308 = pneg %p141
      %p309 = pneg %p165
      %p310 = pneg %p162
      %p311 = pneg %p186
      %p312 = pneg %p183
      %p313 = pneg %p214
      %p314 = pneg %p211
      %s315 = smul.u32 8, %s23
      %p316 = scmp.lt.s32.totalorder %s22, 1
      %s317 = scalar_select %p316, %s22, 1
      %p318 = scmp.lt.s32.totalorder %s315, 7
      %s319 = scalar_select %p318, %s315, 7
      %s320 = smul.addr %s317, 8
      %s321 = sadd.s32 %s319, %s320
      %s322 = smul.addr %s321, 4
      %s323 = scalar_lea.vmem %s7, %s322
      %s324 = smul.u32 4, %s23
      %p325 = scmp.lt.s32.totalorder %s22, 1
      %s326 = scalar_select %p325, %s22, 1
      %p327 = scmp.lt.s32.totalorder %s324, 3
      %s328 = scalar_select %p327, %s324, 3
      %s329 = smul.addr %s326, 4
      %s330 = sadd.s32 %s328, %s329
      %s331 = smul.addr %s330, 2
      %s332 = scalar_lea.vmem %s0, %s331
      %s333 = smul.u32 4, %s23
      %s334 = smul.u32 8, %s23
      %p335 = scmp.lt.s32.totalorder %s22, 1
      %s336 = scalar_select %p335, %s22, 1
      %p337 = scmp.lt.s32.totalorder %s334, 7
      %s338 = scalar_select %p337, %s334, 7
      %s339 = smul.addr %s336, 8
      %s340 = sadd.s32 %s338, %s339
      %s341 = smul.addr %s340, 4
      %s342 = scalar_lea.vmem %s1, %s341
      %s343 = smul.u32 8, %s23
      %s344 = smul.u32 8, %s23
      %p345 = scmp.lt.s32.totalorder %s22, 1
      %s346 = scalar_select %p345, %s22, 1
      %p347 = scmp.lt.s32.totalorder %s344, 7
      %s348 = scalar_select %p347, %s344, 7
      %s349 = smul.addr %s346, 8
      %s350 = sadd.s32 %s348, %s349
      %s351 = smul.addr %s350, 4
      %s352 = scalar_lea.vmem %s7, %s351
      %s353 = smul.u32 8, %s23
      %v355 = vld [vmem:[%s332] sm:$0x3]
      %v356 = vld [vmem:[%s332 + $0x2] sm:$0x3]
      %v357 = vld [vmem:[%s332 + $0x4] sm:$0x3]
      %v358 = vld [vmem:[%s332 + $0x6] sm:$0x3]
      %v360 = vcombine.low %v355, %v355
      %v362 = vunpack.c.l.s4 1983009808
      %v363 = vunpack.c.0.s8 %v362
      %v364 = vlaneseq
      %v365 = vshrl.u32 %v364, 7
      %v366 = vsub.s32 %v363, %v365
      %v367 = vrot.slane %v360, %v366
      %368 = vrot.lane.b32.xlu0 %v367, 96
      %v369 = vpop.permute.xlu0 %368
      %vm370 = vcmask 1041408
      %v373 = vsel %vm370, %v355, %v369
      %375 = vrot.lane.b32.xlu0 %v373, 32
      %v376 = vpop.permute.xlu0 %375
      %377 = vrot.lane.b32.xlu0 %v373, 64
      %v378 = vpop.permute.xlu0 %377
      %379 = vrot.lane.b32.xlu0 %v373, 96
      %v380 = vpop.permute.xlu0 %379
      %vm381 = vcmask 261120
      %v383 = vsel %vm381, %v373, %v376
      %vm384 = vcmask 523264
      %v386 = vsel %vm384, %v383, %v378
      %vm387 = vcmask 785408
      %v389 = vsel %vm387, %v386, %v380
      %v390 = vsel %vm381, %v378, %v380
      %v391 = vsel %vm384, %v390, %v373
      %v392 = vsel %vm387, %v391, %v376
      %v394 = vcombine.low %v356, %v356
      %v396 = vunpack.c.l.s4 1983009808
      %v397 = vunpack.c.0.s8 %v396
      %v398 = vlaneseq
      %v399 = vshrl.u32 %v398, 7
      %v400 = vsub.s32 %v397, %v399
      %v401 = vrot.slane %v394, %v400
      %402 = vrot.lane.b32.xlu0 %v401, 96
      %v403 = vpop.permute.xlu0 %402
      %v406 = vsel %vm370, %v356, %v403
      %408 = vrot.lane.b32.xlu0 %v406, 32
      %v409 = vpop.permute.xlu0 %408
      %410 = vrot.lane.b32.xlu0 %v406, 64
      %v411 = vpop.permute.xlu0 %410
      %412 = vrot.lane.b32.xlu0 %v406, 96
      %v413 = vpop.permute.xlu0 %412
      %v415 = vsel %vm381, %v406, %v409
      %v417 = vsel %vm384, %v415, %v411
      %v419 = vsel %vm387, %v417, %v413
      %v420 = vsel %vm381, %v411, %v413
      %v421 = vsel %vm384, %v420, %v406
      %v422 = vsel %vm387, %v421, %v409
      %v424 = vcombine.low %v357, %v357
      %v426 = vunpack.c.l.s4 1983009808
      %v427 = vunpack.c.0.s8 %v426
      %v428 = vlaneseq
      %v429 = vshrl.u32 %v428, 7
      %v430 = vsub.s32 %v427, %v429
      %v431 = vrot.slane %v424, %v430
      %432 = vrot.lane.b32.xlu0 %v431, 96
      %v433 = vpop.permute.xlu0 %432
      %v436 = vsel %vm370, %v357, %v433
      %438 = vrot.lane.b32.xlu0 %v436, 32
      %v439 = vpop.permute.xlu0 %438
      %440 = vrot.lane.b32.xlu0 %v436, 64
      %v441 = vpop.permute.xlu0 %440
      %442 = vrot.lane.b32.xlu0 %v436, 96
      %v443 = vpop.permute.xlu0 %442
      %v445 = vsel %vm381, %v436, %v439
      %v447 = vsel %vm384, %v445, %v441
      %v449 = vsel %vm387, %v447, %v443
      %v450 = vsel %vm381, %v441, %v443
      %v451 = vsel %vm384, %v450, %v436
      %v452 = vsel %vm387, %v451, %v439
      %v454 = vcombine.low %v358, %v358
      %v456 = vunpack.c.l.s4 1983009808
      %v457 = vunpack.c.0.s8 %v456
      %v458 = vlaneseq
      %v459 = vshrl.u32 %v458, 7
      %v460 = vsub.s32 %v457, %v459
      %v461 = vrot.slane %v454, %v460
      %462 = vrot.lane.b32.xlu0 %v461, 96
      %v463 = vpop.permute.xlu0 %462
      %v466 = vsel %vm370, %v358, %v463
      %468 = vrot.lane.b32.xlu0 %v466, 32
      %v469 = vpop.permute.xlu0 %468
      %470 = vrot.lane.b32.xlu0 %v466, 64
      %v471 = vpop.permute.xlu0 %470
      %472 = vrot.lane.b32.xlu0 %v466, 96
      %v473 = vpop.permute.xlu0 %472
      %v475 = vsel %vm381, %v466, %v469
      %v477 = vsel %vm384, %v475, %v471
      %v479 = vsel %vm387, %v477, %v473
      %v480 = vsel %vm381, %v471, %v473
      %v481 = vsel %vm384, %v480, %v466
      %v482 = vsel %vm387, %v481, %v469
      %v484 = vrot.slane %v392, 4
      %v486 = vrot.slane %v422, 4
      %v488 = vrot.slane %v452, 4
      %v490 = vrot.slane %v482, 4
      %vm491 = vcmask 1043456
      %v493 = vsel %vm491, %v389, %v484
      %v496 = vsel %vm491, %v419, %v486
      %v499 = vsel %vm491, %v449, %v488
      %v502 = vsel %vm491, %v479, %v490
      %v504 = vld [vmem:[%s342] sm:$0xf]
      %v505 = vld [vmem:[%s342 + $0x4] sm:$0xf]
      %v506 = vld [vmem:[%s342 + $0x8] sm:$0xf]
      %v507 = vld [vmem:[%s342 + $0xc] sm:$0xf]
      %v508 = vld [vmem:[%s342 + $0x10] sm:$0xf]
      %v509 = vld [vmem:[%s342 + $0x14] sm:$0xf]
      %v510 = vld [vmem:[%s342 + $0x18] sm:$0xf]
      %v511 = vld [vmem:[%s342 + $0x1c] sm:$0xf]
      %v512 = vld [vmem:[%s2] sm:$0xf]
      %v513 = vld [vmem:[%s2 + $0x4] sm:$0xf]
      %v514 = vld [vmem:[%s2 + $0x8] sm:$0xf]
      %v515 = vld [vmem:[%s2 + $0xc] sm:$0xf]
      %v516 = vld [vmem:[%s2 + $0x10] sm:$0xf]
      %v517 = vld [vmem:[%s2 + $0x14] sm:$0xf]
      %v518 = vld [vmem:[%s2 + $0x18] sm:$0xf]
      %v519 = vld [vmem:[%s2 + $0x1c] sm:$0xf]
      %v520 = vld [vmem:[%s2 + $0x20] sm:$0xf]
      %v521 = vld [vmem:[%s2 + $0x24] sm:$0xf]
      %v522 = vld [vmem:[%s2 + $0x28] sm:$0xf]
      %v523 = vld [vmem:[%s2 + $0x2c] sm:$0xf]
      %v524 = vld [vmem:[%s2 + $0x30] sm:$0xf]
      %v525 = vld [vmem:[%s2 + $0x34] sm:$0xf]
      %v526 = vld [vmem:[%s2 + $0x38] sm:$0xf]
      %v527 = vld [vmem:[%s2 + $0x3c] sm:$0xf]
      %v528 = vld [vmem:[%s3] sm:$0xf]
      %v529 = vld [vmem:[%s3 + $0x4] sm:$0xf]
      %v530 = vld [vmem:[%s3 + $0x8] sm:$0xf]
      %v531 = vld [vmem:[%s3 + $0xc] sm:$0xf]
      %v532 = vld [vmem:[%s3 + $0x10] sm:$0xf]
      %v533 = vld [vmem:[%s3 + $0x14] sm:$0xf]
      %v534 = vld [vmem:[%s3 + $0x18] sm:$0xf]
      %v535 = vld [vmem:[%s3 + $0x1c] sm:$0xf]
      %v536 = vld [vmem:[%s3 + $0x20] sm:$0xf]
      %v537 = vld [vmem:[%s3 + $0x24] sm:$0xf]
      %v538 = vld [vmem:[%s3 + $0x28] sm:$0xf]
      %v539 = vld [vmem:[%s3 + $0x2c] sm:$0xf]
      %v540 = vld [vmem:[%s3 + $0x30] sm:$0xf]
      %v541 = vld [vmem:[%s3 + $0x34] sm:$0xf]
      %v542 = vld [vmem:[%s3 + $0x38] sm:$0xf]
      %v543 = vld [vmem:[%s3 + $0x3c] sm:$0xf]
      %v552 = vunpack.c.l.b16 %v504
      %v553 = vunpack.c.l.b16 %v505
      %v554 = vunpack.c.l.b16 %v506
      %v555 = vunpack.c.l.b16 %v507
      %v556 = vunpack.c.l.b16 %v508
      %v557 = vunpack.c.l.b16 %v509
      %v558 = vunpack.c.l.b16 %v510
      %v559 = vunpack.c.l.b16 %v511
      %v560 = vpack.c.b16 %v553, %v552
      %v561 = vpack.c.b16 %v555, %v554
      %v562 = vpack.c.b16 %v557, %v556
      %v563 = vpack.c.b16 %v559, %v558
      %v584 = vunpack.c.l.b16 %v528
      %v585 = vunpack.c.l.b16 %v529
      %v586 = vunpack.c.l.b16 %v530
      %v587 = vunpack.c.l.b16 %v531
      %v588 = vunpack.c.l.b16 %v532
      %v589 = vunpack.c.l.b16 %v533
      %v590 = vunpack.c.l.b16 %v534
      %v591 = vunpack.c.l.b16 %v535
      %v592 = vunpack.c.l.b16 %v536
      %v593 = vunpack.c.l.b16 %v537
      %v594 = vunpack.c.l.b16 %v538
      %v595 = vunpack.c.l.b16 %v539
      %v596 = vunpack.c.l.b16 %v540
      %v597 = vunpack.c.l.b16 %v541
      %v598 = vunpack.c.l.b16 %v542
      %v599 = vunpack.c.l.b16 %v543
      %v600 = vpack.c.b16 %v585, %v584
      %v601 = vpack.c.b16 %v587, %v586
      %v602 = vpack.c.b16 %v589, %v588
      %v603 = vpack.c.b16 %v591, %v590
      %v604 = vpack.c.b16 %v593, %v592
      %v605 = vpack.c.b16 %v595, %v594
      %v606 = vpack.c.b16 %v597, %v596
      %v607 = vpack.c.b16 %v599, %v598
      %616 = vmatprep.subr.bf16.mxu0 0
      %617 = vmatpush1.bf16.msra.mxu0 %v600
      %618 = vmatprep.subr.bf16.mxu0 0
      %619 = vmatpush1.bf16.msra.mxu0 %v601
      %620 = vmatprep.subr.bf16.mxu0 0
      %621 = vmatpush1.bf16.msra.mxu0 %v602
      %622 = vmatprep.subr.bf16.mxu0 0
      %623 = vmatpush1.bf16.msra.mxu0 %v603
      %624 = vmatprep.subr.bf16.mxu0 0
      %625 = vmatpush1.bf16.msra.mxu0 %v604
      %626 = vmatprep.subr.bf16.mxu0 0
      %627 = vmatpush1.bf16.msra.mxu0 %v605
      %628 = vmatprep.subr.bf16.mxu0 0
      %629 = vmatpush1.bf16.msra.mxu0 %v606
      %630 = vmatprep.subr.bf16.mxu0 0
      %631 = vmatpush1.bf16.msra.mxu0 %v607
      %632 = vmatprep.subr.bf16.mxu0 0
      %633 = vmatpush1.bf16.msra.mxu0 0
      %634 = vmatprep.subr.bf16.mxu0 0
      %635 = vmatpush1.bf16.msra.mxu0 0
      %636 = vmatprep.subr.bf16.mxu0 0
      %637 = vmatpush1.bf16.msra.mxu0 0
      %638 = vmatprep.subr.bf16.mxu0 0
      %639 = vmatpush1.bf16.msra.mxu0 0
      %640 = vmatprep.subr.bf16.mxu0 0
      %641 = vmatpush1.bf16.msra.mxu0 0
      %642 = vmatprep.subr.bf16.mxu0 0
      %643 = vmatpush1.bf16.msra.mxu0 0
      %644 = vmatprep.subr.bf16.mxu0 0
      %645 = vmatpush1.bf16.msra.mxu0 0
      %646 = vmatprep.subr.bf16.mxu0 0
      %647 = vmatpush1.bf16.msra.mxu0 0
      %648 = vmatprep.mubr.bf16.mxu0 0
      %649 = vmatmul.mubr.bf16.gmra.mrb[0].mxu0 %v560
      %v650 = vpop.f32.mrb[0].mxu0
      %v651 = vadd.f32 0.0, %v650
      %v652 = vpop.f32.mrb[0].mxu0
      %v653 = vpop.f32.mrb[0].mxu0
      %v654 = vadd.f32 0.0, %v653
      %v655 = vpop.f32.mrb[0].mxu0
      %656 = vmatprep.mubr.bf16.mxu0 0
      %657 = vmatmul.mubr.bf16.gmra.mrb[0].mxu0 %v561
      %v658 = vpop.f32.mrb[0].mxu0
      %v659 = vadd.f32 0.0, %v658
      %v660 = vpop.f32.mrb[0].mxu0
      %v661 = vpop.f32.mrb[0].mxu0
      %v662 = vadd.f32 0.0, %v661
      %v663 = vpop.f32.mrb[0].mxu0
      %664 = vmatprep.mubr.bf16.mxu0 0
      %665 = vmatmul.mubr.bf16.gmra.mrb[0].mxu0 %v562
      %v666 = vpop.f32.mrb[0].mxu0
      %v667 = vadd.f32 0.0, %v666
      %v668 = vpop.f32.mrb[0].mxu0
      %v669 = vpop.f32.mrb[0].mxu0
      %v670 = vadd.f32 0.0, %v669
      %v671 = vpop.f32.mrb[0].mxu0
      %672 = vmatprep.mubr.bf16.mxu0 0
      %673 = vmatmul.mubr.bf16.gmra.mrb[0].mxu0 %v563
      %v674 = vpop.f32.mrb[0].mxu0
      %v675 = vadd.f32 0.0, %v674
      %v676 = vpop.f32.mrb[0].mxu0
      %v677 = vpop.f32.mrb[0].mxu0
      %v678 = vadd.f32 0.0, %v677
      %v679 = vpop.f32.mrb[0].mxu0
      %680 = vdwg.mxu0
      %v697 = vunpack.c.l.b16 %v512
      %v698 = vunpack.c.l.b16 %v513
      %v699 = vunpack.c.l.b16 %v514
      %v700 = vunpack.c.l.b16 %v515
      %v701 = vunpack.c.l.b16 %v516
      %v702 = vunpack.c.l.b16 %v517
      %v703 = vunpack.c.l.b16 %v518
      %v704 = vunpack.c.l.b16 %v519
      %v705 = vunpack.c.l.b16 %v520
      %v706 = vunpack.c.l.b16 %v521
      %v707 = vunpack.c.l.b16 %v522
      %v708 = vunpack.c.l.b16 %v523
      %v709 = vunpack.c.l.b16 %v524
      %v710 = vunpack.c.l.b16 %v525
      %v711 = vunpack.c.l.b16 %v526
      %v712 = vunpack.c.l.b16 %v527
      %v713 = vpack.c.b16 %v698, %v697
      %v714 = vpack.c.b16 %v700, %v699
      %v715 = vpack.c.b16 %v702, %v701
      %v716 = vpack.c.b16 %v704, %v703
      %v717 = vpack.c.b16 %v706, %v705
      %v718 = vpack.c.b16 %v708, %v707
      %v719 = vpack.c.b16 %v710, %v709
      %v720 = vpack.c.b16 %v712, %v711
      %729 = vmatprep.subr.bf16.mxu0 0
      %730 = vmatpush1.bf16.msra.mxu0 %v713
      %731 = vmatprep.subr.bf16.mxu0 0
      %732 = vmatpush1.bf16.msra.mxu0 %v714
      %733 = vmatprep.subr.bf16.mxu0 0
      %734 = vmatpush1.bf16.msra.mxu0 %v715
      %735 = vmatprep.subr.bf16.mxu0 0
      %736 = vmatpush1.bf16.msra.mxu0 %v716
      %737 = vmatprep.subr.bf16.mxu0 0
      %738 = vmatpush1.bf16.msra.mxu0 %v717
      %739 = vmatprep.subr.bf16.mxu0 0
      %740 = vmatpush1.bf16.msra.mxu0 %v718
      %741 = vmatprep.subr.bf16.mxu0 0
      %742 = vmatpush1.bf16.msra.mxu0 %v719
      %743 = vmatprep.subr.bf16.mxu0 0
      %744 = vmatpush1.bf16.msra.mxu0 %v720
      %745 = vmatprep.subr.bf16.mxu0 0
      %746 = vmatpush1.bf16.msra.mxu0 0
      %747 = vmatprep.subr.bf16.mxu0 0
      %748 = vmatpush1.bf16.msra.mxu0 0
      %749 = vmatprep.subr.bf16.mxu0 0
      %750 = vmatpush1.bf16.msra.mxu0 0
      %751 = vmatprep.subr.bf16.mxu0 0
      %752 = vmatpush1.bf16.msra.mxu0 0
      %753 = vmatprep.subr.bf16.mxu0 0
      %754 = vmatpush1.bf16.msra.mxu0 0
      %755 = vmatprep.subr.bf16.mxu0 0
      %756 = vmatpush1.bf16.msra.mxu0 0
      %757 = vmatprep.subr.bf16.mxu0 0
      %758 = vmatpush1.bf16.msra.mxu0 0
      %759 = vmatprep.subr.bf16.mxu0 0
      %760 = vmatpush1.bf16.msra.mxu0 0
      %761 = vmatprep.mubr.bf16.mxu0 0
      %762 = vmatmul.mubr.bf16.gmra.mrb[0].mxu0 %v493
      %v763 = vpop.f32.mrb[0].mxu0
      %v764 = vadd.f32 %v651, %v763
      %v765 = vpop.f32.mrb[0].mxu0
      %v766 = vpop.f32.mrb[0].mxu0
      %v767 = vadd.f32 %v654, %v766
      %v768 = vpop.f32.mrb[0].mxu0
      %769 = vmatprep.mubr.bf16.mxu0 0
      %770 = vmatmul.mubr.bf16.gmra.mrb[0].mxu0 %v496
      %v771 = vpop.f32.mrb[0].mxu0
      %v772 = vadd.f32 %v659, %v771
      %v773 = vpop.f32.mrb[0].mxu0
      %v774 = vpop.f32.mrb[0].mxu0
      %v775 = vadd.f32 %v662, %v774
      %v776 = vpop.f32.mrb[0].mxu0
      %777 = vmatprep.mubr.bf16.mxu0 0
      %778 = vmatmul.mubr.bf16.gmra.mrb[0].mxu0 %v499
      %v779 = vpop.f32.mrb[0].mxu0
      %v780 = vadd.f32 %v667, %v779
      %v781 = vpop.f32.mrb[0].mxu0
      %v782 = vpop.f32.mrb[0].mxu0
      %v783 = vadd.f32 %v670, %v782
      %v784 = vpop.f32.mrb[0].mxu0
      %785 = vmatprep.mubr.bf16.mxu0 0
      %786 = vmatmul.mubr.bf16.gmra.mrb[0].mxu0 %v502
      %v787 = vpop.f32.mrb[0].mxu0
      %v788 = vadd.f32 %v675, %v787
      %v789 = vpop.f32.mrb[0].mxu0
      %v790 = vpop.f32.mrb[0].mxu0
      %v791 = vadd.f32 %v678, %v790
      %v792 = vpop.f32.mrb[0].mxu0
      %793 = vdwg.mxu0
      %v794 = vld [vmem:[%s4] sm:$0x1]
      %v796 = vlaneseq
      %v797 = vshrl.u32 %v796, 7
      %v798 = vsub.s32 0, %v797
      %v799 = vrot.slane %v794, %v798
      %v801 = vadd.f32 %v764, %v799
      %v802 = vadd.f32 %v767, %v799
      %v803 = vadd.f32 %v772, %v799
      %v804 = vadd.f32 %v775, %v799
      %v805 = vadd.f32 %v780, %v799
      %v806 = vadd.f32 %v783, %v799
      %v807 = vadd.f32 %v788, %v799
      %v808 = vadd.f32 %v791, %v799
      %v809 = vmul.f32 %v801, %v801
      %v810 = vmul.f32 %v802, %v802
      %v811 = vmul.f32 %v803, %v803
      %v812 = vmul.f32 %v804, %v804
      %v813 = vmul.f32 %v805, %v805
      %v814 = vmul.f32 %v806, %v806
      %v815 = vmul.f32 %v807, %v807
      %v816 = vmul.f32 %v808, %v808
      %v817 = vmul.f32 %v801, %v809
      %v818 = vmul.f32 %v802, %v810
      %v819 = vmul.f32 %v803, %v811
      %v820 = vmul.f32 %v804, %v812
      %v821 = vmul.f32 %v805, %v813
      %v822 = vmul.f32 %v806, %v814
      %v823 = vmul.f32 %v807, %v815
      %v824 = vmul.f32 %v808, %v816
      %v825 = vmul.f32 %v817, 0.044715
      %v826 = vmul.f32 %v818, 0.044715
      %v827 = vmul.f32 %v819, 0.044715
      %v828 = vmul.f32 %v820, 0.044715
      %v829 = vmul.f32 %v821, 0.044715
      %v830 = vmul.f32 %v822, 0.044715
      %v831 = vmul.f32 %v823, 0.044715
      %v832 = vmul.f32 %v824, 0.044715
      %v833 = vadd.f32 %v801, %v825
      %v834 = vadd.f32 %v802, %v826
      %v835 = vadd.f32 %v803, %v827
      %v836 = vadd.f32 %v804, %v828
      %v837 = vadd.f32 %v805, %v829
      %v838 = vadd.f32 %v806, %v830
      %v839 = vadd.f32 %v807, %v831
      %v840 = vadd.f32 %v808, %v832
      %v841 = vmul.f32 %v833, 0.7978846
      %v842 = vmul.f32 %v834, 0.7978846
      %v843 = vmul.f32 %v835, 0.7978846
      %v844 = vmul.f32 %v836, 0.7978846
      %v845 = vmul.f32 %v837, 0.7978846
      %v846 = vmul.f32 %v838, 0.7978846
      %v847 = vmul.f32 %v839, 0.7978846
      %v848 = vmul.f32 %v840, 0.7978846
      %v849 = vtanh.pop %v841
      %v850 = vtanh.pop %v842
      %v851 = vtanh.pop %v843
      %v852 = vtanh.pop %v844
      %v853 = vtanh.pop %v845
      %v854 = vtanh.pop %v846
      %v855 = vtanh.pop %v847
      %v856 = vtanh.pop %v848
      %v857 = vadd.f32 %v849, 1.0
      %v858 = vadd.f32 %v850, 1.0
      %v859 = vadd.f32 %v851, 1.0
      %v860 = vadd.f32 %v852, 1.0
      %v861 = vadd.f32 %v853, 1.0
      %v862 = vadd.f32 %v854, 1.0
      %v863 = vadd.f32 %v855, 1.0
      %v864 = vadd.f32 %v856, 1.0
      %v865 = vmul.f32 %v857, 0.5
      %v866 = vmul.f32 %v858, 0.5
      %v867 = vmul.f32 %v859, 0.5
      %v868 = vmul.f32 %v860, 0.5
      %v869 = vmul.f32 %v861, 0.5
      %v870 = vmul.f32 %v862, 0.5
      %v871 = vmul.f32 %v863, 0.5
      %v872 = vmul.f32 %v864, 0.5
      %v873 = vmul.f32 %v801, %v865
      %v874 = vmul.f32 %v802, %v866
      %v875 = vmul.f32 %v803, %v867
      %v876 = vmul.f32 %v804, %v868
      %v877 = vmul.f32 %v805, %v869
      %v878 = vmul.f32 %v806, %v870
      %v879 = vmul.f32 %v807, %v871
      %v880 = vmul.f32 %v808, %v872
      %v881 = vpack.c.bf16 %v874, %v873
      %v882 = vpack.c.bf16 %v876, %v875
      %v883 = vpack.c.bf16 %v878, %v877
      %v884 = vpack.c.bf16 %v880, %v879
      %v885 = vld [vmem:[%s5] sm:$0xf]
      %v886 = vld [vmem:[%s5 + $0x4] sm:$0xf]
      %v887 = vld [vmem:[%s5 + $0x8] sm:$0xf]
      %v888 = vld [vmem:[%s5 + $0xc] sm:$0xf]
      %v889 = vld [vmem:[%s5 + $0x10] sm:$0xf]
      %v890 = vld [vmem:[%s5 + $0x14] sm:$0xf]
      %v891 = vld [vmem:[%s5 + $0x18] sm:$0xf]
      %v892 = vld [vmem:[%s5 + $0x1c] sm:$0xf]
      %v893 = vld [vmem:[%s5 + $0x20] sm:$0xf]
      %v894 = vld [vmem:[%s5 + $0x24] sm:$0xf]
      %v895 = vld [vmem:[%s5 + $0x28] sm:$0xf]
      %v896 = vld [vmem:[%s5 + $0x2c] sm:$0xf]
      %v897 = vld [vmem:[%s5 + $0x30] sm:$0xf]
      %v898 = vld [vmem:[%s5 + $0x34] sm:$0xf]
      %v899 = vld [vmem:[%s5 + $0x38] sm:$0xf]
      %v900 = vld [vmem:[%s5 + $0x3c] sm:$0xf]
      %v901 = vld [vmem:[%s6] sm:$0x1]
      %v903 = vlaneseq
      %v904 = vshrl.u32 %v903, 7
      %v905 = vsub.s32 0, %v904
      %v906 = vrot.slane %v901, %v905
      %v924 = vunpack.c.l.b16 %v885
      %v925 = vunpack.c.l.b16 %v886
      %v926 = vunpack.c.l.b16 %v887
      %v927 = vunpack.c.l.b16 %v888
      %v928 = vunpack.c.l.b16 %v889
      %v929 = vunpack.c.l.b16 %v890
      %v930 = vunpack.c.l.b16 %v891
      %v931 = vunpack.c.l.b16 %v892
      %v932 = vunpack.c.l.b16 %v893
      %v933 = vunpack.c.l.b16 %v894
      %v934 = vunpack.c.l.b16 %v895
      %v935 = vunpack.c.l.b16 %v896
      %v936 = vunpack.c.l.b16 %v897
      %v937 = vunpack.c.l.b16 %v898
      %v938 = vunpack.c.l.b16 %v899
      %v939 = vunpack.c.l.b16 %v900
      %v940 = vpack.c.b16 %v925, %v924
      %v941 = vpack.c.b16 %v927, %v926
      %v942 = vpack.c.b16 %v929, %v928
      %v943 = vpack.c.b16 %v931, %v930
      %v944 = vpack.c.b16 %v933, %v932
      %v945 = vpack.c.b16 %v935, %v934
      %v946 = vpack.c.b16 %v937, %v936
      %v947 = vpack.c.b16 %v939, %v938
      %956 = vmatprep.subr.bf16.mxu0 0
      %957 = vmatpush1.bf16.msra.mxu0 %v940
      %958 = vmatprep.subr.bf16.mxu0 0
      %959 = vmatpush1.bf16.msra.mxu0 %v941
      %960 = vmatprep.subr.bf16.mxu0 0
      %961 = vmatpush1.bf16.msra.mxu0 %v942
      %962 = vmatprep.subr.bf16.mxu0 0
      %963 = vmatpush1.bf16.msra.mxu0 %v943
      %964 = vmatprep.subr.bf16.mxu0 0
      %965 = vmatpush1.bf16.msra.mxu0 %v944
      %966 = vmatprep.subr.bf16.mxu0 0
      %967 = vmatpush1.bf16.msra.mxu0 %v945
      %968 = vmatprep.subr.bf16.mxu0 0
      %969 = vmatpush1.bf16.msra.mxu0 %v946
      %970 = vmatprep.subr.bf16.mxu0 0
      %971 = vmatpush1.bf16.msra.mxu0 %v947
      %972 = vmatprep.subr.bf16.mxu0 0
      %973 = vmatpush1.bf16.msra.mxu0 0
      %974 = vmatprep.subr.bf16.mxu0 0
      %975 = vmatpush1.bf16.msra.mxu0 0
      %976 = vmatprep.subr.bf16.mxu0 0
      %977 = vmatpush1.bf16.msra.mxu0 0
      %978 = vmatprep.subr.bf16.mxu0 0
      %979 = vmatpush1.bf16.msra.mxu0 0
      %980 = vmatprep.subr.bf16.mxu0 0
      %981 = vmatpush1.bf16.msra.mxu0 0
      %982 = vmatprep.subr.bf16.mxu0 0
      %983 = vmatpush1.bf16.msra.mxu0 0
      %984 = vmatprep.subr.bf16.mxu0 0
      %985 = vmatpush1.bf16.msra.mxu0 0
      %986 = vmatprep.subr.bf16.mxu0 0
      %987 = vmatpush1.bf16.msra.mxu0 0
      %988 = vmatprep.mubr.bf16.mxu0 0
      %989 = vmatmul.mubr.bf16.gmra.mrb[0].mxu0 %v881
      %v990 = vpop.f32.mrb[0].mxu0
      %v991 = vadd.f32 %v906, %v990
      %v992 = vpop.f32.mrb[0].mxu0
      %v993 = vpop.f32.mrb[0].mxu0
      %v994 = vadd.f32 %v906, %v993
      %v995 = vpop.f32.mrb[0].mxu0
      %996 = vmatprep.mubr.bf16.mxu0 0
      %997 = vmatmul.mubr.bf16.gmra.mrb[0].mxu0 %v882
      %v998 = vpop.f32.mrb[0].mxu0
      %v999 = vadd.f32 %v906, %v998
      %v1000 = vpop.f32.mrb[0].mxu0
      %v1001 = vpop.f32.mrb[0].mxu0
      %v1002 = vadd.f32 %v906, %v1001
      %v1003 = vpop.f32.mrb[0].mxu0
      %1004 = vmatprep.mubr.bf16.mxu0 0
      %1005 = vmatmul.mubr.bf16.gmra.mrb[0].mxu0 %v883
      %v1006 = vpop.f32.mrb[0].mxu0
      %v1007 = vadd.f32 %v906, %v1006
      %v1008 = vpop.f32.mrb[0].mxu0
      %v1009 = vpop.f32.mrb[0].mxu0
      %v1010 = vadd.f32 %v906, %v1009
      %v1011 = vpop.f32.mrb[0].mxu0
      %1012 = vmatprep.mubr.bf16.mxu0 0
      %1013 = vmatmul.mubr.bf16.gmra.mrb[0].mxu0 %v884
      %v1014 = vpop.f32.mrb[0].mxu0
      %v1015 = vadd.f32 %v906, %v1014
      %v1016 = vpop.f32.mrb[0].mxu0
      %v1017 = vpop.f32.mrb[0].mxu0
      %v1018 = vadd.f32 %v906, %v1017
      %v1019 = vpop.f32.mrb[0].mxu0
      %1020 = vdwg.mxu0
      %v1021 = vpack.c.bf16 %v991, %v991
      %v1022 = vpack.c.bf16 %v994, %v994
      %v1023 = vpack.c.bf16 %v999, %v999
      %v1024 = vpack.c.bf16 %v1002, %v1002
      %v1025 = vpack.c.bf16 %v1007, %v1007
      %v1026 = vpack.c.bf16 %v1010, %v1010
      %v1027 = vpack.c.bf16 %v1015, %v1015
      %v1028 = vpack.c.bf16 %v1018, %v1018
      %1029 = vst [vmem:[%s352] sm:$0xf] %v1021
      %1030 = vst [vmem:[%s352 + $0x4] sm:$0xf] %v1022
      %1031 = vst [vmem:[%s352 + $0x8] sm:$0xf] %v1023
      %1032 = vst [vmem:[%s352 + $0xc] sm:$0xf] %v1024
      %1033 = vst [vmem:[%s352 + $0x10] sm:$0xf] %v1025
      %1034 = vst [vmem:[%s352 + $0x14] sm:$0xf] %v1026
      %1035 = vst [vmem:[%s352 + $0x18] sm:$0xf] %v1027
      %1036 = vst [vmem:[%s352 + $0x1c] sm:$0xf] %v1028
      %s1037 = smul.u32 8, %s23
      %p1038 = scmp.lt.s32.totalorder %s22, 1
      %s1039 = scalar_select %p1038, %s22, 1
      %p1040 = scmp.lt.s32.totalorder %s1037, 7
      %s1041 = scalar_select %p1040, %s1037, 7
      %s1042 = smul.addr %s1039, 8
      %s1043 = sadd.s32 %s1041, %s1042
      %s1044 = smul.addr %s1043, 4
      %s1045 = scalar_lea.vmem %s7, %s1044
      // Predicated region
      $region49: #{_lambda_.5} parent=47 // pred_check
        %p1046 = pneg %p211
      $region50: #{_lambda_.5} parent=47 // pred_check_branch
        %1048 = sbr.rel (%p1046) target = $region52
      $region51: #{_lambda_.5} parent=47 // pred_region
        %s1049 = smul.u32 8, %s23
      $region52: #{_lambda_.5} parent=47 // pred_fallthru
        _
    $region48: #{_lambda_.5} parent=5 // pred_fallthru
      _
    %p1050 = scmp.le.s32.totalorder 2, %s13
    // Predicated region
    $region53: #{_lambda_.5} parent=5 // pred_check
      %p1051 = pneg %p1050
    $region54: #{_lambda_.5} parent=5 // pred_check_branch
      %1053 = sbr.rel (%p1051) target = $region56
    $region55: #{_lambda_.5} parent=5 // pred_region
      %s1054 = ssub.s32 %s13, 2
      // Predicated region
      $region57: #{_lambda_.5} parent=55 // pred_check
        %p1055 = pneg %p217
      $region58: #{_lambda_.5} parent=55 // pred_check_branch
        %1057 = sbr.rel (%p1055) target = $region60
      $region59: #{_lambda_.5} parent=55 // pred_region
        %s1058 = smul.u32 8, %s25
        %p1059 = scmp.lt.s32.totalorder %s24, 1
        %s1060 = scalar_select %p1059, %s24, 1
        %p1061 = scmp.lt.s32.totalorder %s1058, 7
        %s1062 = scalar_select %p1061, %s1058, 7
        %s1063 = smul.addr %s1060, 8
        %s1064 = sadd.s32 %s1062, %s1063
        %s1065 = smul.addr %s1064, 4
        %s1066 = scalar_lea.vmem %s7, %s1065
      $region60: #{_lambda_.5} parent=55 // pred_fallthru
        _
    $region56: #{_lambda_.5} parent=5 // pred_fallthru
      _
  $region6: #{_lambda_.5} parent=0 // loop_footer
    %s17 = sadd.s32 1, %s13
  $region7: #{_lambda_.5} parent=0 // loop_footer_branch
    %12 = sbr.rel target = $region3
  $region8: #{_lambda_.5} parent=0 // loop_exit
    _

// kernel: _lambda_.4
$region0: #{_lambda_.4}
  #allocation0 [shape = 'u32[]', space=smem, size = 0x4, offset = 0x4, fixed_abs, tag = 'smem constant byte address 0x4 - core index']
  #allocation1 [shape = 'u32[144,128]{1,0:T(1,128)}', space=vmem, size = 0x12000, scoped, tag = 'internal scratch']
  %s0 = inlined_call_operand.vmem [shape: bf16[32,128], index: 0, kind: input, shape index: {}]
  %s1 = inlined_call_operand.vmem [shape: bf16[128,128], index: 1, kind: input, shape index: {}]
  %s2 = inlined_call_operand.vmem [shape: f32[1,128], index: 2, kind: input, shape index: {}]
  %s3 = inlined_call_operand.vmem [shape: bf16[128,128], index: 3, kind: input, shape index: {}]
  %s4 = inlined_call_operand.vmem [shape: f32[1,128], index: 4, kind: input, shape index: {}]
  %s5 = inlined_call_operand.vmem [shape: bf16[128,128], index: 5, kind: input, shape index: {}]
  %s6 = inlined_call_operand.vmem [shape: f32[1,128], index: 6, kind: input, shape index: {}]
  %s7 = inlined_call_operand.vmem [shape: bf16[128,128], index: 7, kind: input, shape index: {}]
  %s8 = inlined_call_operand.vmem [shape: bf16[128,128], index: 8, kind: input, shape index: {}]
  %s9 = inlined_call_operand.vmem [shape: f32[1,128], index: 9, kind: input, shape index: {}]
  %s10 = inlined_call_operand.vmem [shape: bf16[128,128], index: 10, kind: input, shape index: {}]
  %s11 = inlined_call_operand.vmem [shape: f32[1,128], index: 11, kind: input, shape index: {}]
  %s12 = inlined_call_operand.vmem [shape: bf16[32,128], index: 12, kind: output, shape index: {}]
  %s13 = sld [smem:[#allocation0]]
  $region58: #{_lambda_.4} parent=0
    _
  %s15 = ssub.s32 1, %s13
  %s16 = scalar_select 0, %s15, %s13
  // Predicated region
  $region2: #{_lambda_.4} parent=0 // pred_check
    _
  $region3: #{_lambda_.4} parent=0 // pred_check_branch
    %18 = sbr.rel (0) target = $region5
  $region4: #{_lambda_.4} parent=0 // pred_region
    _
  $region5: #{_lambda_.4} parent=0 // pred_fallthru
    _
  // Predicated region
  $region6: #{_lambda_.4} parent=0 // pred_check
    _
  $region7: #{_lambda_.4} parent=0 // pred_check_branch
    %20 = sbr.rel (0) target = $region9
  $region8: #{_lambda_.4} parent=0 // pred_region
    _
  $region9: #{_lambda_.4} parent=0 // pred_fallthru
    _
  // Predicated region
  $region10: #{_lambda_.4} parent=0 // pred_check
    _
  $region11: #{_lambda_.4} parent=0 // pred_check_branch
    %22 = sbr.rel (0) target = $region13
  $region12: #{_lambda_.4} parent=0 // pred_region
    _
  $region13: #{_lambda_.4} parent=0 // pred_fallthru
    _
  // Predicated region
  $region14: #{_lambda_.4} parent=0 // pred_check
    _
  $region15: #{_lambda_.4} parent=0 // pred_check_branch
    %24 = sbr.rel (0) target = $region17
  $region16: #{_lambda_.4} parent=0 // pred_region
    _
  $region17: #{_lambda_.4} parent=0 // pred_fallthru
    _
  // Predicated region
  $region18: #{_lambda_.4} parent=0 // pred_check
    _
  $region19: #{_lambda_.4} parent=0 // pred_check_branch
    %26 = sbr.rel (0) target = $region21
  $region20: #{_lambda_.4} parent=0 // pred_region
    _
  $region21: #{_lambda_.4} parent=0 // pred_fallthru
    _
  // Predicated region
  $region22: #{_lambda_.4} parent=0 // pred_check
    _
  $region23: #{_lambda_.4} parent=0 // pred_check_branch
    %28 = sbr.rel (0) target = $region25
  $region24: #{_lambda_.4} parent=0 // pred_region
    _
  $region25: #{_lambda_.4} parent=0 // pred_fallthru
    _
  // Predicated region
  $region26: #{_lambda_.4} parent=0 // pred_check
    _
  $region27: #{_lambda_.4} parent=0 // pred_check_branch
    %30 = sbr.rel (0) target = $region29
  $region28: #{_lambda_.4} parent=0 // pred_region
    _
  $region29: #{_lambda_.4} parent=0 // pred_fallthru
    _
  // Predicated region
  $region30: #{_lambda_.4} parent=0 // pred_check
    _
  $region31: #{_lambda_.4} parent=0 // pred_check_branch
    %32 = sbr.rel (0) target = $region33
  $region32: #{_lambda_.4} parent=0 // pred_region
    _
  $region33: #{_lambda_.4} parent=0 // pred_fallthru
    _
  // Predicated region
  $region34: #{_lambda_.4} parent=0 // pred_check
    _
  $region35: #{_lambda_.4} parent=0 // pred_check_branch
    %34 = sbr.rel (0) target = $region37
  $region36: #{_lambda_.4} parent=0 // pred_region
    _
  $region37: #{_lambda_.4} parent=0 // pred_fallthru
    _
  // Predicated region
  $region38: #{_lambda_.4} parent=0 // pred_check
    _
  $region39: #{_lambda_.4} parent=0 // pred_check_branch
    %36 = sbr.rel (0) target = $region41
  $region40: #{_lambda_.4} parent=0 // pred_region
    _
  $region41: #{_lambda_.4} parent=0 // pred_fallthru
    _
  // Predicated region
  $region42: #{_lambda_.4} parent=0 // pred_check
    _
  $region43: #{_lambda_.4} parent=0 // pred_check_branch
    %38 = sbr.rel (0) target = $region45
  $region44: #{_lambda_.4} parent=0 // pred_region
    _
  $region45: #{_lambda_.4} parent=0 // pred_fallthru
    _
  // Predicated region
  $region46: #{_lambda_.4} parent=0 // pred_check
    _
  $region47: #{_lambda_.4} parent=0 // pred_check_branch
    %40 = sbr.rel (0) target = $region49
  $region48: #{_lambda_.4} parent=0 // pred_region
    _
  $region49: #{_lambda_.4} parent=0 // pred_fallthru
    _
  %v42 = vld [vmem:[%s0] sm:$0xf]
  %v43 = vld [vmem:[%s0 + $0x4] sm:$0xf]
  %v44 = vld [vmem:[%s0 + $0x8] sm:$0xf]
  %v45 = vld [vmem:[%s0 + $0xc] sm:$0xf]
  %v46 = vld [vmem:[%s1] sm:$0xf]
  %v47 = vld [vmem:[%s1 + $0x4] sm:$0xf]
  %v48 = vld [vmem:[%s1 + $0x8] sm:$0xf]
  %v49 = vld [vmem:[%s1 + $0xc] sm:$0xf]
  %v50 = vld [vmem:[%s1 + $0x10] sm:$0xf]
  %v51 = vld [vmem:[%s1 + $0x14] sm:$0xf]
  %v52 = vld [vmem:[%s1 + $0x18] sm:$0xf]
  %v53 = vld [vmem:[%s1 + $0x1c] sm:$0xf]
  %v54 = vld [vmem:[%s1 + $0x20] sm:$0xf]
  %v55 = vld [vmem:[%s1 + $0x24] sm:$0xf]
  %v56 = vld [vmem:[%s1 + $0x28] sm:$0xf]
  %v57 = vld [vmem:[%s1 + $0x2c] sm:$0xf]
  %v58 = vld [vmem:[%s1 + $0x30] sm:$0xf]
  %v59 = vld [vmem:[%s1 + $0x34] sm:$0xf]
  %v60 = vld [vmem:[%s1 + $0x38] sm:$0xf]
  %v61 = vld [vmem:[%s1 + $0x3c] sm:$0xf]
  %v62 = vld [vmem:[%s2] sm:$0x1]
  %v64 = vlaneseq
  %v65 = vshrl.u32 %v64, 7
  %v66 = vsub.s32 0, %v65
  %v67 = vrot.slane %v62, %v66
  %v73 = vunpack.c.l.b16 %v42
  %v74 = vunpack.c.l.b16 %v43
  %v75 = vunpack.c.l.b16 %v44
  %v76 = vunpack.c.l.b16 %v45
  %v77 = vpack.c.b16 %v74, %v73
  %v78 = vpack.c.b16 %v76, %v75
  %v97 = vunpack.c.l.b16 %v46
  %v98 = vunpack.c.l.b16 %v47
  %v99 = vunpack.c.l.b16 %v48
  %v100 = vunpack.c.l.b16 %v49
  %v101 = vunpack.c.l.b16 %v50
  %v102 = vunpack.c.l.b16 %v51
  %v103 = vunpack.c.l.b16 %v52
  %v104 = vunpack.c.l.b16 %v53
  %v105 = vunpack.c.l.b16 %v54
  %v106 = vunpack.c.l.b16 %v55
  %v107 = vunpack.c.l.b16 %v56
  %v108 = vunpack.c.l.b16 %v57
  %v109 = vunpack.c.l.b16 %v58
  %v110 = vunpack.c.l.b16 %v59
  %v111 = vunpack.c.l.b16 %v60
  %v112 = vunpack.c.l.b16 %v61
  %v113 = vpack.c.b16 %v98, %v97
  %v114 = vpack.c.b16 %v100, %v99
  %v115 = vpack.c.b16 %v102, %v101
  %v116 = vpack.c.b16 %v104, %v103
  %v117 = vpack.c.b16 %v106, %v105
  %v118 = vpack.c.b16 %v108, %v107
  %v119 = vpack.c.b16 %v110, %v109
  %v120 = vpack.c.b16 %v112, %v111
  %129 = vmatprep.subr.bf16.mxu0 0
  %130 = vmatpush1.bf16.msra.mxu0 %v113
  %131 = vmatprep.subr.bf16.mxu0 0
  %132 = vmatpush1.bf16.msra.mxu0 %v114
  %133 = vmatprep.subr.bf16.mxu0 0
  %134 = vmatpush1.bf16.msra.mxu0 %v115
  %135 = vmatprep.subr.bf16.mxu0 0
  %136 = vmatpush1.bf16.msra.mxu0 %v116
  %137 = vmatprep.subr.bf16.mxu0 0
  %138 = vmatpush1.bf16.msra.mxu0 %v117
  %139 = vmatprep.subr.bf16.mxu0 0
  %140 = vmatpush1.bf16.msra.mxu0 %v118
  %141 = vmatprep.subr.bf16.mxu0 0
  %142 = vmatpush1.bf16.msra.mxu0 %v119
  %143 = vmatprep.subr.bf16.mxu0 0
  %144 = vmatpush1.bf16.msra.mxu0 %v120
  %145 = vmatprep.subr.bf16.mxu0 0
  %146 = vmatpush1.bf16.msra.mxu0 0
  %147 = vmatprep.subr.bf16.mxu0 0
  %148 = vmatpush1.bf16.msra.mxu0 0
  %149 = vmatprep.subr.bf16.mxu0 0
  %150 = vmatpush1.bf16.msra.mxu0 0
  %151 = vmatprep.subr.bf16.mxu0 0
  %152 = vmatpush1.bf16.msra.mxu0 0
  %153 = vmatprep.subr.bf16.mxu0 0
  %154 = vmatpush1.bf16.msra.mxu0 0
  %155 = vmatprep.subr.bf16.mxu0 0
  %156 = vmatpush1.bf16.msra.mxu0 0
  %157 = vmatprep.subr.bf16.mxu0 0
  %158 = vmatpush1.bf16.msra.mxu0 0
  %159 = vmatprep.subr.bf16.mxu0 0
  %160 = vmatpush1.bf16.msra.mxu0 0
  %161 = vmatprep.mubr.bf16.mxu0 0
  %162 = vmatmul.mubr.bf16.gmra.mrb[0].mxu0 %v77
  %v163 = vpop.f32.mrb[0].mxu0
  %v164 = vadd.f32 %v67, %v163
  %v165 = vpop.f32.mrb[0].mxu0
  %v166 = vpop.f32.mrb[0].mxu0
  %v167 = vadd.f32 %v67, %v166
  %v168 = vpop.f32.mrb[0].mxu0
  %169 = vmatprep.mubr.bf16.mxu0 0
  %170 = vmatmul.mubr.bf16.gmra.mrb[0].mxu0 %v78
  %v171 = vpop.f32.mrb[0].mxu0
  %v172 = vadd.f32 %v67, %v171
  %v173 = vpop.f32.mrb[0].mxu0
  %v174 = vpop.f32.mrb[0].mxu0
  %v175 = vadd.f32 %v67, %v174
  %v176 = vpop.f32.mrb[0].mxu0
  %177 = vdwg.mxu0
  %v178 = vmul.f32 %v164, %v164
  %v179 = vmul.f32 %v167, %v167
  %v180 = vmul.f32 %v172, %v172
  %v181 = vmul.f32 %v175, %v175
  %v182 = vmul.f32 %v164, %v178
  %v183 = vmul.f32 %v167, %v179
  %v184 = vmul.f32 %v172, %v180
  %v185 = vmul.f32 %v175, %v181
  %v186 = vmul.f32 %v182, 0.044715
  %v187 = vmul.f32 %v183, 0.044715
  %v188 = vmul.f32 %v184, 0.044715
  %v189 = vmul.f32 %v185, 0.044715
  %v190 = vadd.f32 %v164, %v186
  %v191 = vadd.f32 %v167, %v187
  %v192 = vadd.f32 %v172, %v188
  %v193 = vadd.f32 %v175, %v189
  %v194 = vmul.f32 %v190, 0.7978846
  %v195 = vmul.f32 %v191, 0.7978846
  %v196 = vmul.f32 %v192, 0.7978846
  %v197 = vmul.f32 %v193, 0.7978846
  %v198 = vtanh.pop %v194
  %v199 = vtanh.pop %v195
  %v200 = vtanh.pop %v196
  %v201 = vtanh.pop %v197
  %v202 = vadd.f32 %v198, 1.0
  %v203 = vadd.f32 %v199, 1.0
  %v204 = vadd.f32 %v200, 1.0
  %v205 = vadd.f32 %v201, 1.0
  %v206 = vmul.f32 %v202, 0.5
  %v207 = vmul.f32 %v203, 0.5
  %v208 = vmul.f32 %v204, 0.5
  %v209 = vmul.f32 %v205, 0.5
  %v210 = vmul.f32 %v164, %v206
  %v211 = vmul.f32 %v167, %v207
  %v212 = vmul.f32 %v172, %v208
  %v213 = vmul.f32 %v175, %v209
  %v214 = vpack.c.bf16 %v211, %v210
  %v215 = vpack.c.bf16 %v213, %v212
  %v216 = vld [vmem:[%s3] sm:$0xf]
  %v217 = vld [vmem:[%s3 + $0x4] sm:$0xf]
  %v218 = vld [vmem:[%s3 + $0x8] sm:$0xf]
  %v219 = vld [vmem:[%s3 + $0xc] sm:$0xf]
  %v220 = vld [vmem:[%s3 + $0x10] sm:$0xf]
  %v221 = vld [vmem:[%s3 + $0x14] sm:$0xf]
  %v222 = vld [vmem:[%s3 + $0x18] sm:$0xf]
  %v223 = vld [vmem:[%s3 + $0x1c] sm:$0xf]
  %v224 = vld [vmem:[%s3 + $0x20] sm:$0xf]
  %v225 = vld [vmem:[%s3 + $0x24] sm:$0xf]
  %v226 = vld [vmem:[%s3 + $0x28] sm:$0xf]
  %v227 = vld [vmem:[%s3 + $0x2c] sm:$0xf]
  %v228 = vld [vmem:[%s3 + $0x30] sm:$0xf]
  %v229 = vld [vmem:[%s3 + $0x34] sm:$0xf]
  %v230 = vld [vmem:[%s3 + $0x38] sm:$0xf]
  %v231 = vld [vmem:[%s3 + $0x3c] sm:$0xf]
  %v232 = vld [vmem:[%s4] sm:$0x1]
  %v234 = vlaneseq
  %v235 = vshrl.u32 %v234, 7
  %v236 = vsub.s32 0, %v235
  %v237 = vrot.slane %v232, %v236
  %v255 = vunpack.c.l.b16 %v216
  %v256 = vunpack.c.l.b16 %v217
  %v257 = vunpack.c.l.b16 %v218
  %v258 = vunpack.c.l.b16 %v219
  %v259 = vunpack.c.l.b16 %v220
  %v260 = vunpack.c.l.b16 %v221
  %v261 = vunpack.c.l.b16 %v222
  %v262 = vunpack.c.l.b16 %v223
  %v263 = vunpack.c.l.b16 %v224
  %v264 = vunpack.c.l.b16 %v225
  %v265 = vunpack.c.l.b16 %v226
  %v266 = vunpack.c.l.b16 %v227
  %v267 = vunpack.c.l.b16 %v228
  %v268 = vunpack.c.l.b16 %v229
  %v269 = vunpack.c.l.b16 %v230
  %v270 = vunpack.c.l.b16 %v231
  %v271 = vpack.c.b16 %v256, %v255
  %v272 = vpack.c.b16 %v258, %v257
  %v273 = vpack.c.b16 %v260, %v259
  %v274 = vpack.c.b16 %v262, %v261
  %v275 = vpack.c.b16 %v264, %v263
  %v276 = vpack.c.b16 %v266, %v265
  %v277 = vpack.c.b16 %v268, %v267
  %v278 = vpack.c.b16 %v270, %v269
  %287 = vmatprep.subr.bf16.mxu0 0
  %288 = vmatpush1.bf16.msra.mxu0 %v271
  %289 = vmatprep.subr.bf16.mxu0 0
  %290 = vmatpush1.bf16.msra.mxu0 %v272
  %291 = vmatprep.subr.bf16.mxu0 0
  %292 = vmatpush1.bf16.msra.mxu0 %v273
  %293 = vmatprep.subr.bf16.mxu0 0
  %294 = vmatpush1.bf16.msra.mxu0 %v274
  %295 = vmatprep.subr.bf16.mxu0 0
  %296 = vmatpush1.bf16.msra.mxu0 %v275
  %297 = vmatprep.subr.bf16.mxu0 0
  %298 = vmatpush1.bf16.msra.mxu0 %v276
  %299 = vmatprep.subr.bf16.mxu0 0
  %300 = vmatpush1.bf16.msra.mxu0 %v277
  %301 = vmatprep.subr.bf16.mxu0 0
  %302 = vmatpush1.bf16.msra.mxu0 %v278
  %303 = vmatprep.subr.bf16.mxu0 0
  %304 = vmatpush1.bf16.msra.mxu0 0
  %305 = vmatprep.subr.bf16.mxu0 0
  %306 = vmatpush1.bf16.msra.mxu0 0
  %307 = vmatprep.subr.bf16.mxu0 0
  %308 = vmatpush1.bf16.msra.mxu0 0
  %309 = vmatprep.subr.bf16.mxu0 0
  %310 = vmatpush1.bf16.msra.mxu0 0
  %311 = vmatprep.subr.bf16.mxu0 0
  %312 = vmatpush1.bf16.msra.mxu0 0
  %313 = vmatprep.subr.bf16.mxu0 0
  %314 = vmatpush1.bf16.msra.mxu0 0
  %315 = vmatprep.subr.bf16.mxu0 0
  %316 = vmatpush1.bf16.msra.mxu0 0
  %317 = vmatprep.subr.bf16.mxu0 0
  %318 = vmatpush1.bf16.msra.mxu0 0
  %319 = vmatprep.mubr.bf16.mxu0 0
  %320 = vmatmul.mubr.bf16.gmra.mrb[0].mxu0 %v214
  %v321 = vpop.f32.mrb[0].mxu0
  %v322 = vadd.f32 %v237, %v321
  %v323 = vpop.f32.mrb[0].mxu0
  %v324 = vpop.f32.mrb[0].mxu0
  %v325 = vadd.f32 %v237, %v324
  %v326 = vpop.f32.mrb[0].mxu0
  %327 = vmatprep.mubr.bf16.mxu0 0
  %328 = vmatmul.mubr.bf16.gmra.mrb[0].mxu0 %v215
  %v329 = vpop.f32.mrb[0].mxu0
  %v330 = vadd.f32 %v237, %v329
  %v331 = vpop.f32.mrb[0].mxu0
  %v332 = vpop.f32.mrb[0].mxu0
  %v333 = vadd.f32 %v237, %v332
  %v334 = vpop.f32.mrb[0].mxu0
  %335 = vdwg.mxu0
  %v336 = vmul.f32 %v322, %v322
  %v337 = vmul.f32 %v325, %v325
  %v338 = vmul.f32 %v330, %v330
  %v339 = vmul.f32 %v333, %v333
  %v340 = vmul.f32 %v322, %v336
  %v341 = vmul.f32 %v325, %v337
  %v342 = vmul.f32 %v330, %v338
  %v343 = vmul.f32 %v333, %v339
  %v344 = vmul.f32 %v340, 0.044715
  %v345 = vmul.f32 %v341, 0.044715
  %v346 = vmul.f32 %v342, 0.044715
  %v347 = vmul.f32 %v343, 0.044715
  %v348 = vadd.f32 %v322, %v344
  %v349 = vadd.f32 %v325, %v345
  %v350 = vadd.f32 %v330, %v346
  %v351 = vadd.f32 %v333, %v347
  %v352 = vmul.f32 %v348, 0.7978846
  %v353 = vmul.f32 %v349, 0.7978846
  %v354 = vmul.f32 %v350, 0.7978846
  %v355 = vmul.f32 %v351, 0.7978846
  %v356 = vtanh.pop %v352
  %v357 = vtanh.pop %v353
  %v358 = vtanh.pop %v354
  %v359 = vtanh.pop %v355
  %v360 = vadd.f32 %v356, 1.0
  %v361 = vadd.f32 %v357, 1.0
  %v362 = vadd.f32 %v358, 1.0
  %v363 = vadd.f32 %v359, 1.0
  %v364 = vmul.f32 %v360, 0.5
  %v365 = vmul.f32 %v361, 0.5
  %v366 = vmul.f32 %v362, 0.5
  %v367 = vmul.f32 %v363, 0.5
  %v368 = vmul.f32 %v322, %v364
  %v369 = vmul.f32 %v325, %v365
  %v370 = vmul.f32 %v330, %v366
  %v371 = vmul.f32 %v333, %v367
  %v372 = vpack.c.bf16 %v369, %v368
  %v373 = vpack.c.bf16 %v371, %v370
  %v374 = vld [vmem:[%s5] sm:$0xf]
  %v375 = vld [vmem:[%s5 + $0x4] sm:$0xf]
  %v376 = vld [vmem:[%s5 + $0x8] sm:$0xf]
  %v377 = vld [vmem:[%s5 + $0xc] sm:$0xf]
  %v378 = vld [vmem:[%s5 + $0x10] sm:$0xf]
  %v379 = vld [vmem:[%s5 + $0x14] sm:$0xf]
  %v380 = vld [vmem:[%s5 + $0x18] sm:$0xf]
  %v381 = vld [vmem:[%s5 + $0x1c] sm:$0xf]
  %v382 = vld [vmem:[%s5 + $0x20] sm:$0xf]
  %v383 = vld [vmem:[%s5 + $0x24] sm:$0xf]
  %v384 = vld [vmem:[%s5 + $0x28] sm:$0xf]
  %v385 = vld [vmem:[%s5 + $0x2c] sm:$0xf]
  %v386 = vld [vmem:[%s5 + $0x30] sm:$0xf]
  %v387 = vld [vmem:[%s5 + $0x34] sm:$0xf]
  %v388 = vld [vmem:[%s5 + $0x38] sm:$0xf]
  %v389 = vld [vmem:[%s5 + $0x3c] sm:$0xf]
  %v390 = vld [vmem:[%s6] sm:$0x1]
  %v392 = vlaneseq
  %v393 = vshrl.u32 %v392, 7
  %v394 = vsub.s32 0, %v393
  %v395 = vrot.slane %v390, %v394
  %v413 = vunpack.c.l.b16 %v374
  %v414 = vunpack.c.l.b16 %v375
  %v415 = vunpack.c.l.b16 %v376
  %v416 = vunpack.c.l.b16 %v377
  %v417 = vunpack.c.l.b16 %v378
  %v418 = vunpack.c.l.b16 %v379
  %v419 = vunpack.c.l.b16 %v380
  %v420 = vunpack.c.l.b16 %v381
  %v421 = vunpack.c.l.b16 %v382
  %v422 = vunpack.c.l.b16 %v383
  %v423 = vunpack.c.l.b16 %v384
  %v424 = vunpack.c.l.b16 %v385
  %v425 = vunpack.c.l.b16 %v386
  %v426 = vunpack.c.l.b16 %v387
  %v427 = vunpack.c.l.b16 %v388
  %v428 = vunpack.c.l.b16 %v389
  %v429 = vpack.c.b16 %v414, %v413
  %v430 = vpack.c.b16 %v416, %v415
  %v431 = vpack.c.b16 %v418, %v417
  %v432 = vpack.c.b16 %v420, %v419
  %v433 = vpack.c.b16 %v422, %v421
  %v434 = vpack.c.b16 %v424, %v423
  %v435 = vpack.c.b16 %v426, %v425
  %v436 = vpack.c.b16 %v428, %v427
  %445 = vmatprep.subr.bf16.mxu0 0
  %446 = vmatpush1.bf16.msra.mxu0 %v429
  %447 = vmatprep.subr.bf16.mxu0 0
  %448 = vmatpush1.bf16.msra.mxu0 %v430
  %449 = vmatprep.subr.bf16.mxu0 0
  %450 = vmatpush1.bf16.msra.mxu0 %v431
  %451 = vmatprep.subr.bf16.mxu0 0
  %452 = vmatpush1.bf16.msra.mxu0 %v432
  %453 = vmatprep.subr.bf16.mxu0 0
  %454 = vmatpush1.bf16.msra.mxu0 %v433
  %455 = vmatprep.subr.bf16.mxu0 0
  %456 = vmatpush1.bf16.msra.mxu0 %v434
  %457 = vmatprep.subr.bf16.mxu0 0
  %458 = vmatpush1.bf16.msra.mxu0 %v435
  %459 = vmatprep.subr.bf16.mxu0 0
  %460 = vmatpush1.bf16.msra.mxu0 %v436
  %461 = vmatprep.subr.bf16.mxu0 0
  %462 = vmatpush1.bf16.msra.mxu0 0
  %463 = vmatprep.subr.bf16.mxu0 0
  %464 = vmatpush1.bf16.msra.mxu0 0
  %465 = vmatprep.subr.bf16.mxu0 0
  %466 = vmatpush1.bf16.msra.mxu0 0
  %467 = vmatprep.subr.bf16.mxu0 0
  %468 = vmatpush1.bf16.msra.mxu0 0
  %469 = vmatprep.subr.bf16.mxu0 0
  %470 = vmatpush1.bf16.msra.mxu0 0
  %471 = vmatprep.subr.bf16.mxu0 0
  %472 = vmatpush1.bf16.msra.mxu0 0
  %473 = vmatprep.subr.bf16.mxu0 0
  %474 = vmatpush1.bf16.msra.mxu0 0
  %475 = vmatprep.subr.bf16.mxu0 0
  %476 = vmatpush1.bf16.msra.mxu0 0
  %477 = vmatprep.mubr.bf16.mxu0 0
  %478 = vmatmul.mubr.bf16.gmra.mrb[0].mxu0 %v372
  %v479 = vpop.f32.mrb[0].mxu0
  %v480 = vadd.f32 %v395, %v479
  %v481 = vpop.f32.mrb[0].mxu0
  %v482 = vpop.f32.mrb[0].mxu0
  %v483 = vadd.f32 %v395, %v482
  %v484 = vpop.f32.mrb[0].mxu0
  %485 = vmatprep.mubr.bf16.mxu0 0
  %486 = vmatmul.mubr.bf16.gmra.mrb[0].mxu0 %v373
  %v487 = vpop.f32.mrb[0].mxu0
  %v488 = vadd.f32 %v395, %v487
  %v489 = vpop.f32.mrb[0].mxu0
  %v490 = vpop.f32.mrb[0].mxu0
  %v491 = vadd.f32 %v395, %v490
  %v492 = vpop.f32.mrb[0].mxu0
  %493 = vdwg.mxu0
  %v494 = vmul.f32 %v480, %v480
  %v495 = vmul.f32 %v483, %v483
  %v496 = vmul.f32 %v488, %v488
  %v497 = vmul.f32 %v491, %v491
  %v498 = vmul.f32 %v480, %v494
  %v499 = vmul.f32 %v483, %v495
  %v500 = vmul.f32 %v488, %v496
  %v501 = vmul.f32 %v491, %v497
  %v502 = vmul.f32 %v498, 0.044715
  %v503 = vmul.f32 %v499, 0.044715
  %v504 = vmul.f32 %v500, 0.044715
  %v505 = vmul.f32 %v501, 0.044715
  %v506 = vadd.f32 %v480, %v502
  %v507 = vadd.f32 %v483, %v503
  %v508 = vadd.f32 %v488, %v504
  %v509 = vadd.f32 %v491, %v505
  %v510 = vmul.f32 %v506, 0.7978846
  %v511 = vmul.f32 %v507, 0.7978846
  %v512 = vmul.f32 %v508, 0.7978846
  %v513 = vmul.f32 %v509, 0.7978846
  %v514 = vtanh.pop %v510
  %v515 = vtanh.pop %v511
  %v516 = vtanh.pop %v512
  %v517 = vtanh.pop %v513
  %v518 = vadd.f32 %v514, 1.0
  %v519 = vadd.f32 %v515, 1.0
  %v520 = vadd.f32 %v516, 1.0
  %v521 = vadd.f32 %v517, 1.0
  %v522 = vmul.f32 %v518, 0.5
  %v523 = vmul.f32 %v519, 0.5
  %v524 = vmul.f32 %v520, 0.5
  %v525 = vmul.f32 %v521, 0.5
  %v526 = vmul.f32 %v480, %v522
  %v527 = vmul.f32 %v483, %v523
  %v528 = vmul.f32 %v488, %v524
  %v529 = vmul.f32 %v491, %v525
  %v530 = vpack.c.bf16 %v527, %v526
  %v531 = vpack.c.bf16 %v529, %v528
  %v532 = vld [vmem:[%s7] sm:$0xf]
  %v533 = vld [vmem:[%s7 + $0x4] sm:$0xf]
  %v534 = vld [vmem:[%s7 + $0x8] sm:$0xf]
  %v535 = vld [vmem:[%s7 + $0xc] sm:$0xf]
  %v536 = vld [vmem:[%s7 + $0x10] sm:$0xf]
  %v537 = vld [vmem:[%s7 + $0x14] sm:$0xf]
  %v538 = vld [vmem:[%s7 + $0x18] sm:$0xf]
  %v539 = vld [vmem:[%s7 + $0x1c] sm:$0xf]
  %v540 = vld [vmem:[%s7 + $0x20] sm:$0xf]
  %v541 = vld [vmem:[%s7 + $0x24] sm:$0xf]
  %v542 = vld [vmem:[%s7 + $0x28] sm:$0xf]
  %v543 = vld [vmem:[%s7 + $0x2c] sm:$0xf]
  %v544 = vld [vmem:[%s7 + $0x30] sm:$0xf]
  %v545 = vld [vmem:[%s7 + $0x34] sm:$0xf]
  %v546 = vld [vmem:[%s7 + $0x38] sm:$0xf]
  %v547 = vld [vmem:[%s7 + $0x3c] sm:$0xf]
  %v548 = vld [vmem:[%s8] sm:$0xf]
  %v549 = vld [vmem:[%s8 + $0x4] sm:$0xf]
  %v550 = vld [vmem:[%s8 + $0x8] sm:$0xf]
  %v551 = vld [vmem:[%s8 + $0xc] sm:$0xf]
  %v552 = vld [vmem:[%s8 + $0x10] sm:$0xf]
  %v553 = vld [vmem:[%s8 + $0x14] sm:$0xf]
  %v554 = vld [vmem:[%s8 + $0x18] sm:$0xf]
  %v555 = vld [vmem:[%s8 + $0x1c] sm:$0xf]
  %v556 = vld [vmem:[%s8 + $0x20] sm:$0xf]
  %v557 = vld [vmem:[%s8 + $0x24] sm:$0xf]
  %v558 = vld [vmem:[%s8 + $0x28] sm:$0xf]
  %v559 = vld [vmem:[%s8 + $0x2c] sm:$0xf]
  %v560 = vld [vmem:[%s8 + $0x30] sm:$0xf]
  %v561 = vld [vmem:[%s8 + $0x34] sm:$0xf]
  %v562 = vld [vmem:[%s8 + $0x38] sm:$0xf]
  %v563 = vld [vmem:[%s8 + $0x3c] sm:$0xf]
  %v580 = vunpack.c.l.b16 %v548
  %v581 = vunpack.c.l.b16 %v549
  %v582 = vunpack.c.l.b16 %v550
  %v583 = vunpack.c.l.b16 %v551
  %v584 = vunpack.c.l.b16 %v552
  %v585 = vunpack.c.l.b16 %v553
  %v586 = vunpack.c.l.b16 %v554
  %v587 = vunpack.c.l.b16 %v555
  %v588 = vunpack.c.l.b16 %v556
  %v589 = vunpack.c.l.b16 %v557
  %v590 = vunpack.c.l.b16 %v558
  %v591 = vunpack.c.l.b16 %v559
  %v592 = vunpack.c.l.b16 %v560
  %v593 = vunpack.c.l.b16 %v561
  %v594 = vunpack.c.l.b16 %v562
  %v595 = vunpack.c.l.b16 %v563
  %v596 = vpack.c.b16 %v581, %v580
  %v597 = vpack.c.b16 %v583, %v582
  %v598 = vpack.c.b16 %v585, %v584
  %v599 = vpack.c.b16 %v587, %v586
  %v600 = vpack.c.b16 %v589, %v588
  %v601 = vpack.c.b16 %v591, %v590
  %v602 = vpack.c.b16 %v593, %v592
  %v603 = vpack.c.b16 %v595, %v594
  %612 = vmatprep.subr.bf16.mxu0 0
  %613 = vmatpush1.bf16.msra.mxu0 %v596
  %614 = vmatprep.subr.bf16.mxu0 0
  %615 = vmatpush1.bf16.msra.mxu0 %v597
  %616 = vmatprep.subr.bf16.mxu0 0
  %617 = vmatpush1.bf16.msra.mxu0 %v598
  %618 = vmatprep.subr.bf16.mxu0 0
  %619 = vmatpush1.bf16.msra.mxu0 %v599
  %620 = vmatprep.subr.bf16.mxu0 0
  %621 = vmatpush1.bf16.msra.mxu0 %v600
  %622 = vmatprep.subr.bf16.mxu0 0
  %623 = vmatpush1.bf16.msra.mxu0 %v601
  %624 = vmatprep.subr.bf16.mxu0 0
  %625 = vmatpush1.bf16.msra.mxu0 %v602
  %626 = vmatprep.subr.bf16.mxu0 0
  %627 = vmatpush1.bf16.msra.mxu0 %v603
  %628 = vmatprep.subr.bf16.mxu0 0
  %629 = vmatpush1.bf16.msra.mxu0 0
  %630 = vmatprep.subr.bf16.mxu0 0
  %631 = vmatpush1.bf16.msra.mxu0 0
  %632 = vmatprep.subr.bf16.mxu0 0
  %633 = vmatpush1.bf16.msra.mxu0 0
  %634 = vmatprep.subr.bf16.mxu0 0
  %635 = vmatpush1.bf16.msra.mxu0 0
  %636 = vmatprep.subr.bf16.mxu0 0
  %637 = vmatpush1.bf16.msra.mxu0 0
  %638 = vmatprep.subr.bf16.mxu0 0
  %639 = vmatpush1.bf16.msra.mxu0 0
  %640 = vmatprep.subr.bf16.mxu0 0
  %641 = vmatpush1.bf16.msra.mxu0 0
  %642 = vmatprep.subr.bf16.mxu0 0
  %643 = vmatpush1.bf16.msra.mxu0 0
  %644 = vmatprep.mubr.bf16.mxu0 0
  %645 = vmatmul.mubr.bf16.gmra.mrb[0].mxu0 %v77
  %v646 = vpop.f32.mrb[0].mxu0
  %v647 = vadd.f32 0.0, %v646
  %v648 = vpop.f32.mrb[0].mxu0
  %v649 = vpop.f32.mrb[0].mxu0
  %v650 = vadd.f32 0.0, %v649
  %v651 = vpop.f32.mrb[0].mxu0
  %652 = vmatprep.mubr.bf16.mxu0 0
  %653 = vmatmul.mubr.bf16.gmra.mrb[0].mxu0 %v78
  %v654 = vpop.f32.mrb[0].mxu0
  %v655 = vadd.f32 0.0, %v654
  %v656 = vpop.f32.mrb[0].mxu0
  %v657 = vpop.f32.mrb[0].mxu0
  %v658 = vadd.f32 0.0, %v657
  %v659 = vpop.f32.mrb[0].mxu0
  %660 = vdwg.mxu0
  %v677 = vunpack.c.l.b16 %v532
  %v678 = vunpack.c.l.b16 %v533
  %v679 = vunpack.c.l.b16 %v534
  %v680 = vunpack.c.l.b16 %v535
  %v681 = vunpack.c.l.b16 %v536
  %v682 = vunpack.c.l.b16 %v537
  %v683 = vunpack.c.l.b16 %v538
  %v684 = vunpack.c.l.b16 %v539
  %v685 = vunpack.c.l.b16 %v540
  %v686 = vunpack.c.l.b16 %v541
  %v687 = vunpack.c.l.b16 %v542
  %v688 = vunpack.c.l.b16 %v543
  %v689 = vunpack.c.l.b16 %v544
  %v690 = vunpack.c.l.b16 %v545
  %v691 = vunpack.c.l.b16 %v546
  %v692 = vunpack.c.l.b16 %v547
  %v693 = vpack.c.b16 %v678, %v677
  %v694 = vpack.c.b16 %v680, %v679
  %v695 = vpack.c.b16 %v682, %v681
  %v696 = vpack.c.b16 %v684, %v683
  %v697 = vpack.c.b16 %v686, %v685
  %v698 = vpack.c.b16 %v688, %v687
  %v699 = vpack.c.b16 %v690, %v689
  %v700 = vpack.c.b16 %v692, %v691
  %709 = vmatprep.subr.bf16.mxu0 0
  %710 = vmatpush1.bf16.msra.mxu0 %v693
  %711 = vmatprep.subr.bf16.mxu0 0
  %712 = vmatpush1.bf16.msra.mxu0 %v694
  %713 = vmatprep.subr.bf16.mxu0 0
  %714 = vmatpush1.bf16.msra.mxu0 %v695
  %715 = vmatprep.subr.bf16.mxu0 0
  %716 = vmatpush1.bf16.msra.mxu0 %v696
  %717 = vmatprep.subr.bf16.mxu0 0
  %718 = vmatpush1.bf16.msra.mxu0 %v697
  %719 = vmatprep.subr.bf16.mxu0 0
  %720 = vmatpush1.bf16.msra.mxu0 %v698
  %721 = vmatprep.subr.bf16.mxu0 0
  %722 = vmatpush1.bf16.msra.mxu0 %v699
  %723 = vmatprep.subr.bf16.mxu0 0
  %724 = vmatpush1.bf16.msra.mxu0 %v700
  %725 = vmatprep.subr.bf16.mxu0 0
  %726 = vmatpush1.bf16.msra.mxu0 0
  %727 = vmatprep.subr.bf16.mxu0 0
  %728 = vmatpush1.bf16.msra.mxu0 0
  %729 = vmatprep.subr.bf16.mxu0 0
  %730 = vmatpush1.bf16.msra.mxu0 0
  %731 = vmatprep.subr.bf16.mxu0 0
  %732 = vmatpush1.bf16.msra.mxu0 0
  %733 = vmatprep.subr.bf16.mxu0 0
  %734 = vmatpush1.bf16.msra.mxu0 0
  %735 = vmatprep.subr.bf16.mxu0 0
  %736 = vmatpush1.bf16.msra.mxu0 0
  %737 = vmatprep.subr.bf16.mxu0 0
  %738 = vmatpush1.bf16.msra.mxu0 0
  %739 = vmatprep.subr.bf16.mxu0 0
  %740 = vmatpush1.bf16.msra.mxu0 0
  %741 = vmatprep.mubr.bf16.mxu0 0
  %742 = vmatmul.mubr.bf16.gmra.mrb[0].mxu0 %v530
  %v743 = vpop.f32.mrb[0].mxu0
  %v744 = vadd.f32 %v647, %v743
  %v745 = vpop.f32.mrb[0].mxu0
  %v746 = vpop.f32.mrb[0].mxu0
  %v747 = vadd.f32 %v650, %v746
  %v748 = vpop.f32.mrb[0].mxu0
  %749 = vmatprep.mubr.bf16.mxu0 0
  %750 = vmatmul.mubr.bf16.gmra.mrb[0].mxu0 %v531
  %v751 = vpop.f32.mrb[0].mxu0
  %v752 = vadd.f32 %v655, %v751
  %v753 = vpop.f32.mrb[0].mxu0
  %v754 = vpop.f32.mrb[0].mxu0
  %v755 = vadd.f32 %v658, %v754
  %v756 = vpop.f32.mrb[0].mxu0
  %757 = vdwg.mxu0
  %v758 = vld [vmem:[%s9] sm:$0x1]
  %v760 = vlaneseq
  %v761 = vshrl.u32 %v760, 7
  %v762 = vsub.s32 0, %v761
  %v763 = vrot.slane %v758, %v762
  %v765 = vadd.f32 %v744, %v763
  %v766 = vadd.f32 %v747, %v763
  %v767 = vadd.f32 %v752, %v763
  %v768 = vadd.f32 %v755, %v763
  %v769 = vmul.f32 %v765, %v765
  %v770 = vmul.f32 %v766, %v766
  %v771 = vmul.f32 %v767, %v767
  %v772 = vmul.f32 %v768, %v768
  %v773 = vmul.f32 %v765, %v769
  %v774 = vmul.f32 %v766, %v770
  %v775 = vmul.f32 %v767, %v771
  %v776 = vmul.f32 %v768, %v772
  %v777 = vmul.f32 %v773, 0.044715
  %v778 = vmul.f32 %v774, 0.044715
  %v779 = vmul.f32 %v775, 0.044715
  %v780 = vmul.f32 %v776, 0.044715
  %v781 = vadd.f32 %v765, %v777
  %v782 = vadd.f32 %v766, %v778
  %v783 = vadd.f32 %v767, %v779
  %v784 = vadd.f32 %v768, %v780
  %v785 = vmul.f32 %v781, 0.7978846
  %v786 = vmul.f32 %v782, 0.7978846
  %v787 = vmul.f32 %v783, 0.7978846
  %v788 = vmul.f32 %v784, 0.7978846
  %v789 = vtanh.pop %v785
  %v790 = vtanh.pop %v786
  %v791 = vtanh.pop %v787
  %v792 = vtanh.pop %v788
  %v793 = vadd.f32 %v789, 1.0
  %v794 = vadd.f32 %v790, 1.0
  %v795 = vadd.f32 %v791, 1.0
  %v796 = vadd.f32 %v792, 1.0
  %v797 = vmul.f32 %v793, 0.5
  %v798 = vmul.f32 %v794, 0.5
  %v799 = vmul.f32 %v795, 0.5
  %v800 = vmul.f32 %v796, 0.5
  %v801 = vmul.f32 %v765, %v797
  %v802 = vmul.f32 %v766, %v798
  %v803 = vmul.f32 %v767, %v799
  %v804 = vmul.f32 %v768, %v800
  %v805 = vpack.c.bf16 %v802, %v801
  %v806 = vpack.c.bf16 %v804, %v803
  %v807 = vld [vmem:[%s10] sm:$0xf]
  %v808 = vld [vmem:[%s10 + $0x4] sm:$0xf]
  %v809 = vld [vmem:[%s10 + $0x8] sm:$0xf]
  %v810 = vld [vmem:[%s10 + $0xc] sm:$0xf]
  %v811 = vld [vmem:[%s10 + $0x10] sm:$0xf]
  %v812 = vld [vmem:[%s10 + $0x14] sm:$0xf]
  %v813 = vld [vmem:[%s10 + $0x18] sm:$0xf]
  %v814 = vld [vmem:[%s10 + $0x1c] sm:$0xf]
  %v815 = vld [vmem:[%s10 + $0x20] sm:$0xf]
  %v816 = vld [vmem:[%s10 + $0x24] sm:$0xf]
  %v817 = vld [vmem:[%s10 + $0x28] sm:$0xf]
  %v818 = vld [vmem:[%s10 + $0x2c] sm:$0xf]
  %v819 = vld [vmem:[%s10 + $0x30] sm:$0xf]
  %v820 = vld [vmem:[%s10 + $0x34] sm:$0xf]
  %v821 = vld [vmem:[%s10 + $0x38] sm:$0xf]
  %v822 = vld [vmem:[%s10 + $0x3c] sm:$0xf]
  %v823 = vld [vmem:[%s11] sm:$0x1]
  %v825 = vlaneseq
  %v826 = vshrl.u32 %v825, 7
  %v827 = vsub.s32 0, %v826
  %v828 = vrot.slane %v823, %v827
  %v846 = vunpack.c.l.b16 %v807
  %v847 = vunpack.c.l.b16 %v808
  %v848 = vunpack.c.l.b16 %v809
  %v849 = vunpack.c.l.b16 %v810
  %v850 = vunpack.c.l.b16 %v811
  %v851 = vunpack.c.l.b16 %v812
  %v852 = vunpack.c.l.b16 %v813
  %v853 = vunpack.c.l.b16 %v814
  %v854 = vunpack.c.l.b16 %v815
  %v855 = vunpack.c.l.b16 %v816
  %v856 = vunpack.c.l.b16 %v817
  %v857 = vunpack.c.l.b16 %v818
  %v858 = vunpack.c.l.b16 %v819
  %v859 = vunpack.c.l.b16 %v820
  %v860 = vunpack.c.l.b16 %v821
  %v861 = vunpack.c.l.b16 %v822
  %v862 = vpack.c.b16 %v847, %v846
  %v863 = vpack.c.b16 %v849, %v848
  %v864 = vpack.c.b16 %v851, %v850
  %v865 = vpack.c.b16 %v853, %v852
  %v866 = vpack.c.b16 %v855, %v854
  %v867 = vpack.c.b16 %v857, %v856
  %v868 = vpack.c.b16 %v859, %v858
  %v869 = vpack.c.b16 %v861, %v860
  %878 = vmatprep.subr.bf16.mxu0 0
  %879 = vmatpush1.bf16.msra.mxu0 %v862
  %880 = vmatprep.subr.bf16.mxu0 0
  %881 = vmatpush1.bf16.msra.mxu0 %v863
  %882 = vmatprep.subr.bf16.mxu0 0
  %883 = vmatpush1.bf16.msra.mxu0 %v864
  %884 = vmatprep.subr.bf16.mxu0 0
  %885 = vmatpush1.bf16.msra.mxu0 %v865
  %886 = vmatprep.subr.bf16.mxu0 0
  %887 = vmatpush1.bf16.msra.mxu0 %v866
  %888 = vmatprep.subr.bf16.mxu0 0
  %889 = vmatpush1.bf16.msra.mxu0 %v867
  %890 = vmatprep.subr.bf16.mxu0 0
  %891 = vmatpush1.bf16.msra.mxu0 %v868
  %892 = vmatprep.subr.bf16.mxu0 0
  %893 = vmatpush1.bf16.msra.mxu0 %v869
  %894 = vmatprep.subr.bf16.mxu0 0
  %895 = vmatpush1.bf16.msra.mxu0 0
  %896 = vmatprep.subr.bf16.mxu0 0
  %897 = vmatpush1.bf16.msra.mxu0 0
  %898 = vmatprep.subr.bf16.mxu0 0
  %899 = vmatpush1.bf16.msra.mxu0 0
  %900 = vmatprep.subr.bf16.mxu0 0
  %901 = vmatpush1.bf16.msra.mxu0 0
  %902 = vmatprep.subr.bf16.mxu0 0
  %903 = vmatpush1.bf16.msra.mxu0 0
  %904 = vmatprep.subr.bf16.mxu0 0
  %905 = vmatpush1.bf16.msra.mxu0 0
  %906 = vmatprep.subr.bf16.mxu0 0
  %907 = vmatpush1.bf16.msra.mxu0 0
  %908 = vmatprep.subr.bf16.mxu0 0
  %909 = vmatpush1.bf16.msra.mxu0 0
  %910 = vmatprep.mubr.bf16.mxu0 0
  %911 = vmatmul.mubr.bf16.gmra.mrb[0].mxu0 %v805
  %v912 = vpop.f32.mrb[0].mxu0
  %v913 = vadd.f32 %v828, %v912
  %v914 = vpop.f32.mrb[0].mxu0
  %v915 = vpop.f32.mrb[0].mxu0
  %v916 = vadd.f32 %v828, %v915
  %v917 = vpop.f32.mrb[0].mxu0
  %918 = vmatprep.mubr.bf16.mxu0 0
  %919 = vmatmul.mubr.bf16.gmra.mrb[0].mxu0 %v806
  %v920 = vpop.f32.mrb[0].mxu0
  %v921 = vadd.f32 %v828, %v920
  %v922 = vpop.f32.mrb[0].mxu0
  %v923 = vpop.f32.mrb[0].mxu0
  %v924 = vadd.f32 %v828, %v923
  %v925 = vpop.f32.mrb[0].mxu0
  %926 = vdwg.mxu0
  %v927 = vmul.f32 %v913, %v913
  %v928 = vmul.f32 %v916, %v916
  %v929 = vmul.f32 %v921, %v921
  %v930 = vmul.f32 %v924, %v924
  %v931 = vmul.f32 %v913, %v927
  %v932 = vmul.f32 %v916, %v928
  %v933 = vmul.f32 %v921, %v929
  %v934 = vmul.f32 %v924, %v930
  %v935 = vmul.f32 %v931, 0.044715
  %v936 = vmul.f32 %v932, 0.044715
  %v937 = vmul.f32 %v933, 0.044715
  %v938 = vmul.f32 %v934, 0.044715
  %v939 = vadd.f32 %v913, %v935
  %v940 = vadd.f32 %v916, %v936
  %v941 = vadd.f32 %v921, %v937
  %v942 = vadd.f32 %v924, %v938
  %v943 = vmul.f32 %v939, 0.7978846
  %v944 = vmul.f32 %v940, 0.7978846
  %v945 = vmul.f32 %v941, 0.7978846
  %v946 = vmul.f32 %v942, 0.7978846
  %v947 = vtanh.pop %v943
  %v948 = vtanh.pop %v944
  %v949 = vtanh.pop %v945
  %v950 = vtanh.pop %v946
  %v951 = vadd.f32 %v947, 1.0
  %v952 = vadd.f32 %v948, 1.0
  %v953 = vadd.f32 %v949, 1.0
  %v954 = vadd.f32 %v950, 1.0
  %v955 = vmul.f32 %v951, 0.5
  %v956 = vmul.f32 %v952, 0.5
  %v957 = vmul.f32 %v953, 0.5
  %v958 = vmul.f32 %v954, 0.5
  %v959 = vmul.f32 %v913, %v955
  %v960 = vmul.f32 %v916, %v956
  %v961 = vmul.f32 %v921, %v957
  %v962 = vmul.f32 %v924, %v958
  %v963 = vpack.c.bf16 %v960, %v959
  %v964 = vpack.c.bf16 %v962, %v961
  %v967 = vunpack.c.l.b16 %v963
  %v968 = vunpack.c.h.b16 %v963
  %v969 = vunpack.c.l.b16 %v964
  %v970 = vunpack.c.h.b16 %v964
  %v971 = vpack.c.b16 %v967, %v967
  %v972 = vpack.c.b16 %v968, %v968
  %v973 = vpack.c.b16 %v969, %v969
  %v974 = vpack.c.b16 %v970, %v970
  %979 = vst [vmem:[%s12] sm:$0xf] %v971
  %980 = vst [vmem:[%s12 + $0x4] sm:$0xf] %v972
  %981 = vst [vmem:[%s12 + $0x8] sm:$0xf] %v973
  %982 = vst [vmem:[%s12 + $0xc] sm:$0xf] %v974
  // Predicated region
  $region50: #{_lambda_.4} parent=0 // pred_check
    _
  $region51: #{_lambda_.4} parent=0 // pred_check_branch
    %984 = sbr.rel (0) target = $region53
  $region52: #{_lambda_.4} parent=0 // pred_region
    _
  $region53: #{_lambda_.4} parent=0 // pred_fallthru
    _
  // Predicated region
  $region54: #{_lambda_.4} parent=0 // pred_check
    _
  $region55: #{_lambda_.4} parent=0 // pred_check_branch
    %986 = sbr.rel (0) target = $region57
  $region56: #{_lambda_.4} parent=0 // pred_region
    _
  $region57: #{_lambda_.4} parent=0 // pred_fallthru
    _

</llo_original>
